<compile_context>
chip_gen: v6e
topology: v6e:2x2x1
jax: 0.10.0
libtpu: 0.0.40
codegen_flags: <defaults>
</compile_context>

<pallas_src>
import jax
import jax.numpy as jnp
from jax.experimental import pallas as pl
from jax.experimental.pallas import tpu as pltpu

K_PAD = 896      # 784 padded to 7 * 128 (lane multiple)
OUT_PAD = 128    # 10 logits padded to one full lane tile
HIDDEN = 512


def _round_up(x, m):
    return (x + m - 1) // m * m


def _mlp_kernel(x_ref,
                w1_ref, b1_ref,
                w2_ref, b2_ref,
                w3_ref, b3_ref,
                w4_ref, b4_ref,
                w5_ref, b5_ref,
                o_ref):
    def layer(h_bf16, w_ref, b_ref, relu=True):
        # bf16 operands into the MXU, f32 accumulation + f32 epilogue.
        acc = jnp.dot(h_bf16, w_ref[...], preferred_element_type=jnp.float32)
        acc = acc + b_ref[...]
        if relu:
            acc = jnp.maximum(acc, 0.0)
        return acc

    h = layer(x_ref[...], w1_ref, b1_ref)                 # dense1 + relu1
    h = layer(h.astype(jnp.bfloat16), w2_ref, b2_ref)     # dense2 + relu2
    h = layer(h.astype(jnp.bfloat16), w3_ref, b3_ref)     # dense3 + relu3 (1st)
    h = layer(h.astype(jnp.bfloat16), w3_ref, b3_ref)     # dense3 + relu3 (2nd, per PyTorch forward)
    h = layer(h.astype(jnp.bfloat16), w4_ref, b4_ref)     # dense4 + relu4
    # dense5 (logits, no activation), lane-dense padded store.
    o_ref[...] = layer(h.astype(jnp.bfloat16), w5_ref, b5_ref,
                       relu=False).astype(o_ref.dtype)


def mnist_dnn_forward(x, params, *, max_tile_b=256):
    """x: (B, 784) float32; params: dict of w_i (in, out) f32 and b_i (1, out) f32."""
    B = x.shape[0]
    TB = min(max_tile_b, _round_up(max(B, 8), 8))   # sublane-aligned batch tile
    B_pad = _round_up(B, TB)

    # Pad + downcast activations. Zero-padded rows/cols contribute nothing and
    # the padded output rows are sliced off below.
    xp = jnp.zeros((B_pad, K_PAD), jnp.bfloat16)
    xp = xp.at[:B, :784].set(x.astype(jnp.bfloat16))

    # Weights to bf16 (MXU-native); biases stay f32 for the accumulator epilogue.
    w1 = jnp.zeros((K_PAD, HIDDEN), jnp.bfloat16).at[:784, :].set(
        params["w1"].astype(jnp.bfloat16))
    w2 = params["w2"].astype(jnp.bfloat16)
    w3 = params["w3"].astype(jnp.bfloat16)
    w4 = params["w4"].astype(jnp.bfloat16)
    w5 = jnp.zeros((HIDDEN, OUT_PAD), jnp.bfloat16).at[:, :10].set(
        params["w5"].astype(jnp.bfloat16))
    b1, b2, b3, b4 = (params[f"b{i}"] for i in range(1, 5))
    b5 = jnp.zeros((1, OUT_PAD), jnp.float32).at[:, :10].set(params["b5"])

    grid = (B_pad // TB,)

    def _pinned(shape):
        # Constant index_map: the block is resident in VMEM across all batch tiles.
        return pl.BlockSpec(shape, lambda i: (0, 0))

    in_specs = [
        pl.BlockSpec((TB, K_PAD), lambda i: (i, 0)),        # x: tiled over batch
        _pinned((K_PAD, HIDDEN)), _pinned((1, HIDDEN)),     # w1, b1
        _pinned((HIDDEN, HIDDEN)), _pinned((1, HIDDEN)),    # w2, b2
        _pinned((HIDDEN, HIDDEN)), _pinned((1, HIDDEN)),    # w3, b3
        _pinned((HIDDEN, HIDDEN)), _pinned((1, HIDDEN)),    # w4, b4
        _pinned((HIDDEN, OUT_PAD)), _pinned((1, OUT_PAD)),  # w5, b5
    ]
    out_specs = pl.BlockSpec((TB, OUT_PAD), lambda i: (i, 0))

    weight_bytes = (w1.size + w2.size + w3.size + w4.size + w5.size) * 2
    bias_bytes = (b1.size + b2.size + b3.size + b4.size + b5.size) * 4
    flops = 2 * B_pad * (K_PAD * HIDDEN + 4 * HIDDEN * HIDDEN + HIDDEN * OUT_PAD)
    bytes_accessed = weight_bytes + bias_bytes + xp.size * 2 + B_pad * OUT_PAD * 4

    out_padded = pl.pallas_call(
        _mlp_kernel,
        out_shape=jax.ShapeDtypeStruct((B_pad, OUT_PAD), jnp.float32),
        grid_spec=pltpu.PrefetchScalarGridSpec(
            num_scalar_prefetch=0,
            grid=grid,
            in_specs=in_specs,
            out_specs=out_specs,
        ),
        compiler_params=pltpu.CompilerParams(
            dimension_semantics=("parallel",),
            vmem_limit_bytes=32 * 1024 * 1024,
        ),
        cost_estimate=pl.CostEstimate(
            flops=flops, transcendentals=0, bytes_accessed=bytes_accessed),
    )(xp, w1, b1, w2, b2, w3, b3, w4, b4, w5, b5)

    return out_padded[:B, :10]


def init_params(key):
    """Deterministic init. PyTorch Linear weight is (out, in); we store (in, out).
    Biases are zero (matching m.bias.data.fill_(0) in __init__)."""
    dims = [(784, 512), (512, 512), (512, 512), (512, 512), (512, 10)]
    params = {}
    keys = jax.random.split(key, len(dims))
    for i, ((fan_in, fan_out), k) in enumerate(zip(dims, keys), start=1):
        bound = 1.0 / jnp.sqrt(fan_in)
        params[f"w{i}"] = jax.random.uniform(
            k, (fan_in, fan_out), dtype=jnp.float32, minval=-bound, maxval=bound)
        params[f"b{i}"] = jnp.zeros((1, fan_out), dtype=jnp.float32)
    return params


def reference_forward_bf16(x, p):
    """Pure-JAX reference with the same bf16-in / f32-acc scheme as the kernel."""
    def dense(h, w, b):
        return jnp.dot(h.astype(jnp.bfloat16), w.astype(jnp.bfloat16),
                       preferred_element_type=jnp.float32) + b
    h = jnp.maximum(dense(x, p["w1"], p["b1"]), 0.0)
    h = jnp.maximum(dense(h, p["w2"], p["b2"]), 0.0)
    h = jnp.maximum(dense(h, p["w3"], p["b3"]), 0.0)
    h = jnp.maximum(dense(h, p["w3"], p["b3"]), 0.0)   # dense3 applied twice
    h = jnp.maximum(dense(h, p["w4"], p["b4"]), 0.0)
    return dense(h, p["w5"], p["b5"])


if __name__ == "__main__":
    key = jax.random.PRNGKey(0)
    k_x, k_p = jax.random.split(key)
    params = init_params(k_p)

    # Small, sublane-aligned batch.
    B = 8
    x = jax.random.normal(k_x, (B, 784), dtype=jnp.float32)
    out = jax.block_until_ready(mnist_dnn_forward(x, params))
    ref = reference_forward_bf16(x, params)
    assert out.shape == (B, 10)
    assert jnp.allclose(out, ref, atol=2e-2, rtol=2e-2), "mismatch vs bf16 reference"

    # Ragged batch exercising the batch grid (2 tiles + padded tail rows).
    B2 = 13
    x2 = jax.random.normal(k_x, (B2, 784), dtype=jnp.float32)
    out2 = jax.block_until_ready(mnist_dnn_forward(x2, params, max_tile_b=8))
    ref2 = reference_forward_bf16(x2, params)
    assert out2.shape == (B2, 10)
    assert jnp.allclose(out2, ref2, atol=2e-2, rtol=2e-2), "mismatch on ragged batch"

    print("KERNEL_OK")
</pallas_src>

<mosaic_0001>
module attributes {stable_mosaic.version = 11 : i64} {
  func.func @_mlp_kernel(%arg0: i32, %arg1: memref<8x896xbf16, #tpu.memory_space<vmem>>, %arg2: memref<896x512xbf16, #tpu.memory_space<vmem>>, %arg3: memref<1x512xf32, #tpu.memory_space<vmem>>, %arg4: memref<512x512xbf16, #tpu.memory_space<vmem>>, %arg5: memref<1x512xf32, #tpu.memory_space<vmem>>, %arg6: memref<512x512xbf16, #tpu.memory_space<vmem>>, %arg7: memref<1x512xf32, #tpu.memory_space<vmem>>, %arg8: memref<512x512xbf16, #tpu.memory_space<vmem>>, %arg9: memref<1x512xf32, #tpu.memory_space<vmem>>, %arg10: memref<512x128xbf16, #tpu.memory_space<vmem>>, %arg11: memref<1x128xf32, #tpu.memory_space<vmem>>, %arg12: memref<8x128xf32, #tpu.memory_space<vmem>>) attributes {dimension_semantics = [#tpu.dimension_semantics<parallel>], iteration_bounds = array<i64: 1>, scalar_prefetch = 0 : i64, scratch_operands = 0 : i64, tpu.core_type = #tpu.core_type<tc>, window_params = [{transform_indices = @transform_0, window_bounds = array<i64: 8, 896>}, {pipeline_mode = #tpu.pipeline_mode<synchronous>, transform_indices = @transform_1, window_bounds = array<i64: 896, 512>}, {pipeline_mode = #tpu.pipeline_mode<synchronous>, transform_indices = @transform_2, window_bounds = array<i64: 1, 512>}, {pipeline_mode = #tpu.pipeline_mode<synchronous>, transform_indices = @transform_3, window_bounds = array<i64: 512, 512>}, {pipeline_mode = #tpu.pipeline_mode<synchronous>, transform_indices = @transform_4, window_bounds = array<i64: 1, 512>}, {pipeline_mode = #tpu.pipeline_mode<synchronous>, transform_indices = @transform_5, window_bounds = array<i64: 512, 512>}, {pipeline_mode = #tpu.pipeline_mode<synchronous>, transform_indices = @transform_6, window_bounds = array<i64: 1, 512>}, {pipeline_mode = #tpu.pipeline_mode<synchronous>, transform_indices = @transform_7, window_bounds = array<i64: 512, 512>}, {pipeline_mode = #tpu.pipeline_mode<synchronous>, transform_indices = @transform_8, window_bounds = array<i64: 1, 512>}, {pipeline_mode = #tpu.pipeline_mode<synchronous>, transform_indices = @transform_9, window_bounds = array<i64: 512, 128>}, {pipeline_mode = #tpu.pipeline_mode<synchronous>, transform_indices = @transform_10, window_bounds = array<i64: 1, 128>}, {transform_indices = @transform_11, window_bounds = array<i64: 8, 128>}]} {
    %c0 = arith.constant 0 : index
    %c0_0 = arith.constant 0 : index
    %0 = vector.load %arg1[%c0, %c0_0] : memref<8x896xbf16, #tpu.memory_space<vmem>>, vector<8x896xbf16>
    %c0_1 = arith.constant 0 : index
    %c0_2 = arith.constant 0 : index
    %1 = vector.load %arg2[%c0_1, %c0_2] : memref<896x512xbf16, #tpu.memory_space<vmem>>, vector<896x512xbf16>
    %cst = arith.constant dense<0.000000e+00> : vector<8x512xf32>
    %2 = tpu.matmul %0, %1, %cst {dimension_numbers = #tpu.dot_dimension_numbers<[1], [0], [0], [1], [0, 0, 1, 1], [], []>} : vector<8x896xbf16>, vector<896x512xbf16>, vector<8x512xf32> -> vector<8x512xf32>
    %c0_3 = arith.constant 0 : index
    %c0_4 = arith.constant 0 : index
    %3 = vector.load %arg3[%c0_3, %c0_4] : memref<1x512xf32, #tpu.memory_space<vmem>>, vector<1x512xf32>
    %4 = vector.broadcast %3 : vector<1x512xf32> to vector<8x512xf32>
    %5 = arith.addf %2, %4 : vector<8x512xf32>
    %cst_5 = arith.constant 0.000000e+00 : f32
    %6 = vector.broadcast %cst_5 : f32 to vector<8x512xf32>
    %7 = arith.maximumf %5, %6 : vector<8x512xf32>
    %8 = arith.truncf %7 : vector<8x512xf32> to vector<8x512xbf16>
    %c0_6 = arith.constant 0 : index
    %c0_7 = arith.constant 0 : index
    %9 = vector.load %arg4[%c0_6, %c0_7] : memref<512x512xbf16, #tpu.memory_space<vmem>>, vector<512x512xbf16>
    %cst_8 = arith.constant dense<0.000000e+00> : vector<8x512xf32>
    %10 = tpu.matmul %8, %9, %cst_8 {dimension_numbers = #tpu.dot_dimension_numbers<[1], [0], [0], [1], [0, 0, 1, 1], [], []>} : vector<8x512xbf16>, vector<512x512xbf16>, vector<8x512xf32> -> vector<8x512xf32>
    %c0_9 = arith.constant 0 : index
    %c0_10 = arith.constant 0 : index
    %11 = vector.load %arg5[%c0_9, %c0_10] : memref<1x512xf32, #tpu.memory_space<vmem>>, vector<1x512xf32>
    %12 = vector.broadcast %11 : vector<1x512xf32> to vector<8x512xf32>
    %13 = arith.addf %10, %12 : vector<8x512xf32>
    %cst_11 = arith.constant 0.000000e+00 : f32
    %14 = vector.broadcast %cst_11 : f32 to vector<8x512xf32>
    %15 = arith.maximumf %13, %14 : vector<8x512xf32>
    %16 = arith.truncf %15 : vector<8x512xf32> to vector<8x512xbf16>
    %c0_12 = arith.constant 0 : index
    %c0_13 = arith.constant 0 : index
    %17 = vector.load %arg6[%c0_12, %c0_13] : memref<512x512xbf16, #tpu.memory_space<vmem>>, vector<512x512xbf16>
    %cst_14 = arith.constant dense<0.000000e+00> : vector<8x512xf32>
    %18 = tpu.matmul %16, %17, %cst_14 {dimension_numbers = #tpu.dot_dimension_numbers<[1], [0], [0], [1], [0, 0, 1, 1], [], []>} : vector<8x512xbf16>, vector<512x512xbf16>, vector<8x512xf32> -> vector<8x512xf32>
    %c0_15 = arith.constant 0 : index
    %c0_16 = arith.constant 0 : index
    %19 = vector.load %arg7[%c0_15, %c0_16] : memref<1x512xf32, #tpu.memory_space<vmem>>, vector<1x512xf32>
    %20 = vector.broadcast %19 : vector<1x512xf32> to vector<8x512xf32>
    %21 = arith.addf %18, %20 : vector<8x512xf32>
    %cst_17 = arith.constant 0.000000e+00 : f32
    %22 = vector.broadcast %cst_17 : f32 to vector<8x512xf32>
    %23 = arith.maximumf %21, %22 : vector<8x512xf32>
    %24 = arith.truncf %23 : vector<8x512xf32> to vector<8x512xbf16>
    %c0_18 = arith.constant 0 : index
    %c0_19 = arith.constant 0 : index
    %25 = vector.load %arg6[%c0_18, %c0_19] : memref<512x512xbf16, #tpu.memory_space<vmem>>, vector<512x512xbf16>
    %cst_20 = arith.constant dense<0.000000e+00> : vector<8x512xf32>
    %26 = tpu.matmul %24, %25, %cst_20 {dimension_numbers = #tpu.dot_dimension_numbers<[1], [0], [0], [1], [0, 0, 1, 1], [], []>} : vector<8x512xbf16>, vector<512x512xbf16>, vector<8x512xf32> -> vector<8x512xf32>
    %c0_21 = arith.constant 0 : index
    %c0_22 = arith.constant 0 : index
    %27 = vector.load %arg7[%c0_21, %c0_22] : memref<1x512xf32, #tpu.memory_space<vmem>>, vector<1x512xf32>
    %28 = vector.broadcast %27 : vector<1x512xf32> to vector<8x512xf32>
    %29 = arith.addf %26, %28 : vector<8x512xf32>
    %cst_23 = arith.constant 0.000000e+00 : f32
    %30 = vector.broadcast %cst_23 : f32 to vector<8x512xf32>
    %31 = arith.maximumf %29, %30 : vector<8x512xf32>
    %32 = arith.truncf %31 : vector<8x512xf32> to vector<8x512xbf16>
    %c0_24 = arith.constant 0 : index
    %c0_25 = arith.constant 0 : index
    %33 = vector.load %arg8[%c0_24, %c0_25] : memref<512x512xbf16, #tpu.memory_space<vmem>>, vector<512x512xbf16>
    %cst_26 = arith.constant dense<0.000000e+00> : vector<8x512xf32>
    %34 = tpu.matmul %32, %33, %cst_26 {dimension_numbers = #tpu.dot_dimension_numbers<[1], [0], [0], [1], [0, 0, 1, 1], [], []>} : vector<8x512xbf16>, vector<512x512xbf16>, vector<8x512xf32> -> vector<8x512xf32>
    %c0_27 = arith.constant 0 : index
    %c0_28 = arith.constant 0 : index
    %35 = vector.load %arg9[%c0_27, %c0_28] : memref<1x512xf32, #tpu.memory_space<vmem>>, vector<1x512xf32>
    %36 = vector.broadcast %35 : vector<1x512xf32> to vector<8x512xf32>
    %37 = arith.addf %34, %36 : vector<8x512xf32>
    %cst_29 = arith.constant 0.000000e+00 : f32
    %38 = vector.broadcast %cst_29 : f32 to vector<8x512xf32>
    %39 = arith.maximumf %37, %38 : vector<8x512xf32>
    %40 = arith.truncf %39 : vector<8x512xf32> to vector<8x512xbf16>
    %c0_30 = arith.constant 0 : index
    %c0_31 = arith.constant 0 : index
    %41 = vector.load %arg10[%c0_30, %c0_31] : memref<512x128xbf16, #tpu.memory_space<vmem>>, vector<512x128xbf16>
    %cst_32 = arith.constant dense<0.000000e+00> : vector<8x128xf32>
    %42 = tpu.matmul %40, %41, %cst_32 {dimension_numbers = #tpu.dot_dimension_numbers<[1], [0], [0], [1], [0, 0, 1, 1], [], []>} : vector<8x512xbf16>, vector<512x128xbf16>, vector<8x128xf32> -> vector<8x128xf32>
    %c0_33 = arith.constant 0 : index
    %c0_34 = arith.constant 0 : index
    %43 = vector.load %arg11[%c0_33, %c0_34] : memref<1x128xf32, #tpu.memory_space<vmem>>, vector<1x128xf32>
    %44 = vector.broadcast %43 : vector<1x128xf32> to vector<8x128xf32>
    %45 = arith.addf %42, %44 : vector<8x128xf32>
    %c0_35 = arith.constant 0 : index
    %c0_36 = arith.constant 0 : index
    %46 = vector.load %arg12[%c0_35, %c0_36] : memref<8x128xf32, #tpu.memory_space<vmem>>, vector<8x128xf32>
    tpu.vector_store %arg12[%c0_35, %c0_36], %45 {strides = array<i32>} : memref<8x128xf32, #tpu.memory_space<vmem>>, vector<8x128xf32>,
    return
  }
  func.func @transform_0(%arg0: i32) -> (i32, i32) {
    %c0_i32 = arith.constant 0 : i32
    %c0_i32_0 = arith.constant 0 : i32
    return %arg0, %c0_i32 : i32, i32
  }
  func.func @transform_1(%arg0: i32) -> (i32, i32) {
    %c0_i32 = arith.constant 0 : i32
    %c0_i32_0 = arith.constant 0 : i32
    %c0_i32_1 = arith.constant 0 : i32
    return %c0_i32, %c0_i32_0 : i32, i32
  }
  func.func @transform_2(%arg0: i32) -> (i32, i32) {
    %c0_i32 = arith.constant 0 : i32
    %c0_i32_0 = arith.constant 0 : i32
    %c0_i32_1 = arith.constant 0 : i32
    return %c0_i32, %c0_i32_0 : i32, i32
  }
  func.func @transform_3(%arg0: i32) -> (i32, i32) {
    %c0_i32 = arith.constant 0 : i32
    %c0_i32_0 = arith.constant 0 : i32
    %c0_i32_1 = arith.constant 0 : i32
    return %c0_i32, %c0_i32_0 : i32, i32
  }
  func.func @transform_4(%arg0: i32) -> (i32, i32) {
    %c0_i32 = arith.constant 0 : i32
    %c0_i32_0 = arith.constant 0 : i32
    %c0_i32_1 = arith.constant 0 : i32
    return %c0_i32, %c0_i32_0 : i32, i32
  }
  func.func @transform_5(%arg0: i32) -> (i32, i32) {
    %c0_i32 = arith.constant 0 : i32
    %c0_i32_0 = arith.constant 0 : i32
    %c0_i32_1 = arith.constant 0 : i32
    return %c0_i32, %c0_i32_0 : i32, i32
  }
  func.func @transform_6(%arg0: i32) -> (i32, i32) {
    %c0_i32 = arith.constant 0 : i32
    %c0_i32_0 = arith.constant 0 : i32
    %c0_i32_1 = arith.constant 0 : i32
    return %c0_i32, %c0_i32_0 : i32, i32
  }
  func.func @transform_7(%arg0: i32) -> (i32, i32) {
    %c0_i32 = arith.constant 0 : i32
    %c0_i32_0 = arith.constant 0 : i32
    %c0_i32_1 = arith.constant 0 : i32
    return %c0_i32, %c0_i32_0 : i32, i32
  }
  func.func @transform_8(%arg0: i32) -> (i32, i32) {
    %c0_i32 = arith.constant 0 : i32
    %c0_i32_0 = arith.constant 0 : i32
    %c0_i32_1 = arith.constant 0 : i32
    return %c0_i32, %c0_i32_0 : i32, i32
  }
  func.func @transform_9(%arg0: i32) -> (i32, i32) {
    %c0_i32 = arith.constant 0 : i32
    %c0_i32_0 = arith.constant 0 : i32
    %c0_i32_1 = arith.constant 0 : i32
    return %c0_i32, %c0_i32_0 : i32, i32
  }
  func.func @transform_10(%arg0: i32) -> (i32, i32) {
    %c0_i32 = arith.constant 0 : i32
    %c0_i32_0 = arith.constant 0 : i32
    %c0_i32_1 = arith.constant 0 : i32
    return %c0_i32, %c0_i32_0 : i32, i32
  }
  func.func @transform_11(%arg0: i32) -> (i32, i32) {
    %c0_i32 = arith.constant 0 : i32
    %c0_i32_0 = arith.constant 0 : i32
    return %arg0, %c0_i32 : i32, i32
  }
}

</mosaic_0001>

<llo_original>
// kernel: tpu_custom_call.1
$region0: #{tpu_custom_call.1}
  #allocation0 [shape = 'u32[]', space=smem, size = 0x4, offset = 0x4, fixed_abs, tag = 'smem constant byte address 0x4 - core index']
  #allocation1 [shape = 'u32[144,128]{1,0:T(1,128)}', space=vmem, size = 0x12000, scoped, tag = 'internal scratch']
  %s0 = inlined_call_operand.hbm [shape: bf16[8,896], index: 0, kind: input, shape index: {}]
  %s1 = inlined_call_operand.hbm [shape: bf16[896,512], index: 1, kind: input, shape index: {}]
  %s2 = inlined_call_operand.hbm [shape: f32[1,512], index: 2, kind: input, shape index: {}]
  %s3 = inlined_call_operand.hbm [shape: bf16[512,512], index: 3, kind: input, shape index: {}]
  %s4 = inlined_call_operand.vmem [shape: f32[1,512], index: 4, kind: input, shape index: {}]
  %s5 = inlined_call_operand.hbm [shape: bf16[512,512], index: 5, kind: input, shape index: {}]
  %s6 = inlined_call_operand.vmem [shape: f32[1,512], index: 6, kind: input, shape index: {}]
  %s7 = inlined_call_operand.hbm [shape: bf16[512,512], index: 7, kind: input, shape index: {}]
  %s8 = inlined_call_operand.vmem [shape: f32[1,512], index: 8, kind: input, shape index: {}]
  %s9 = inlined_call_operand.hbm [shape: bf16[512,128], index: 9, kind: input, shape index: {}]
  %s10 = inlined_call_operand.vmem [shape: f32[1,128], index: 10, kind: input, shape index: {}]
  %s11 = inlined_call_operand.hbm [shape: f32[8,128], index: 11, kind: output, shape index: {}]
  %s12 = sld [smem:[#allocation0]]
  $region82: #{tpu_custom_call.1} parent=0
    _
  %s14 = ssub.s32 1, %s12
  %s15 = scalar_select 0, %s14, %s12
  $region1: #{tpu_custom_call.1} parent=0
    #allocation2 [shape = 'u8[14336]{0}', space=vmem, size = 0x3800, scoped, tag = 'input window, operand 0, single buffered']
    #allocation3 [shape = 's32[1]{0}', space=sflag, size = 0x4, scoped, tag = 'scoped memory for tpu_custom_call.1']
    #allocation4 [shape = 's32[1]{0}', space=sflag, size = 0x4, scoped, tag = 'scoped memory for tpu_custom_call.1']
    #allocation5 [shape = 'u8[917504]{0}', space=vmem, size = 0xe0000, scoped, tag = 'input window, operand 1, single buffered']
    #allocation6 [shape = 's32[1]{0}', space=sflag, size = 0x4, scoped, tag = 'scoped memory for tpu_custom_call.1']
    #allocation7 [shape = 'u8[2048]{0}', space=vmem, size = 0x800, scoped, tag = 'input window, operand 2, single buffered']
    #allocation8 [shape = 'u8[524288]{0}', space=vmem, size = 0x80000, scoped, tag = 'input window, operand 3, single buffered']
    #allocation9 [shape = 's32[1]{0}', space=sflag, size = 0x4, scoped, tag = 'scoped memory for tpu_custom_call.1']
    #allocation10 [shape = 'u8[524288]{0}', space=vmem, size = 0x80000, scoped, tag = 'input window, operand 5, single buffered']
    #allocation11 [shape = 'u8[524288]{0}', space=vmem, size = 0x80000, scoped, tag = 'input window, operand 7, single buffered']
    #allocation12 [shape = 's32[1]{0}', space=sflag, size = 0x4, scoped, tag = 'scoped memory for tpu_custom_call.1']
    #allocation13 [shape = 'u8[131072]{0}', space=vmem, size = 0x20000, scoped, tag = 'input window, operand 9, single buffered']
    #allocation14 [shape = 'u8[4096]{0}', space=vmem, size = 0x1000, scoped, tag = 'output window, operand 0, single buffered']
    %16 = vsyncpa [#allocation3], 0
    %17 = vsyncpa [#allocation6], 0
    %18 = vsyncpa [#allocation9], 0
    %19 = vsyncpa [#allocation12], 0
    %20 = vsyncpa [#allocation4], 0
    // Predicated region
    $region2: #{tpu_custom_call.1} parent=1 // pred_check
      _
    $region3: #{tpu_custom_call.1} parent=1 // pred_check_branch
      %22 = sbr.rel (0) target = $region5
    $region4: #{tpu_custom_call.1} parent=1 // pred_region
      %s24 = ssub.s32 448, 448
      %25 = vsyncadd [#allocation3], %s24
      %s27 = sshll.u32 [#allocation2], 4
      %s28 = int_to_ptr.vmem [resolvable:$true] %s27
      %30 = dma.hbm_to_vmem [thread:$0]  %s0, 448, %s28, [#allocation3]
    $region5: #{tpu_custom_call.1} parent=1 // pred_fallthru
      _
    // Predicated region
    $region6: #{tpu_custom_call.1} parent=1 // pred_check
      _
    $region7: #{tpu_custom_call.1} parent=1 // pred_check_branch
      %32 = sbr.rel (0) target = $region9
    $region8: #{tpu_custom_call.1} parent=1 // pred_region
      %s34 = ssub.s32 28672, 28672
      %35 = vsyncadd [#allocation6], %s34
      %s36 = sshll.u32 [#allocation5], 4
      %s37 = int_to_ptr.vmem [resolvable:$true] %s36
      %42 = dma.hbm_to_vmem [thread:$0]  %s1, 28672, %s37, [#allocation6], 256, 256, 16
    $region9: #{tpu_custom_call.1} parent=1 // pred_fallthru
      _
    // Predicated region
    $region10: #{tpu_custom_call.1} parent=1 // pred_check
      _
    $region11: #{tpu_custom_call.1} parent=1 // pred_check_branch
      %44 = sbr.rel (0) target = $region13
    $region12: #{tpu_custom_call.1} parent=1 // pred_region
      %s46 = ssub.s32 64, 64
      %47 = vsyncadd [#allocation6], %s46
      %s49 = sshll.u32 [#allocation7], 4
      %s50 = int_to_ptr.vmem [resolvable:$true] %s49
      %52 = dma.hbm_to_vmem [thread:$0]  %s2, 64, %s50, [#allocation6]
    $region13: #{tpu_custom_call.1} parent=1 // pred_fallthru
      _
    // Predicated region
    $region14: #{tpu_custom_call.1} parent=1 // pred_check
      _
    $region15: #{tpu_custom_call.1} parent=1 // pred_check_branch
      %54 = sbr.rel (0) target = $region17
    $region16: #{tpu_custom_call.1} parent=1 // pred_region
      %s56 = ssub.s32 16384, 16384
      %57 = vsyncadd [#allocation9], %s56
      %s58 = sshll.u32 [#allocation8], 4
      %s59 = int_to_ptr.vmem [resolvable:$true] %s58
      %64 = dma.hbm_to_vmem [thread:$0]  %s3, 16384, %s59, [#allocation9], 256, 256, 16
    $region17: #{tpu_custom_call.1} parent=1 // pred_fallthru
      _
    // Predicated region
    $region18: #{tpu_custom_call.1} parent=1 // pred_check
      _
    $region19: #{tpu_custom_call.1} parent=1 // pred_check_branch
      %66 = sbr.rel (0) target = $region21
    $region20: #{tpu_custom_call.1} parent=1 // pred_region
      _
    $region21: #{tpu_custom_call.1} parent=1 // pred_fallthru
      _
    // Predicated region
    $region22: #{tpu_custom_call.1} parent=1 // pred_check
      _
    $region23: #{tpu_custom_call.1} parent=1 // pred_check_branch
      %68 = sbr.rel (0) target = $region25
    $region24: #{tpu_custom_call.1} parent=1 // pred_region
      %s70 = ssub.s32 16384, 16384
      %71 = vsyncadd [#allocation9], %s70
      %s72 = sshll.u32 [#allocation10], 4
      %s73 = int_to_ptr.vmem [resolvable:$true] %s72
      %78 = dma.hbm_to_vmem [thread:$0]  %s5, 16384, %s73, [#allocation9], 256, 256, 16
    $region25: #{tpu_custom_call.1} parent=1 // pred_fallthru
      _
    // Predicated region
    $region26: #{tpu_custom_call.1} parent=1 // pred_check
      _
    $region27: #{tpu_custom_call.1} parent=1 // pred_check_branch
      %80 = sbr.rel (0) target = $region29
    $region28: #{tpu_custom_call.1} parent=1 // pred_region
      _
    $region29: #{tpu_custom_call.1} parent=1 // pred_fallthru
      _
    // Predicated region
    $region30: #{tpu_custom_call.1} parent=1 // pred_check
      _
    $region31: #{tpu_custom_call.1} parent=1 // pred_check_branch
      %82 = sbr.rel (0) target = $region33
    $region32: #{tpu_custom_call.1} parent=1 // pred_region
      %s84 = ssub.s32 16384, 16384
      %85 = vsyncadd [#allocation12], %s84
      %s86 = sshll.u32 [#allocation11], 4
      %s87 = int_to_ptr.vmem [resolvable:$true] %s86
      %92 = dma.hbm_to_vmem [thread:$0]  %s7, 16384, %s87, [#allocation12], 256, 256, 16
    $region33: #{tpu_custom_call.1} parent=1 // pred_fallthru
      _
    // Predicated region
    $region34: #{tpu_custom_call.1} parent=1 // pred_check
      _
    $region35: #{tpu_custom_call.1} parent=1 // pred_check_branch
      %94 = sbr.rel (0) target = $region37
    $region36: #{tpu_custom_call.1} parent=1 // pred_region
      _
    $region37: #{tpu_custom_call.1} parent=1 // pred_fallthru
      _
    // Predicated region
    $region38: #{tpu_custom_call.1} parent=1 // pred_check
      _
    $region39: #{tpu_custom_call.1} parent=1 // pred_check_branch
      %96 = sbr.rel (0) target = $region41
    $region40: #{tpu_custom_call.1} parent=1 // pred_region
      %s98 = ssub.s32 4096, 4096
      %99 = vsyncadd [#allocation12], %s98
      %s100 = sshll.u32 [#allocation13], 4
      %s101 = int_to_ptr.vmem [resolvable:$true] %s100
      %106 = dma.hbm_to_vmem [thread:$0]  %s9, 4096, %s101, [#allocation12], 64, 64, 4
    $region41: #{tpu_custom_call.1} parent=1 // pred_fallthru
      _
    // Predicated region
    $region42: #{tpu_custom_call.1} parent=1 // pred_check
      _
    $region43: #{tpu_custom_call.1} parent=1 // pred_check_branch
      %108 = sbr.rel (0) target = $region45
    $region44: #{tpu_custom_call.1} parent=1 // pred_region
      _
    $region45: #{tpu_custom_call.1} parent=1 // pred_fallthru
      _
    // Predicated region
    $region46: #{tpu_custom_call.1} parent=1 // pred_check
      _
    $region47: #{tpu_custom_call.1} parent=1 // pred_check_branch
      %110 = sbr.rel (0) target = $region49
    $region48: #{tpu_custom_call.1} parent=1 // pred_region
      %111 = dma.done [#allocation3], 448
    $region49: #{tpu_custom_call.1} parent=1 // pred_fallthru
      _
    // Predicated region
    $region50: #{tpu_custom_call.1} parent=1 // pred_check
      _
    $region51: #{tpu_custom_call.1} parent=1 // pred_check_branch
      %113 = sbr.rel (0) target = $region53
    $region52: #{tpu_custom_call.1} parent=1 // pred_region
      %114 = dma.done [#allocation6], 28672
    $region53: #{tpu_custom_call.1} parent=1 // pred_fallthru
      _
    // Predicated region
    $region54: #{tpu_custom_call.1} parent=1 // pred_check
      _
    $region55: #{tpu_custom_call.1} parent=1 // pred_check_branch
      %116 = sbr.rel (0) target = $region57
    $region56: #{tpu_custom_call.1} parent=1 // pred_region
      %117 = dma.done [#allocation6], 64
    $region57: #{tpu_custom_call.1} parent=1 // pred_fallthru
      _
    // Predicated region
    $region58: #{tpu_custom_call.1} parent=1 // pred_check
      _
    $region59: #{tpu_custom_call.1} parent=1 // pred_check_branch
      %119 = sbr.rel (0) target = $region61
    $region60: #{tpu_custom_call.1} parent=1 // pred_region
      %120 = dma.done [#allocation9], 16384
    $region61: #{tpu_custom_call.1} parent=1 // pred_fallthru
      _
    // Predicated region
    $region62: #{tpu_custom_call.1} parent=1 // pred_check
      _
    $region63: #{tpu_custom_call.1} parent=1 // pred_check_branch
      %122 = sbr.rel (0) target = $region65
    $region64: #{tpu_custom_call.1} parent=1 // pred_region
      %123 = dma.done [#allocation9], 16384
    $region65: #{tpu_custom_call.1} parent=1 // pred_fallthru
      _
    // Predicated region
    $region66: #{tpu_custom_call.1} parent=1 // pred_check
      _
    $region67: #{tpu_custom_call.1} parent=1 // pred_check_branch
      %125 = sbr.rel (0) target = $region69
    $region68: #{tpu_custom_call.1} parent=1 // pred_region
      %126 = dma.done [#allocation12], 16384
    $region69: #{tpu_custom_call.1} parent=1 // pred_fallthru
      _
    // Predicated region
    $region70: #{tpu_custom_call.1} parent=1 // pred_check
      _
    $region71: #{tpu_custom_call.1} parent=1 // pred_check_branch
      %128 = sbr.rel (0) target = $region73
    $region72: #{tpu_custom_call.1} parent=1 // pred_region
      %129 = dma.done [#allocation12], 4096
    $region73: #{tpu_custom_call.1} parent=1 // pred_fallthru
      _
    %v131 = vld [vmem:[#allocation2] sm:$0xff]
    %v132 = vld [vmem:[#allocation2 + $0x8] sm:$0xff]
    %v133 = vld [vmem:[#allocation2 + $0x10] sm:$0xff]
    %v134 = vld [vmem:[#allocation2 + $0x18] sm:$0xf]
    %v135 = vld [vmem:[#allocation5] sm:$0xff]
    %v136 = vld [vmem:[#allocation5 + $0x8] sm:$0xff]
    %v137 = vld [vmem:[#allocation5 + $0x10] sm:$0xff]
    %v138 = vld [vmem:[#allocation5 + $0x18] sm:$0xff]
    %v139 = vld [vmem:[#allocation5 + $0x20] sm:$0xff]
    %v140 = vld [vmem:[#allocation5 + $0x28] sm:$0xff]
    %v141 = vld [vmem:[#allocation5 + $0x30] sm:$0xff]
    %v142 = vld [vmem:[#allocation5 + $0x38] sm:$0xff]
    %v143 = vld [vmem:[#allocation5 + $0x40] sm:$0xff]
    %v144 = vld [vmem:[#allocation5 + $0x48] sm:$0xff]
    %v145 = vld [vmem:[#allocation5 + $0x50] sm:$0xff]
    %v146 = vld [vmem:[#allocation5 + $0x58] sm:$0xff]
    %v147 = vld [vmem:[#allocation5 + $0x60] sm:$0xff]
    %v148 = vld [vmem:[#allocation5 + $0x68] sm:$0xff]
    %v149 = vld [vmem:[#allocation5 + $0x70] sm:$0xff]
    %v150 = vld [vmem:[#allocation5 + $0x78] sm:$0xff]
    %v151 = vld [vmem:[#allocation5 + $0x80] sm:$0xff]
    %v152 = vld [vmem:[#allocation5 + $0x88] sm:$0xff]
    %v153 = vld [vmem:[#allocation5 + $0x90] sm:$0xff]
    %v154 = vld [vmem:[#allocation5 + $0x98] sm:$0xff]
    %v155 = vld [vmem:[#allocation5 + $0xa0] sm:$0xff]
    %v156 = vld [vmem:[#allocation5 + $0xa8] sm:$0xff]
    %v157 = vld [vmem:[#allocation5 + $0xb0] sm:$0xff]
    %v158 = vld [vmem:[#allocation5 + $0xb8] sm:$0xff]
    %v159 = vld [vmem:[#allocation5 + $0xc0] sm:$0xff]
    %v160 = vld [vmem:[#allocation5 + $0xc8] sm:$0xff]
    %v161 = vld [vmem:[#allocation5 + $0xd0] sm:$0xff]
    %v162 = vld [vmem:[#allocation5 + $0xd8] sm:$0xff]
    %v163 = vld [vmem:[#allocation5 + $0xe0] sm:$0xff]
    %v164 = vld [vmem:[#allocation5 + $0xe8] sm:$0xff]
    %v165 = vld [vmem:[#allocation5 + $0xf0] sm:$0xff]
    %v166 = vld [vmem:[#allocation5 + $0xf8] sm:$0xff]
    %v167 = vld [vmem:[#allocation5 + $0x100] sm:$0xff]
    %v168 = vld [vmem:[#allocation5 + $0x108] sm:$0xff]
    %v169 = vld [vmem:[#allocation5 + $0x110] sm:$0xff]
    %v170 = vld [vmem:[#allocation5 + $0x118] sm:$0xff]
    %v171 = vld [vmem:[#allocation5 + $0x120] sm:$0xff]
    %v172 = vld [vmem:[#allocation5 + $0x128] sm:$0xff]
    %v173 = vld [vmem:[#allocation5 + $0x130] sm:$0xff]
    %v174 = vld [vmem:[#allocation5 + $0x138] sm:$0xff]
    %v175 = vld [vmem:[#allocation5 + $0x140] sm:$0xff]
    %v176 = vld [vmem:[#allocation5 + $0x148] sm:$0xff]
    %v177 = vld [vmem:[#allocation5 + $0x150] sm:$0xff]
    %v178 = vld [vmem:[#allocation5 + $0x158] sm:$0xff]
    %v179 = vld [vmem:[#allocation5 + $0x160] sm:$0xff]
    %v180 = vld [vmem:[#allocation5 + $0x168] sm:$0xff]
    %v181 = vld [vmem:[#allocation5 + $0x170] sm:$0xff]
    %v182 = vld [vmem:[#allocation5 + $0x178] sm:$0xff]
    %v183 = vld [vmem:[#allocation5 + $0x180] sm:$0xff]
    %v184 = vld [vmem:[#allocation5 + $0x188] sm:$0xff]
    %v185 = vld [vmem:[#allocation5 + $0x190] sm:$0xff]
    %v186 = vld [vmem:[#allocation5 + $0x198] sm:$0xff]
    %v187 = vld [vmem:[#allocation5 + $0x1a0] sm:$0xff]
    %v188 = vld [vmem:[#allocation5 + $0x1a8] sm:$0xff]
    %v189 = vld [vmem:[#allocation5 + $0x1b0] sm:$0xff]
    %v190 = vld [vmem:[#allocation5 + $0x1b8] sm:$0xff]
    %v191 = vld [vmem:[#allocation5 + $0x1c0] sm:$0xff]
    %v192 = vld [vmem:[#allocation5 + $0x1c8] sm:$0xff]
    %v193 = vld [vmem:[#allocation5 + $0x1d0] sm:$0xff]
    %v194 = vld [vmem:[#allocation5 + $0x1d8] sm:$0xff]
    %v195 = vld [vmem:[#allocation5 + $0x1e0] sm:$0xff]
    %v196 = vld [vmem:[#allocation5 + $0x1e8] sm:$0xff]
    %v197 = vld [vmem:[#allocation5 + $0x1f0] sm:$0xff]
    %v198 = vld [vmem:[#allocation5 + $0x1f8] sm:$0xff]
    %v199 = vld [vmem:[#allocation5 + $0x200] sm:$0xff]
    %v200 = vld [vmem:[#allocation5 + $0x208] sm:$0xff]
    %v201 = vld [vmem:[#allocation5 + $0x210] sm:$0xff]
    %v202 = vld [vmem:[#allocation5 + $0x218] sm:$0xff]
    %v203 = vld [vmem:[#allocation5 + $0x220] sm:$0xff]
    %v204 = vld [vmem:[#allocation5 + $0x228] sm:$0xff]
    %v205 = vld [vmem:[#allocation5 + $0x230] sm:$0xff]
    %v206 = vld [vmem:[#allocation5 + $0x238] sm:$0xff]
    %v207 = vld [vmem:[#allocation5 + $0x240] sm:$0xff]
    %v208 = vld [vmem:[#allocation5 + $0x248] sm:$0xff]
    %v209 = vld [vmem:[#allocation5 + $0x250] sm:$0xff]
    %v210 = vld [vmem:[#allocation5 + $0x258] sm:$0xff]
    %v211 = vld [vmem:[#allocation5 + $0x260] sm:$0xff]
    %v212 = vld [vmem:[#allocation5 + $0x268] sm:$0xff]
    %v213 = vld [vmem:[#allocation5 + $0x270] sm:$0xff]
    %v214 = vld [vmem:[#allocation5 + $0x278] sm:$0xff]
    %v215 = vld [vmem:[#allocation5 + $0x280] sm:$0xff]
    %v216 = vld [vmem:[#allocation5 + $0x288] sm:$0xff]
    %v217 = vld [vmem:[#allocation5 + $0x290] sm:$0xff]
    %v218 = vld [vmem:[#allocation5 + $0x298] sm:$0xff]
    %v219 = vld [vmem:[#allocation5 + $0x2a0] sm:$0xff]
    %v220 = vld [vmem:[#allocation5 + $0x2a8] sm:$0xff]
    %v221 = vld [vmem:[#allocation5 + $0x2b0] sm:$0xff]
    %v222 = vld [vmem:[#allocation5 + $0x2b8] sm:$0xff]
    %v223 = vld [vmem:[#allocation5 + $0x2c0] sm:$0xff]
    %v224 = vld [vmem:[#allocation5 + $0x2c8] sm:$0xff]
    %v225 = vld [vmem:[#allocation5 + $0x2d0] sm:$0xff]
    %v226 = vld [vmem:[#allocation5 + $0x2d8] sm:$0xff]
    %v227 = vld [vmem:[#allocation5 + $0x2e0] sm:$0xff]
    %v228 = vld [vmem:[#allocation5 + $0x2e8] sm:$0xff]
    %v229 = vld [vmem:[#allocation5 + $0x2f0] sm:$0xff]
    %v230 = vld [vmem:[#allocation5 + $0x2f8] sm:$0xff]
    %v231 = vld [vmem:[#allocation5 + $0x300] sm:$0xff]
    %v232 = vld [vmem:[#allocation5 + $0x308] sm:$0xff]
    %v233 = vld [vmem:[#allocation5 + $0x310] sm:$0xff]
    %v234 = vld [vmem:[#allocation5 + $0x318] sm:$0xff]
    %v235 = vld [vmem:[#allocation5 + $0x320] sm:$0xff]
    %v236 = vld [vmem:[#allocation5 + $0x328] sm:$0xff]
    %v237 = vld [vmem:[#allocation5 + $0x330] sm:$0xff]
    %v238 = vld [vmem:[#allocation5 + $0x338] sm:$0xff]
    %v239 = vld [vmem:[#allocation5 + $0x340] sm:$0xff]
    %v240 = vld [vmem:[#allocation5 + $0x348] sm:$0xff]
    %v241 = vld [vmem:[#allocation5 + $0x350] sm:$0xff]
    %v242 = vld [vmem:[#allocation5 + $0x358] sm:$0xff]
    %v243 = vld [vmem:[#allocation5 + $0x360] sm:$0xff]
    %v244 = vld [vmem:[#allocation5 + $0x368] sm:$0xff]
    %v245 = vld [vmem:[#allocation5 + $0x370] sm:$0xff]
    %v246 = vld [vmem:[#allocation5 + $0x378] sm:$0xff]
    %v247 = vld [vmem:[#allocation5 + $0x380] sm:$0xff]
    %v248 = vld [vmem:[#allocation5 + $0x388] sm:$0xff]
    %v249 = vld [vmem:[#allocation5 + $0x390] sm:$0xff]
    %v250 = vld [vmem:[#allocation5 + $0x398] sm:$0xff]
    %v251 = vld [vmem:[#allocation5 + $0x3a0] sm:$0xff]
    %v252 = vld [vmem:[#allocation5 + $0x3a8] sm:$0xff]
    %v253 = vld [vmem:[#allocation5 + $0x3b0] sm:$0xff]
    %v254 = vld [vmem:[#allocation5 + $0x3b8] sm:$0xff]
    %v255 = vld [vmem:[#allocation5 + $0x3c0] sm:$0xff]
    %v256 = vld [vmem:[#allocation5 + $0x3c8] sm:$0xff]
    %v257 = vld [vmem:[#allocation5 + $0x3d0] sm:$0xff]
    %v258 = vld [vmem:[#allocation5 + $0x3d8] sm:$0xff]
    %v259 = vld [vmem:[#allocation5 + $0x3e0] sm:$0xff]
    %v260 = vld [vmem:[#allocation5 + $0x3e8] sm:$0xff]
    %v261 = vld [vmem:[#allocation5 + $0x3f0] sm:$0xff]
    %v262 = vld [vmem:[#allocation5 + $0x3f8] sm:$0xff]
    %v263 = vld [vmem:[#allocation5 + $0x400] sm:$0xff]
    %v264 = vld [vmem:[#allocation5 + $0x408] sm:$0xff]
    %v265 = vld [vmem:[#allocation5 + $0x410] sm:$0xff]
    %v266 = vld [vmem:[#allocation5 + $0x418] sm:$0xff]
    %v267 = vld [vmem:[#allocation5 + $0x420] sm:$0xff]
    %v268 = vld [vmem:[#allocation5 + $0x428] sm:$0xff]
    %v269 = vld [vmem:[#allocation5 + $0x430] sm:$0xff]
    %v270 = vld [vmem:[#allocation5 + $0x438] sm:$0xff]
    %v271 = vld [vmem:[#allocation5 + $0x440] sm:$0xff]
    %v272 = vld [vmem:[#allocation5 + $0x448] sm:$0xff]
    %v273 = vld [vmem:[#allocation5 + $0x450] sm:$0xff]
    %v274 = vld [vmem:[#allocation5 + $0x458] sm:$0xff]
    %v275 = vld [vmem:[#allocation5 + $0x460] sm:$0xff]
    %v276 = vld [vmem:[#allocation5 + $0x468] sm:$0xff]
    %v277 = vld [vmem:[#allocation5 + $0x470] sm:$0xff]
    %v278 = vld [vmem:[#allocation5 + $0x478] sm:$0xff]
    %v279 = vld [vmem:[#allocation5 + $0x480] sm:$0xff]
    %v280 = vld [vmem:[#allocation5 + $0x488] sm:$0xff]
    %v281 = vld [vmem:[#allocation5 + $0x490] sm:$0xff]
    %v282 = vld [vmem:[#allocation5 + $0x498] sm:$0xff]
    %v283 = vld [vmem:[#allocation5 + $0x4a0] sm:$0xff]
    %v284 = vld [vmem:[#allocation5 + $0x4a8] sm:$0xff]
    %v285 = vld [vmem:[#allocation5 + $0x4b0] sm:$0xff]
    %v286 = vld [vmem:[#allocation5 + $0x4b8] sm:$0xff]
    %v287 = vld [vmem:[#allocation5 + $0x4c0] sm:$0xff]
    %v288 = vld [vmem:[#allocation5 + $0x4c8] sm:$0xff]
    %v289 = vld [vmem:[#allocation5 + $0x4d0] sm:$0xff]
    %v290 = vld [vmem:[#allocation5 + $0x4d8] sm:$0xff]
    %v291 = vld [vmem:[#allocation5 + $0x4e0] sm:$0xff]
    %v292 = vld [vmem:[#allocation5 + $0x4e8] sm:$0xff]
    %v293 = vld [vmem:[#allocation5 + $0x4f0] sm:$0xff]
    %v294 = vld [vmem:[#allocation5 + $0x4f8] sm:$0xff]
    %v295 = vld [vmem:[#allocation5 + $0x500] sm:$0xff]
    %v296 = vld [vmem:[#allocation5 + $0x508] sm:$0xff]
    %v297 = vld [vmem:[#allocation5 + $0x510] sm:$0xff]
    %v298 = vld [vmem:[#allocation5 + $0x518] sm:$0xff]
    %v299 = vld [vmem:[#allocation5 + $0x520] sm:$0xff]
    %v300 = vld [vmem:[#allocation5 + $0x528] sm:$0xff]
    %v301 = vld [vmem:[#allocation5 + $0x530] sm:$0xff]
    %v302 = vld [vmem:[#allocation5 + $0x538] sm:$0xff]
    %v303 = vld [vmem:[#allocation5 + $0x540] sm:$0xff]
    %v304 = vld [vmem:[#allocation5 + $0x548] sm:$0xff]
    %v305 = vld [vmem:[#allocation5 + $0x550] sm:$0xff]
    %v306 = vld [vmem:[#allocation5 + $0x558] sm:$0xff]
    %v307 = vld [vmem:[#allocation5 + $0x560] sm:$0xff]
    %v308 = vld [vmem:[#allocation5 + $0x568] sm:$0xff]
    %v309 = vld [vmem:[#allocation5 + $0x570] sm:$0xff]
    %v310 = vld [vmem:[#allocation5 + $0x578] sm:$0xff]
    %v311 = vld [vmem:[#allocation5 + $0x580] sm:$0xff]
    %v312 = vld [vmem:[#allocation5 + $0x588] sm:$0xff]
    %v313 = vld [vmem:[#allocation5 + $0x590] sm:$0xff]
    %v314 = vld [vmem:[#allocation5 + $0x598] sm:$0xff]
    %v315 = vld [vmem:[#allocation5 + $0x5a0] sm:$0xff]
    %v316 = vld [vmem:[#allocation5 + $0x5a8] sm:$0xff]
    %v317 = vld [vmem:[#allocation5 + $0x5b0] sm:$0xff]
    %v318 = vld [vmem:[#allocation5 + $0x5b8] sm:$0xff]
    %v319 = vld [vmem:[#allocation5 + $0x5c0] sm:$0xff]
    %v320 = vld [vmem:[#allocation5 + $0x5c8] sm:$0xff]
    %v321 = vld [vmem:[#allocation5 + $0x5d0] sm:$0xff]
    %v322 = vld [vmem:[#allocation5 + $0x5d8] sm:$0xff]
    %v323 = vld [vmem:[#allocation5 + $0x5e0] sm:$0xff]
    %v324 = vld [vmem:[#allocation5 + $0x5e8] sm:$0xff]
    %v325 = vld [vmem:[#allocation5 + $0x5f0] sm:$0xff]
    %v326 = vld [vmem:[#allocation5 + $0x5f8] sm:$0xff]
    %v327 = vld [vmem:[#allocation5 + $0x600] sm:$0xff]
    %v328 = vld [vmem:[#allocation5 + $0x608] sm:$0xff]
    %v329 = vld [vmem:[#allocation5 + $0x610] sm:$0xff]
    %v330 = vld [vmem:[#allocation5 + $0x618] sm:$0xff]
    %v331 = vld [vmem:[#allocation5 + $0x620] sm:$0xff]
    %v332 = vld [vmem:[#allocation5 + $0x628] sm:$0xff]
    %v333 = vld [vmem:[#allocation5 + $0x630] sm:$0xff]
    %v334 = vld [vmem:[#allocation5 + $0x638] sm:$0xff]
    %v335 = vld [vmem:[#allocation5 + $0x640] sm:$0xff]
    %v336 = vld [vmem:[#allocation5 + $0x648] sm:$0xff]
    %v337 = vld [vmem:[#allocation5 + $0x650] sm:$0xff]
    %v338 = vld [vmem:[#allocation5 + $0x658] sm:$0xff]
    %v339 = vld [vmem:[#allocation5 + $0x660] sm:$0xff]
    %v340 = vld [vmem:[#allocation5 + $0x668] sm:$0xff]
    %v341 = vld [vmem:[#allocation5 + $0x670] sm:$0xff]
    %v342 = vld [vmem:[#allocation5 + $0x678] sm:$0xff]
    %v343 = vld [vmem:[#allocation5 + $0x680] sm:$0xff]
    %v344 = vld [vmem:[#allocation5 + $0x688] sm:$0xff]
    %v345 = vld [vmem:[#allocation5 + $0x690] sm:$0xff]
    %v346 = vld [vmem:[#allocation5 + $0x698] sm:$0xff]
    %v347 = vld [vmem:[#allocation5 + $0x6a0] sm:$0xff]
    %v348 = vld [vmem:[#allocation5 + $0x6a8] sm:$0xff]
    %v349 = vld [vmem:[#allocation5 + $0x6b0] sm:$0xff]
    %v350 = vld [vmem:[#allocation5 + $0x6b8] sm:$0xff]
    %v351 = vld [vmem:[#allocation5 + $0x6c0] sm:$0xff]
    %v352 = vld [vmem:[#allocation5 + $0x6c8] sm:$0xff]
    %v353 = vld [vmem:[#allocation5 + $0x6d0] sm:$0xff]
    %v354 = vld [vmem:[#allocation5 + $0x6d8] sm:$0xff]
    %v355 = vld [vmem:[#allocation5 + $0x6e0] sm:$0xff]
    %v356 = vld [vmem:[#allocation5 + $0x6e8] sm:$0xff]
    %v357 = vld [vmem:[#allocation5 + $0x6f0] sm:$0xff]
    %v358 = vld [vmem:[#allocation5 + $0x6f8] sm:$0xff]
    %v359 = vld [vmem:[#allocation7] sm:$0xf]
    %v361 = vlaneseq
    %v362 = vshrl.u32 %v361, 7
    %v363 = vsub.s32 0, %v362
    %v364 = vrot.slane %v359, %v363
    %v365 = vlaneseq
    %v366 = vshrl.u32 %v365, 7
    %v367 = vsub.s32 1, %v366
    %v368 = vrot.slane %v359, %v367
    %v369 = vlaneseq
    %v370 = vshrl.u32 %v369, 7
    %v371 = vsub.s32 2, %v370
    %v372 = vrot.slane %v359, %v371
    %v373 = vlaneseq
    %v374 = vshrl.u32 %v373, 7
    %v375 = vsub.s32 3, %v374
    %v376 = vrot.slane %v359, %v375
    %v385 = vunpack.c.l.b16 %v131
    %v386 = vunpack.c.h.b16 %v131
    %v387 = vunpack.c.l.b16 %v132
    %v388 = vunpack.c.h.b16 %v132
    %v389 = vunpack.c.l.b16 %v133
    %v390 = vunpack.c.h.b16 %v133
    %v391 = vunpack.c.l.b16 %v134
    %v392 = vpack.c.b16 %v385, %v385
    %v393 = vpack.c.b16 %v386, %v386
    %v394 = vpack.c.b16 %v387, %v387
    %v395 = vpack.c.b16 %v388, %v388
    %v396 = vpack.c.b16 %v389, %v389
    %v397 = vpack.c.b16 %v390, %v390
    %v398 = vpack.c.b16 %v391, %v391
    %v630 = vunpack.c.l.b16 %v135
    %v631 = vunpack.c.h.b16 %v135
    %v632 = vunpack.c.l.b16 %v136
    %v633 = vunpack.c.h.b16 %v136
    %v634 = vunpack.c.l.b16 %v137
    %v635 = vunpack.c.h.b16 %v137
    %v636 = vunpack.c.l.b16 %v138
    %v637 = vunpack.c.h.b16 %v138
    %v638 = vunpack.c.l.b16 %v139
    %v639 = vunpack.c.h.b16 %v139
    %v640 = vunpack.c.l.b16 %v140
    %v641 = vunpack.c.h.b16 %v140
    %v642 = vunpack.c.l.b16 %v141
    %v643 = vunpack.c.h.b16 %v141
    %v644 = vunpack.c.l.b16 %v142
    %v645 = vunpack.c.h.b16 %v142
    %v646 = vunpack.c.l.b16 %v143
    %v647 = vunpack.c.h.b16 %v143
    %v648 = vunpack.c.l.b16 %v144
    %v649 = vunpack.c.h.b16 %v144
    %v650 = vunpack.c.l.b16 %v145
    %v651 = vunpack.c.h.b16 %v145
    %v652 = vunpack.c.l.b16 %v146
    %v653 = vunpack.c.h.b16 %v146
    %v654 = vunpack.c.l.b16 %v147
    %v655 = vunpack.c.h.b16 %v147
    %v656 = vunpack.c.l.b16 %v148
    %v657 = vunpack.c.h.b16 %v148
    %v658 = vunpack.c.l.b16 %v149
    %v659 = vunpack.c.h.b16 %v149
    %v660 = vunpack.c.l.b16 %v150
    %v661 = vunpack.c.h.b16 %v150
    %v662 = vunpack.c.l.b16 %v151
    %v663 = vunpack.c.h.b16 %v151
    %v664 = vunpack.c.l.b16 %v152
    %v665 = vunpack.c.h.b16 %v152
    %v666 = vunpack.c.l.b16 %v153
    %v667 = vunpack.c.h.b16 %v153
    %v668 = vunpack.c.l.b16 %v154
    %v669 = vunpack.c.h.b16 %v154
    %v670 = vunpack.c.l.b16 %v155
    %v671 = vunpack.c.h.b16 %v155
    %v672 = vunpack.c.l.b16 %v156
    %v673 = vunpack.c.h.b16 %v156
    %v674 = vunpack.c.l.b16 %v157
    %v675 = vunpack.c.h.b16 %v157
    %v676 = vunpack.c.l.b16 %v158
    %v677 = vunpack.c.h.b16 %v158
    %v678 = vunpack.c.l.b16 %v159
    %v679 = vunpack.c.h.b16 %v159
    %v680 = vunpack.c.l.b16 %v160
    %v681 = vunpack.c.h.b16 %v160
    %v682 = vunpack.c.l.b16 %v161
    %v683 = vunpack.c.h.b16 %v161
    %v684 = vunpack.c.l.b16 %v162
    %v685 = vunpack.c.h.b16 %v162
    %v686 = vunpack.c.l.b16 %v163
    %v687 = vunpack.c.h.b16 %v163
    %v688 = vunpack.c.l.b16 %v164
    %v689 = vunpack.c.h.b16 %v164
    %v690 = vunpack.c.l.b16 %v165
    %v691 = vunpack.c.h.b16 %v165
    %v692 = vunpack.c.l.b16 %v166
    %v693 = vunpack.c.h.b16 %v166
    %v694 = vunpack.c.l.b16 %v167
    %v695 = vunpack.c.h.b16 %v167
    %v696 = vunpack.c.l.b16 %v168
    %v697 = vunpack.c.h.b16 %v168
    %v698 = vunpack.c.l.b16 %v169
    %v699 = vunpack.c.h.b16 %v169
    %v700 = vunpack.c.l.b16 %v170
    %v701 = vunpack.c.h.b16 %v170
    %v702 = vunpack.c.l.b16 %v171
    %v703 = vunpack.c.h.b16 %v171
    %v704 = vunpack.c.l.b16 %v172
    %v705 = vunpack.c.h.b16 %v172
    %v706 = vunpack.c.l.b16 %v173
    %v707 = vunpack.c.h.b16 %v173
    %v708 = vunpack.c.l.b16 %v174
    %v709 = vunpack.c.h.b16 %v174
    %v710 = vunpack.c.l.b16 %v175
    %v711 = vunpack.c.h.b16 %v175
    %v712 = vunpack.c.l.b16 %v176
    %v713 = vunpack.c.h.b16 %v176
    %v714 = vunpack.c.l.b16 %v177
    %v715 = vunpack.c.h.b16 %v177
    %v716 = vunpack.c.l.b16 %v178
    %v717 = vunpack.c.h.b16 %v178
    %v718 = vunpack.c.l.b16 %v179
    %v719 = vunpack.c.h.b16 %v179
    %v720 = vunpack.c.l.b16 %v180
    %v721 = vunpack.c.h.b16 %v180
    %v722 = vunpack.c.l.b16 %v181
    %v723 = vunpack.c.h.b16 %v181
    %v724 = vunpack.c.l.b16 %v182
    %v725 = vunpack.c.h.b16 %v182
    %v726 = vunpack.c.l.b16 %v183
    %v727 = vunpack.c.h.b16 %v183
    %v728 = vunpack.c.l.b16 %v184
    %v729 = vunpack.c.h.b16 %v184
    %v730 = vunpack.c.l.b16 %v185
    %v731 = vunpack.c.h.b16 %v185
    %v732 = vunpack.c.l.b16 %v186
    %v733 = vunpack.c.h.b16 %v186
    %v734 = vunpack.c.l.b16 %v187
    %v735 = vunpack.c.h.b16 %v187
    %v736 = vunpack.c.l.b16 %v188
    %v737 = vunpack.c.h.b16 %v188
    %v738 = vunpack.c.l.b16 %v189
    %v739 = vunpack.c.h.b16 %v189
    %v740 = vunpack.c.l.b16 %v190
    %v741 = vunpack.c.h.b16 %v190
    %v742 = vunpack.c.l.b16 %v191
    %v743 = vunpack.c.h.b16 %v191
    %v744 = vunpack.c.l.b16 %v192
    %v745 = vunpack.c.h.b16 %v192
    %v746 = vunpack.c.l.b16 %v193
    %v747 = vunpack.c.h.b16 %v193
    %v748 = vunpack.c.l.b16 %v194
    %v749 = vunpack.c.h.b16 %v194
    %v750 = vunpack.c.l.b16 %v195
    %v751 = vunpack.c.h.b16 %v195
    %v752 = vunpack.c.l.b16 %v196
    %v753 = vunpack.c.h.b16 %v196
    %v754 = vunpack.c.l.b16 %v197
    %v755 = vunpack.c.h.b16 %v197
    %v756 = vunpack.c.l.b16 %v198
    %v757 = vunpack.c.h.b16 %v198
    %v758 = vunpack.c.l.b16 %v199
    %v759 = vunpack.c.h.b16 %v199
    %v760 = vunpack.c.l.b16 %v200
    %v761 = vunpack.c.h.b16 %v200
    %v762 = vunpack.c.l.b16 %v201
    %v763 = vunpack.c.h.b16 %v201
    %v764 = vunpack.c.l.b16 %v202
    %v765 = vunpack.c.h.b16 %v202
    %v766 = vunpack.c.l.b16 %v203
    %v767 = vunpack.c.h.b16 %v203
    %v768 = vunpack.c.l.b16 %v204
    %v769 = vunpack.c.h.b16 %v204
    %v770 = vunpack.c.l.b16 %v205
    %v771 = vunpack.c.h.b16 %v205
    %v772 = vunpack.c.l.b16 %v206
    %v773 = vunpack.c.h.b16 %v206
    %v774 = vunpack.c.l.b16 %v207
    %v775 = vunpack.c.h.b16 %v207
    %v776 = vunpack.c.l.b16 %v208
    %v777 = vunpack.c.h.b16 %v208
    %v778 = vunpack.c.l.b16 %v209
    %v779 = vunpack.c.h.b16 %v209
    %v780 = vunpack.c.l.b16 %v210
    %v781 = vunpack.c.h.b16 %v210
    %v782 = vunpack.c.l.b16 %v211
    %v783 = vunpack.c.h.b16 %v211
    %v784 = vunpack.c.l.b16 %v212
    %v785 = vunpack.c.h.b16 %v212
    %v786 = vunpack.c.l.b16 %v213
    %v787 = vunpack.c.h.b16 %v213
    %v788 = vunpack.c.l.b16 %v214
    %v789 = vunpack.c.h.b16 %v214
    %v790 = vunpack.c.l.b16 %v215
    %v791 = vunpack.c.h.b16 %v215
    %v792 = vunpack.c.l.b16 %v216
    %v793 = vunpack.c.h.b16 %v216
    %v794 = vunpack.c.l.b16 %v217
    %v795 = vunpack.c.h.b16 %v217
    %v796 = vunpack.c.l.b16 %v218
    %v797 = vunpack.c.h.b16 %v218
    %v798 = vunpack.c.l.b16 %v219
    %v799 = vunpack.c.h.b16 %v219
    %v800 = vunpack.c.l.b16 %v220
    %v801 = vunpack.c.h.b16 %v220
    %v802 = vunpack.c.l.b16 %v221
    %v803 = vunpack.c.h.b16 %v221
    %v804 = vunpack.c.l.b16 %v222
    %v805 = vunpack.c.h.b16 %v222
    %v806 = vunpack.c.l.b16 %v223
    %v807 = vunpack.c.h.b16 %v223
    %v808 = vunpack.c.l.b16 %v224
    %v809 = vunpack.c.h.b16 %v224
    %v810 = vunpack.c.l.b16 %v225
    %v811 = vunpack.c.h.b16 %v225
    %v812 = vunpack.c.l.b16 %v226
    %v813 = vunpack.c.h.b16 %v226
    %v814 = vunpack.c.l.b16 %v227
    %v815 = vunpack.c.h.b16 %v227
    %v816 = vunpack.c.l.b16 %v228
    %v817 = vunpack.c.h.b16 %v228
    %v818 = vunpack.c.l.b16 %v229
    %v819 = vunpack.c.h.b16 %v229
    %v820 = vunpack.c.l.b16 %v230
    %v821 = vunpack.c.h.b16 %v230
    %v822 = vunpack.c.l.b16 %v231
    %v823 = vunpack.c.h.b16 %v231
    %v824 = vunpack.c.l.b16 %v232
    %v825 = vunpack.c.h.b16 %v232
    %v826 = vunpack.c.l.b16 %v233
    %v827 = vunpack.c.h.b16 %v233
    %v828 = vunpack.c.l.b16 %v234
    %v829 = vunpack.c.h.b16 %v234
    %v830 = vunpack.c.l.b16 %v235
    %v831 = vunpack.c.h.b16 %v235
    %v832 = vunpack.c.l.b16 %v236
    %v833 = vunpack.c.h.b16 %v236
    %v834 = vunpack.c.l.b16 %v237
    %v835 = vunpack.c.h.b16 %v237
    %v836 = vunpack.c.l.b16 %v238
    %v837 = vunpack.c.h.b16 %v238
    %v838 = vunpack.c.l.b16 %v239
    %v839 = vunpack.c.h.b16 %v239
    %v840 = vunpack.c.l.b16 %v240
    %v841 = vunpack.c.h.b16 %v240
    %v842 = vunpack.c.l.b16 %v241
    %v843 = vunpack.c.h.b16 %v241
    %v844 = vunpack.c.l.b16 %v242
    %v845 = vunpack.c.h.b16 %v242
    %v846 = vunpack.c.l.b16 %v243
    %v847 = vunpack.c.h.b16 %v243
    %v848 = vunpack.c.l.b16 %v244
    %v849 = vunpack.c.h.b16 %v244
    %v850 = vunpack.c.l.b16 %v245
    %v851 = vunpack.c.h.b16 %v245
    %v852 = vunpack.c.l.b16 %v246
    %v853 = vunpack.c.h.b16 %v246
    %v854 = vunpack.c.l.b16 %v247
    %v855 = vunpack.c.h.b16 %v247
    %v856 = vunpack.c.l.b16 %v248
    %v857 = vunpack.c.h.b16 %v248
    %v858 = vunpack.c.l.b16 %v249
    %v859 = vunpack.c.h.b16 %v249
    %v860 = vunpack.c.l.b16 %v250
    %v861 = vunpack.c.h.b16 %v250
    %v862 = vunpack.c.l.b16 %v251
    %v863 = vunpack.c.h.b16 %v251
    %v864 = vunpack.c.l.b16 %v252
    %v865 = vunpack.c.h.b16 %v252
    %v866 = vunpack.c.l.b16 %v253
    %v867 = vunpack.c.h.b16 %v253
    %v868 = vunpack.c.l.b16 %v254
    %v869 = vunpack.c.h.b16 %v254
    %v870 = vunpack.c.l.b16 %v255
    %v871 = vunpack.c.h.b16 %v255
    %v872 = vunpack.c.l.b16 %v256
    %v873 = vunpack.c.h.b16 %v256
    %v874 = vunpack.c.l.b16 %v257
    %v875 = vunpack.c.h.b16 %v257
    %v876 = vunpack.c.l.b16 %v258
    %v877 = vunpack.c.h.b16 %v258
    %v878 = vunpack.c.l.b16 %v259
    %v879 = vunpack.c.h.b16 %v259
    %v880 = vunpack.c.l.b16 %v260
    %v881 = vunpack.c.h.b16 %v260
    %v882 = vunpack.c.l.b16 %v261
    %v883 = vunpack.c.h.b16 %v261
    %v884 = vunpack.c.l.b16 %v262
    %v885 = vunpack.c.h.b16 %v262
    %v886 = vunpack.c.l.b16 %v263
    %v887 = vunpack.c.h.b16 %v263
    %v888 = vunpack.c.l.b16 %v264
    %v889 = vunpack.c.h.b16 %v264
    %v890 = vunpack.c.l.b16 %v265
    %v891 = vunpack.c.h.b16 %v265
    %v892 = vunpack.c.l.b16 %v266
    %v893 = vunpack.c.h.b16 %v266
    %v894 = vunpack.c.l.b16 %v267
    %v895 = vunpack.c.h.b16 %v267
    %v896 = vunpack.c.l.b16 %v268
    %v897 = vunpack.c.h.b16 %v268
    %v898 = vunpack.c.l.b16 %v269
    %v899 = vunpack.c.h.b16 %v269
    %v900 = vunpack.c.l.b16 %v270
    %v901 = vunpack.c.h.b16 %v270
    %v902 = vunpack.c.l.b16 %v271
    %v903 = vunpack.c.h.b16 %v271
    %v904 = vunpack.c.l.b16 %v272
    %v905 = vunpack.c.h.b16 %v272
    %v906 = vunpack.c.l.b16 %v273
    %v907 = vunpack.c.h.b16 %v273
    %v908 = vunpack.c.l.b16 %v274
    %v909 = vunpack.c.h.b16 %v274
    %v910 = vunpack.c.l.b16 %v275
    %v911 = vunpack.c.h.b16 %v275
    %v912 = vunpack.c.l.b16 %v276
    %v913 = vunpack.c.h.b16 %v276
    %v914 = vunpack.c.l.b16 %v277
    %v915 = vunpack.c.h.b16 %v277
    %v916 = vunpack.c.l.b16 %v278
    %v917 = vunpack.c.h.b16 %v278
    %v918 = vunpack.c.l.b16 %v279
    %v919 = vunpack.c.h.b16 %v279
    %v920 = vunpack.c.l.b16 %v280
    %v921 = vunpack.c.h.b16 %v280
    %v922 = vunpack.c.l.b16 %v281
    %v923 = vunpack.c.h.b16 %v281
    %v924 = vunpack.c.l.b16 %v282
    %v925 = vunpack.c.h.b16 %v282
    %v926 = vunpack.c.l.b16 %v283
    %v927 = vunpack.c.h.b16 %v283
    %v928 = vunpack.c.l.b16 %v284
    %v929 = vunpack.c.h.b16 %v284
    %v930 = vunpack.c.l.b16 %v285
    %v931 = vunpack.c.h.b16 %v285
    %v932 = vunpack.c.l.b16 %v286
    %v933 = vunpack.c.h.b16 %v286
    %v934 = vunpack.c.l.b16 %v287
    %v935 = vunpack.c.h.b16 %v287
    %v936 = vunpack.c.l.b16 %v288
    %v937 = vunpack.c.h.b16 %v288
    %v938 = vunpack.c.l.b16 %v289
    %v939 = vunpack.c.h.b16 %v289
    %v940 = vunpack.c.l.b16 %v290
    %v941 = vunpack.c.h.b16 %v290
    %v942 = vunpack.c.l.b16 %v291
    %v943 = vunpack.c.h.b16 %v291
    %v944 = vunpack.c.l.b16 %v292
    %v945 = vunpack.c.h.b16 %v292
    %v946 = vunpack.c.l.b16 %v293
    %v947 = vunpack.c.h.b16 %v293
    %v948 = vunpack.c.l.b16 %v294
    %v949 = vunpack.c.h.b16 %v294
    %v950 = vunpack.c.l.b16 %v295
    %v951 = vunpack.c.h.b16 %v295
    %v952 = vunpack.c.l.b16 %v296
    %v953 = vunpack.c.h.b16 %v296
    %v954 = vunpack.c.l.b16 %v297
    %v955 = vunpack.c.h.b16 %v297
    %v956 = vunpack.c.l.b16 %v298
    %v957 = vunpack.c.h.b16 %v298
    %v958 = vunpack.c.l.b16 %v299
    %v959 = vunpack.c.h.b16 %v299
    %v960 = vunpack.c.l.b16 %v300
    %v961 = vunpack.c.h.b16 %v300
    %v962 = vunpack.c.l.b16 %v301
    %v963 = vunpack.c.h.b16 %v301
    %v964 = vunpack.c.l.b16 %v302
    %v965 = vunpack.c.h.b16 %v302
    %v966 = vunpack.c.l.b16 %v303
    %v967 = vunpack.c.h.b16 %v303
    %v968 = vunpack.c.l.b16 %v304
    %v969 = vunpack.c.h.b16 %v304
    %v970 = vunpack.c.l.b16 %v305
    %v971 = vunpack.c.h.b16 %v305
    %v972 = vunpack.c.l.b16 %v306
    %v973 = vunpack.c.h.b16 %v306
    %v974 = vunpack.c.l.b16 %v307
    %v975 = vunpack.c.h.b16 %v307
    %v976 = vunpack.c.l.b16 %v308
    %v977 = vunpack.c.h.b16 %v308
    %v978 = vunpack.c.l.b16 %v309
    %v979 = vunpack.c.h.b16 %v309
    %v980 = vunpack.c.l.b16 %v310
    %v981 = vunpack.c.h.b16 %v310
    %v982 = vunpack.c.l.b16 %v311
    %v983 = vunpack.c.h.b16 %v311
    %v984 = vunpack.c.l.b16 %v312
    %v985 = vunpack.c.h.b16 %v312
    %v986 = vunpack.c.l.b16 %v313
    %v987 = vunpack.c.h.b16 %v313
    %v988 = vunpack.c.l.b16 %v314
    %v989 = vunpack.c.h.b16 %v314
    %v990 = vunpack.c.l.b16 %v315
    %v991 = vunpack.c.h.b16 %v315
    %v992 = vunpack.c.l.b16 %v316
    %v993 = vunpack.c.h.b16 %v316
    %v994 = vunpack.c.l.b16 %v317
    %v995 = vunpack.c.h.b16 %v317
    %v996 = vunpack.c.l.b16 %v318
    %v997 = vunpack.c.h.b16 %v318
    %v998 = vunpack.c.l.b16 %v319
    %v999 = vunpack.c.h.b16 %v319
    %v1000 = vunpack.c.l.b16 %v320
    %v1001 = vunpack.c.h.b16 %v320
    %v1002 = vunpack.c.l.b16 %v321
    %v1003 = vunpack.c.h.b16 %v321
    %v1004 = vunpack.c.l.b16 %v322
    %v1005 = vunpack.c.h.b16 %v322
    %v1006 = vunpack.c.l.b16 %v323
    %v1007 = vunpack.c.h.b16 %v323
    %v1008 = vunpack.c.l.b16 %v324
    %v1009 = vunpack.c.h.b16 %v324
    %v1010 = vunpack.c.l.b16 %v325
    %v1011 = vunpack.c.h.b16 %v325
    %v1012 = vunpack.c.l.b16 %v326
    %v1013 = vunpack.c.h.b16 %v326
    %v1014 = vunpack.c.l.b16 %v327
    %v1015 = vunpack.c.h.b16 %v327
    %v1016 = vunpack.c.l.b16 %v328
    %v1017 = vunpack.c.h.b16 %v328
    %v1018 = vunpack.c.l.b16 %v329
    %v1019 = vunpack.c.h.b16 %v329
    %v1020 = vunpack.c.l.b16 %v330
    %v1021 = vunpack.c.h.b16 %v330
    %v1022 = vunpack.c.l.b16 %v331
    %v1023 = vunpack.c.h.b16 %v331
    %v1024 = vunpack.c.l.b16 %v332
    %v1025 = vunpack.c.h.b16 %v332
    %v1026 = vunpack.c.l.b16 %v333
    %v1027 = vunpack.c.h.b16 %v333
    %v1028 = vunpack.c.l.b16 %v334
    %v1029 = vunpack.c.h.b16 %v334
    %v1030 = vunpack.c.l.b16 %v335
    %v1031 = vunpack.c.h.b16 %v335
    %v1032 = vunpack.c.l.b16 %v336
    %v1033 = vunpack.c.h.b16 %v336
    %v1034 = vunpack.c.l.b16 %v337
    %v1035 = vunpack.c.h.b16 %v337
    %v1036 = vunpack.c.l.b16 %v338
    %v1037 = vunpack.c.h.b16 %v338
    %v1038 = vunpack.c.l.b16 %v339
    %v1039 = vunpack.c.h.b16 %v339
    %v1040 = vunpack.c.l.b16 %v340
    %v1041 = vunpack.c.h.b16 %v340
    %v1042 = vunpack.c.l.b16 %v341
    %v1043 = vunpack.c.h.b16 %v341
    %v1044 = vunpack.c.l.b16 %v342
    %v1045 = vunpack.c.h.b16 %v342
    %v1046 = vunpack.c.l.b16 %v343
    %v1047 = vunpack.c.h.b16 %v343
    %v1048 = vunpack.c.l.b16 %v344
    %v1049 = vunpack.c.h.b16 %v344
    %v1050 = vunpack.c.l.b16 %v345
    %v1051 = vunpack.c.h.b16 %v345
    %v1052 = vunpack.c.l.b16 %v346
    %v1053 = vunpack.c.h.b16 %v346
    %v1054 = vunpack.c.l.b16 %v347
    %v1055 = vunpack.c.h.b16 %v347
    %v1056 = vunpack.c.l.b16 %v348
    %v1057 = vunpack.c.h.b16 %v348
    %v1058 = vunpack.c.l.b16 %v349
    %v1059 = vunpack.c.h.b16 %v349
    %v1060 = vunpack.c.l.b16 %v350
    %v1061 = vunpack.c.h.b16 %v350
    %v1062 = vunpack.c.l.b16 %v351
    %v1063 = vunpack.c.h.b16 %v351
    %v1064 = vunpack.c.l.b16 %v352
    %v1065 = vunpack.c.h.b16 %v352
    %v1066 = vunpack.c.l.b16 %v353
    %v1067 = vunpack.c.h.b16 %v353
    %v1068 = vunpack.c.l.b16 %v354
    %v1069 = vunpack.c.h.b16 %v354
    %v1070 = vunpack.c.l.b16 %v355
    %v1071 = vunpack.c.h.b16 %v355
    %v1072 = vunpack.c.l.b16 %v356
    %v1073 = vunpack.c.h.b16 %v356
    %v1074 = vunpack.c.l.b16 %v357
    %v1075 = vunpack.c.h.b16 %v357
    %v1076 = vunpack.c.l.b16 %v358
    %v1077 = vunpack.c.h.b16 %v358
    %v1078 = vpack.c.b16 %v634, %v630
    %v1079 = vpack.c.b16 %v635, %v631
    %v1080 = vpack.c.b16 %v636, %v632
    %v1081 = vpack.c.b16 %v637, %v633
    %v1082 = vpack.c.b16 %v642, %v638
    %v1083 = vpack.c.b16 %v643, %v639
    %v1084 = vpack.c.b16 %v644, %v640
    %v1085 = vpack.c.b16 %v645, %v641
    %v1086 = vpack.c.b16 %v650, %v646
    %v1087 = vpack.c.b16 %v651, %v647
    %v1088 = vpack.c.b16 %v652, %v648
    %v1089 = vpack.c.b16 %v653, %v649
    %v1090 = vpack.c.b16 %v658, %v654
    %v1091 = vpack.c.b16 %v659, %v655
    %v1092 = vpack.c.b16 %v660, %v656
    %v1093 = vpack.c.b16 %v661, %v657
    %v1094 = vpack.c.b16 %v666, %v662
    %v1095 = vpack.c.b16 %v667, %v663
    %v1096 = vpack.c.b16 %v668, %v664
    %v1097 = vpack.c.b16 %v669, %v665
    %v1098 = vpack.c.b16 %v674, %v670
    %v1099 = vpack.c.b16 %v675, %v671
    %v1100 = vpack.c.b16 %v676, %v672
    %v1101 = vpack.c.b16 %v677, %v673
    %v1102 = vpack.c.b16 %v682, %v678
    %v1103 = vpack.c.b16 %v683, %v679
    %v1104 = vpack.c.b16 %v684, %v680
    %v1105 = vpack.c.b16 %v685, %v681
    %v1106 = vpack.c.b16 %v690, %v686
    %v1107 = vpack.c.b16 %v691, %v687
    %v1108 = vpack.c.b16 %v692, %v688
    %v1109 = vpack.c.b16 %v693, %v689
    %v1110 = vpack.c.b16 %v698, %v694
    %v1111 = vpack.c.b16 %v699, %v695
    %v1112 = vpack.c.b16 %v700, %v696
    %v1113 = vpack.c.b16 %v701, %v697
    %v1114 = vpack.c.b16 %v706, %v702
    %v1115 = vpack.c.b16 %v707, %v703
    %v1116 = vpack.c.b16 %v708, %v704
    %v1117 = vpack.c.b16 %v709, %v705
    %v1118 = vpack.c.b16 %v714, %v710
    %v1119 = vpack.c.b16 %v715, %v711
    %v1120 = vpack.c.b16 %v716, %v712
    %v1121 = vpack.c.b16 %v717, %v713
    %v1122 = vpack.c.b16 %v722, %v718
    %v1123 = vpack.c.b16 %v723, %v719
    %v1124 = vpack.c.b16 %v724, %v720
    %v1125 = vpack.c.b16 %v725, %v721
    %v1126 = vpack.c.b16 %v730, %v726
    %v1127 = vpack.c.b16 %v731, %v727
    %v1128 = vpack.c.b16 %v732, %v728
    %v1129 = vpack.c.b16 %v733, %v729
    %v1130 = vpack.c.b16 %v738, %v734
    %v1131 = vpack.c.b16 %v739, %v735
    %v1132 = vpack.c.b16 %v740, %v736
    %v1133 = vpack.c.b16 %v741, %v737
    %v1134 = vpack.c.b16 %v746, %v742
    %v1135 = vpack.c.b16 %v747, %v743
    %v1136 = vpack.c.b16 %v748, %v744
    %v1137 = vpack.c.b16 %v749, %v745
    %v1138 = vpack.c.b16 %v754, %v750
    %v1139 = vpack.c.b16 %v755, %v751
    %v1140 = vpack.c.b16 %v756, %v752
    %v1141 = vpack.c.b16 %v757, %v753
    %v1142 = vpack.c.b16 %v762, %v758
    %v1143 = vpack.c.b16 %v763, %v759
    %v1144 = vpack.c.b16 %v764, %v760
    %v1145 = vpack.c.b16 %v765, %v761
    %v1146 = vpack.c.b16 %v770, %v766
    %v1147 = vpack.c.b16 %v771, %v767
    %v1148 = vpack.c.b16 %v772, %v768
    %v1149 = vpack.c.b16 %v773, %v769
    %v1150 = vpack.c.b16 %v778, %v774
    %v1151 = vpack.c.b16 %v779, %v775
    %v1152 = vpack.c.b16 %v780, %v776
    %v1153 = vpack.c.b16 %v781, %v777
    %v1154 = vpack.c.b16 %v786, %v782
    %v1155 = vpack.c.b16 %v787, %v783
    %v1156 = vpack.c.b16 %v788, %v784
    %v1157 = vpack.c.b16 %v789, %v785
    %v1158 = vpack.c.b16 %v794, %v790
    %v1159 = vpack.c.b16 %v795, %v791
    %v1160 = vpack.c.b16 %v796, %v792
    %v1161 = vpack.c.b16 %v797, %v793
    %v1162 = vpack.c.b16 %v802, %v798
    %v1163 = vpack.c.b16 %v803, %v799
    %v1164 = vpack.c.b16 %v804, %v800
    %v1165 = vpack.c.b16 %v805, %v801
    %v1166 = vpack.c.b16 %v810, %v806
    %v1167 = vpack.c.b16 %v811, %v807
    %v1168 = vpack.c.b16 %v812, %v808
    %v1169 = vpack.c.b16 %v813, %v809
    %v1170 = vpack.c.b16 %v818, %v814
    %v1171 = vpack.c.b16 %v819, %v815
    %v1172 = vpack.c.b16 %v820, %v816
    %v1173 = vpack.c.b16 %v821, %v817
    %v1174 = vpack.c.b16 %v826, %v822
    %v1175 = vpack.c.b16 %v827, %v823
    %v1176 = vpack.c.b16 %v828, %v824
    %v1177 = vpack.c.b16 %v829, %v825
    %v1178 = vpack.c.b16 %v834, %v830
    %v1179 = vpack.c.b16 %v835, %v831
    %v1180 = vpack.c.b16 %v836, %v832
    %v1181 = vpack.c.b16 %v837, %v833
    %v1182 = vpack.c.b16 %v842, %v838
    %v1183 = vpack.c.b16 %v843, %v839
    %v1184 = vpack.c.b16 %v844, %v840
    %v1185 = vpack.c.b16 %v845, %v841
    %v1186 = vpack.c.b16 %v850, %v846
    %v1187 = vpack.c.b16 %v851, %v847
    %v1188 = vpack.c.b16 %v852, %v848
    %v1189 = vpack.c.b16 %v853, %v849
    %v1190 = vpack.c.b16 %v858, %v854
    %v1191 = vpack.c.b16 %v859, %v855
    %v1192 = vpack.c.b16 %v860, %v856
    %v1193 = vpack.c.b16 %v861, %v857
    %v1194 = vpack.c.b16 %v866, %v862
    %v1195 = vpack.c.b16 %v867, %v863
    %v1196 = vpack.c.b16 %v868, %v864
    %v1197 = vpack.c.b16 %v869, %v865
    %v1198 = vpack.c.b16 %v874, %v870
    %v1199 = vpack.c.b16 %v875, %v871
    %v1200 = vpack.c.b16 %v876, %v872
    %v1201 = vpack.c.b16 %v877, %v873
    %v1202 = vpack.c.b16 %v882, %v878
    %v1203 = vpack.c.b16 %v883, %v879
    %v1204 = vpack.c.b16 %v884, %v880
    %v1205 = vpack.c.b16 %v885, %v881
    %v1206 = vpack.c.b16 %v890, %v886
    %v1207 = vpack.c.b16 %v891, %v887
    %v1208 = vpack.c.b16 %v892, %v888
    %v1209 = vpack.c.b16 %v893, %v889
    %v1210 = vpack.c.b16 %v898, %v894
    %v1211 = vpack.c.b16 %v899, %v895
    %v1212 = vpack.c.b16 %v900, %v896
    %v1213 = vpack.c.b16 %v901, %v897
    %v1214 = vpack.c.b16 %v906, %v902
    %v1215 = vpack.c.b16 %v907, %v903
    %v1216 = vpack.c.b16 %v908, %v904
    %v1217 = vpack.c.b16 %v909, %v905
    %v1218 = vpack.c.b16 %v914, %v910
    %v1219 = vpack.c.b16 %v915, %v911
    %v1220 = vpack.c.b16 %v916, %v912
    %v1221 = vpack.c.b16 %v917, %v913
    %v1222 = vpack.c.b16 %v922, %v918
    %v1223 = vpack.c.b16 %v923, %v919
    %v1224 = vpack.c.b16 %v924, %v920
    %v1225 = vpack.c.b16 %v925, %v921
    %v1226 = vpack.c.b16 %v930, %v926
    %v1227 = vpack.c.b16 %v931, %v927
    %v1228 = vpack.c.b16 %v932, %v928
    %v1229 = vpack.c.b16 %v933, %v929
    %v1230 = vpack.c.b16 %v938, %v934
    %v1231 = vpack.c.b16 %v939, %v935
    %v1232 = vpack.c.b16 %v940, %v936
    %v1233 = vpack.c.b16 %v941, %v937
    %v1234 = vpack.c.b16 %v946, %v942
    %v1235 = vpack.c.b16 %v947, %v943
    %v1236 = vpack.c.b16 %v948, %v944
    %v1237 = vpack.c.b16 %v949, %v945
    %v1238 = vpack.c.b16 %v954, %v950
    %v1239 = vpack.c.b16 %v955, %v951
    %v1240 = vpack.c.b16 %v956, %v952
    %v1241 = vpack.c.b16 %v957, %v953
    %v1242 = vpack.c.b16 %v962, %v958
    %v1243 = vpack.c.b16 %v963, %v959
    %v1244 = vpack.c.b16 %v964, %v960
    %v1245 = vpack.c.b16 %v965, %v961
    %v1246 = vpack.c.b16 %v970, %v966
    %v1247 = vpack.c.b16 %v971, %v967
    %v1248 = vpack.c.b16 %v972, %v968
    %v1249 = vpack.c.b16 %v973, %v969
    %v1250 = vpack.c.b16 %v978, %v974
    %v1251 = vpack.c.b16 %v979, %v975
    %v1252 = vpack.c.b16 %v980, %v976
    %v1253 = vpack.c.b16 %v981, %v977
    %v1254 = vpack.c.b16 %v986, %v982
    %v1255 = vpack.c.b16 %v987, %v983
    %v1256 = vpack.c.b16 %v988, %v984
    %v1257 = vpack.c.b16 %v989, %v985
    %v1258 = vpack.c.b16 %v994, %v990
    %v1259 = vpack.c.b16 %v995, %v991
    %v1260 = vpack.c.b16 %v996, %v992
    %v1261 = vpack.c.b16 %v997, %v993
    %v1262 = vpack.c.b16 %v1002, %v998
    %v1263 = vpack.c.b16 %v1003, %v999
    %v1264 = vpack.c.b16 %v1004, %v1000
    %v1265 = vpack.c.b16 %v1005, %v1001
    %v1266 = vpack.c.b16 %v1010, %v1006
    %v1267 = vpack.c.b16 %v1011, %v1007
    %v1268 = vpack.c.b16 %v1012, %v1008
    %v1269 = vpack.c.b16 %v1013, %v1009
    %v1270 = vpack.c.b16 %v1018, %v1014
    %v1271 = vpack.c.b16 %v1019, %v1015
    %v1272 = vpack.c.b16 %v1020, %v1016
    %v1273 = vpack.c.b16 %v1021, %v1017
    %v1274 = vpack.c.b16 %v1026, %v1022
    %v1275 = vpack.c.b16 %v1027, %v1023
    %v1276 = vpack.c.b16 %v1028, %v1024
    %v1277 = vpack.c.b16 %v1029, %v1025
    %v1278 = vpack.c.b16 %v1034, %v1030
    %v1279 = vpack.c.b16 %v1035, %v1031
    %v1280 = vpack.c.b16 %v1036, %v1032
    %v1281 = vpack.c.b16 %v1037, %v1033
    %v1282 = vpack.c.b16 %v1042, %v1038
    %v1283 = vpack.c.b16 %v1043, %v1039
    %v1284 = vpack.c.b16 %v1044, %v1040
    %v1285 = vpack.c.b16 %v1045, %v1041
    %v1286 = vpack.c.b16 %v1050, %v1046
    %v1287 = vpack.c.b16 %v1051, %v1047
    %v1288 = vpack.c.b16 %v1052, %v1048
    %v1289 = vpack.c.b16 %v1053, %v1049
    %v1290 = vpack.c.b16 %v1058, %v1054
    %v1291 = vpack.c.b16 %v1059, %v1055
    %v1292 = vpack.c.b16 %v1060, %v1056
    %v1293 = vpack.c.b16 %v1061, %v1057
    %v1294 = vpack.c.b16 %v1066, %v1062
    %v1295 = vpack.c.b16 %v1067, %v1063
    %v1296 = vpack.c.b16 %v1068, %v1064
    %v1297 = vpack.c.b16 %v1069, %v1065
    %v1298 = vpack.c.b16 %v1074, %v1070
    %v1299 = vpack.c.b16 %v1075, %v1071
    %v1300 = vpack.c.b16 %v1076, %v1072
    %v1301 = vpack.c.b16 %v1077, %v1073
    %1526 = vmatprep.subr.bf16.mxu0 %v1107
    %1527 = vmatpush1.bf16.msra.mxu0 %v1106
    %1528 = vmatprep.subr.bf16.mxu0 %v1103
    %1529 = vmatpush1.bf16.msra.mxu0 %v1102
    %1530 = vmatprep.subr.bf16.mxu0 %v1099
    %1531 = vmatpush1.bf16.msra.mxu0 %v1098
    %1532 = vmatprep.subr.bf16.mxu0 %v1095
    %1533 = vmatpush1.bf16.msra.mxu0 %v1094
    %1534 = vmatprep.subr.bf16.mxu0 %v1091
    %1535 = vmatpush1.bf16.msra.mxu0 %v1090
    %1536 = vmatprep.subr.bf16.mxu0 %v1087
    %1537 = vmatpush1.bf16.msra.mxu0 %v1086
    %1538 = vmatprep.subr.bf16.mxu0 %v1083
    %1539 = vmatpush1.bf16.msra.mxu0 %v1082
    %1540 = vmatprep.subr.bf16.mxu0 %v1079
    %1541 = vmatpush1.bf16.msra.mxu0 %v1078
    %1542 = vmatprep.subr.bf16.mxu0 %v1139
    %1543 = vmatpush2.bf16.msra.mxu0 %v1138
    %1544 = vmatprep.subr.bf16.mxu0 %v1135
    %1545 = vmatpush2.bf16.msra.mxu0 %v1134
    %1546 = vmatprep.subr.bf16.mxu0 %v1131
    %1547 = vmatpush2.bf16.msra.mxu0 %v1130
    %1548 = vmatprep.subr.bf16.mxu0 %v1127
    %1549 = vmatpush2.bf16.msra.mxu0 %v1126
    %1550 = vmatprep.subr.bf16.mxu0 %v1123
    %1551 = vmatpush2.bf16.msra.mxu0 %v1122
    %1552 = vmatprep.subr.bf16.mxu0 %v1119
    %1553 = vmatpush2.bf16.msra.mxu0 %v1118
    %1554 = vmatprep.subr.bf16.mxu0 %v1115
    %1555 = vmatpush2.bf16.msra.mxu0 %v1114
    %1556 = vmatprep.subr.bf16.mxu0 %v1111
    %1557 = vmatpush2.bf16.msra.mxu0 %v1110
    %1558 = vmatprep.mubr.bf16.mxu0 %v393
    %1559 = vmatmul.mubr.bf16.gmra.mxu0 %v392
    %v1560 = vpop.f32.mrf.mxu0
    %v1561 = vadd.f32 %v364, %v1560
    %v1562 = vpop.f32.mrf.mxu0
    %v1563 = vadd.f32 %v368, %v1562
    %v1564 = vpop.f32.mrf.mxu0
    %v1565 = vpop.f32.mrf.mxu0
    %1566 = vdwg.mxu0
    %1567 = vmatprep.subr.bf16.mxu0 %v1171
    %1568 = vmatpush1.bf16.msra.mxu0 %v1170
    %1569 = vmatprep.subr.bf16.mxu0 %v1167
    %1570 = vmatpush1.bf16.msra.mxu0 %v1166
    %1571 = vmatprep.subr.bf16.mxu0 %v1163
    %1572 = vmatpush1.bf16.msra.mxu0 %v1162
    %1573 = vmatprep.subr.bf16.mxu0 %v1159
    %1574 = vmatpush1.bf16.msra.mxu0 %v1158
    %1575 = vmatprep.subr.bf16.mxu0 %v1155
    %1576 = vmatpush1.bf16.msra.mxu0 %v1154
    %1577 = vmatprep.subr.bf16.mxu0 %v1151
    %1578 = vmatpush1.bf16.msra.mxu0 %v1150
    %1579 = vmatprep.subr.bf16.mxu0 %v1147
    %1580 = vmatpush1.bf16.msra.mxu0 %v1146
    %1581 = vmatprep.subr.bf16.mxu0 %v1143
    %1582 = vmatpush1.bf16.msra.mxu0 %v1142
    %1583 = vmatprep.subr.bf16.mxu0 %v1203
    %1584 = vmatpush2.bf16.msra.mxu0 %v1202
    %1585 = vmatprep.subr.bf16.mxu0 %v1199
    %1586 = vmatpush2.bf16.msra.mxu0 %v1198
    %1587 = vmatprep.subr.bf16.mxu0 %v1195
    %1588 = vmatpush2.bf16.msra.mxu0 %v1194
    %1589 = vmatprep.subr.bf16.mxu0 %v1191
    %1590 = vmatpush2.bf16.msra.mxu0 %v1190
    %1591 = vmatprep.subr.bf16.mxu0 %v1187
    %1592 = vmatpush2.bf16.msra.mxu0 %v1186
    %1593 = vmatprep.subr.bf16.mxu0 %v1183
    %1594 = vmatpush2.bf16.msra.mxu0 %v1182
    %1595 = vmatprep.subr.bf16.mxu0 %v1179
    %1596 = vmatpush2.bf16.msra.mxu0 %v1178
    %1597 = vmatprep.subr.bf16.mxu0 %v1175
    %1598 = vmatpush2.bf16.msra.mxu0 %v1174
    %1599 = vmatprep.mubr.bf16.mxu0 %v395
    %1600 = vmatmul.mubr.bf16.gmra.mxu0 %v394
    %v1601 = vpop.f32.mrf.mxu0
    %v1602 = vadd.f32 %v1561, %v1601
    %v1603 = vpop.f32.mrf.mxu0
    %v1604 = vadd.f32 %v1563, %v1603
    %v1605 = vpop.f32.mrf.mxu0
    %v1606 = vpop.f32.mrf.mxu0
    %1607 = vdwg.mxu0
    %1608 = vmatprep.subr.bf16.mxu0 %v1235
    %1609 = vmatpush1.bf16.msra.mxu0 %v1234
    %1610 = vmatprep.subr.bf16.mxu0 %v1231
    %1611 = vmatpush1.bf16.msra.mxu0 %v1230
    %1612 = vmatprep.subr.bf16.mxu0 %v1227
    %1613 = vmatpush1.bf16.msra.mxu0 %v1226
    %1614 = vmatprep.subr.bf16.mxu0 %v1223
    %1615 = vmatpush1.bf16.msra.mxu0 %v1222
    %1616 = vmatprep.subr.bf16.mxu0 %v1219
    %1617 = vmatpush1.bf16.msra.mxu0 %v1218
    %1618 = vmatprep.subr.bf16.mxu0 %v1215
    %1619 = vmatpush1.bf16.msra.mxu0 %v1214
    %1620 = vmatprep.subr.bf16.mxu0 %v1211
    %1621 = vmatpush1.bf16.msra.mxu0 %v1210
    %1622 = vmatprep.subr.bf16.mxu0 %v1207
    %1623 = vmatpush1.bf16.msra.mxu0 %v1206
    %1624 = vmatprep.subr.bf16.mxu0 %v1267
    %1625 = vmatpush2.bf16.msra.mxu0 %v1266
    %1626 = vmatprep.subr.bf16.mxu0 %v1263
    %1627 = vmatpush2.bf16.msra.mxu0 %v1262
    %1628 = vmatprep.subr.bf16.mxu0 %v1259
    %1629 = vmatpush2.bf16.msra.mxu0 %v1258
    %1630 = vmatprep.subr.bf16.mxu0 %v1255
    %1631 = vmatpush2.bf16.msra.mxu0 %v1254
    %1632 = vmatprep.subr.bf16.mxu0 %v1251
    %1633 = vmatpush2.bf16.msra.mxu0 %v1250
    %1634 = vmatprep.subr.bf16.mxu0 %v1247
    %1635 = vmatpush2.bf16.msra.mxu0 %v1246
    %1636 = vmatprep.subr.bf16.mxu0 %v1243
    %1637 = vmatpush2.bf16.msra.mxu0 %v1242
    %1638 = vmatprep.subr.bf16.mxu0 %v1239
    %1639 = vmatpush2.bf16.msra.mxu0 %v1238
    %1640 = vmatprep.mubr.bf16.mxu0 %v397
    %1641 = vmatmul.mubr.bf16.gmra.mxu0 %v396
    %v1642 = vpop.f32.mrf.mxu0
    %v1643 = vadd.f32 %v1602, %v1642
    %v1644 = vpop.f32.mrf.mxu0
    %v1645 = vadd.f32 %v1604, %v1644
    %v1646 = vpop.f32.mrf.mxu0
    %v1647 = vpop.f32.mrf.mxu0
    %1648 = vdwg.mxu0
    %1649 = vmatprep.subr.bf16.mxu0 %v1299
    %1650 = vmatpush1.bf16.msra.mxu0 %v1298
    %1651 = vmatprep.subr.bf16.mxu0 %v1295
    %1652 = vmatpush1.bf16.msra.mxu0 %v1294
    %1653 = vmatprep.subr.bf16.mxu0 %v1291
    %1654 = vmatpush1.bf16.msra.mxu0 %v1290
    %1655 = vmatprep.subr.bf16.mxu0 %v1287
    %1656 = vmatpush1.bf16.msra.mxu0 %v1286
    %1657 = vmatprep.subr.bf16.mxu0 %v1283
    %1658 = vmatpush1.bf16.msra.mxu0 %v1282
    %1659 = vmatprep.subr.bf16.mxu0 %v1279
    %1660 = vmatpush1.bf16.msra.mxu0 %v1278
    %1661 = vmatprep.subr.bf16.mxu0 %v1275
    %1662 = vmatpush1.bf16.msra.mxu0 %v1274
    %1663 = vmatprep.subr.bf16.mxu0 %v1271
    %1664 = vmatpush1.bf16.msra.mxu0 %v1270
    %1665 = vmatprep.subr.bf16.mxu0 0
    %1666 = vmatpush2.bf16.msra.mxu0 0
    %1667 = vmatprep.subr.bf16.mxu0 0
    %1668 = vmatpush2.bf16.msra.mxu0 0
    %1669 = vmatprep.subr.bf16.mxu0 0
    %1670 = vmatpush2.bf16.msra.mxu0 0
    %1671 = vmatprep.subr.bf16.mxu0 0
    %1672 = vmatpush2.bf16.msra.mxu0 0
    %1673 = vmatprep.subr.bf16.mxu0 0
    %1674 = vmatpush2.bf16.msra.mxu0 0
    %1675 = vmatprep.subr.bf16.mxu0 0
    %1676 = vmatpush2.bf16.msra.mxu0 0
    %1677 = vmatprep.subr.bf16.mxu0 0
    %1678 = vmatpush2.bf16.msra.mxu0 0
    %1679 = vmatprep.subr.bf16.mxu0 0
    %1680 = vmatpush2.bf16.msra.mxu0 0
    %1681 = vmatprep.mubr.bf16.mxu0 0
    %1682 = vmatmul.mubr.bf16.gmra.mxu0 %v398
    %v1683 = vpop.f32.mrf.mxu0
    %v1684 = vadd.f32 %v1643, %v1683
    %v1685 = vpop.f32.mrf.mxu0
    %v1686 = vadd.f32 %v1645, %v1685
    %v1687 = vpop.f32.mrf.mxu0
    %v1688 = vpop.f32.mrf.mxu0
    %1689 = vdwg.mxu0
    %1690 = vmatprep.subr.bf16.mxu0 %v1109
    %1691 = vmatpush1.bf16.msra.mxu0 %v1108
    %1692 = vmatprep.subr.bf16.mxu0 %v1105
    %1693 = vmatpush1.bf16.msra.mxu0 %v1104
    %1694 = vmatprep.subr.bf16.mxu0 %v1101
    %1695 = vmatpush1.bf16.msra.mxu0 %v1100
    %1696 = vmatprep.subr.bf16.mxu0 %v1097
    %1697 = vmatpush1.bf16.msra.mxu0 %v1096
    %1698 = vmatprep.subr.bf16.mxu0 %v1093
    %1699 = vmatpush1.bf16.msra.mxu0 %v1092
    %1700 = vmatprep.subr.bf16.mxu0 %v1089
    %1701 = vmatpush1.bf16.msra.mxu0 %v1088
    %1702 = vmatprep.subr.bf16.mxu0 %v1085
    %1703 = vmatpush1.bf16.msra.mxu0 %v1084
    %1704 = vmatprep.subr.bf16.mxu0 %v1081
    %1705 = vmatpush1.bf16.msra.mxu0 %v1080
    %1706 = vmatprep.subr.bf16.mxu0 %v1141
    %1707 = vmatpush2.bf16.msra.mxu0 %v1140
    %1708 = vmatprep.subr.bf16.mxu0 %v1137
    %1709 = vmatpush2.bf16.msra.mxu0 %v1136
    %1710 = vmatprep.subr.bf16.mxu0 %v1133
    %1711 = vmatpush2.bf16.msra.mxu0 %v1132
    %1712 = vmatprep.subr.bf16.mxu0 %v1129
    %1713 = vmatpush2.bf16.msra.mxu0 %v1128
    %1714 = vmatprep.subr.bf16.mxu0 %v1125
    %1715 = vmatpush2.bf16.msra.mxu0 %v1124
    %1716 = vmatprep.subr.bf16.mxu0 %v1121
    %1717 = vmatpush2.bf16.msra.mxu0 %v1120
    %1718 = vmatprep.subr.bf16.mxu0 %v1117
    %1719 = vmatpush2.bf16.msra.mxu0 %v1116
    %1720 = vmatprep.subr.bf16.mxu0 %v1113
    %1721 = vmatpush2.bf16.msra.mxu0 %v1112
    %1722 = vmatprep.mubr.bf16.mxu0 %v393
    %1723 = vmatmul.mubr.bf16.gmra.mxu0 %v392
    %v1724 = vpop.f32.mrf.mxu0
    %v1725 = vadd.f32 %v372, %v1724
    %v1726 = vpop.f32.mrf.mxu0
    %v1727 = vadd.f32 %v376, %v1726
    %v1728 = vpop.f32.mrf.mxu0
    %v1729 = vpop.f32.mrf.mxu0
    %1730 = vdwg.mxu0
    %1731 = vmatprep.subr.bf16.mxu0 %v1173
    %1732 = vmatpush1.bf16.msra.mxu0 %v1172
    %1733 = vmatprep.subr.bf16.mxu0 %v1169
    %1734 = vmatpush1.bf16.msra.mxu0 %v1168
    %1735 = vmatprep.subr.bf16.mxu0 %v1165
    %1736 = vmatpush1.bf16.msra.mxu0 %v1164
    %1737 = vmatprep.subr.bf16.mxu0 %v1161
    %1738 = vmatpush1.bf16.msra.mxu0 %v1160
    %1739 = vmatprep.subr.bf16.mxu0 %v1157
    %1740 = vmatpush1.bf16.msra.mxu0 %v1156
    %1741 = vmatprep.subr.bf16.mxu0 %v1153
    %1742 = vmatpush1.bf16.msra.mxu0 %v1152
    %1743 = vmatprep.subr.bf16.mxu0 %v1149
    %1744 = vmatpush1.bf16.msra.mxu0 %v1148
    %1745 = vmatprep.subr.bf16.mxu0 %v1145
    %1746 = vmatpush1.bf16.msra.mxu0 %v1144
    %1747 = vmatprep.subr.bf16.mxu0 %v1205
    %1748 = vmatpush2.bf16.msra.mxu0 %v1204
    %1749 = vmatprep.subr.bf16.mxu0 %v1201
    %1750 = vmatpush2.bf16.msra.mxu0 %v1200
    %1751 = vmatprep.subr.bf16.mxu0 %v1197
    %1752 = vmatpush2.bf16.msra.mxu0 %v1196
    %1753 = vmatprep.subr.bf16.mxu0 %v1193
    %1754 = vmatpush2.bf16.msra.mxu0 %v1192
    %1755 = vmatprep.subr.bf16.mxu0 %v1189
    %1756 = vmatpush2.bf16.msra.mxu0 %v1188
    %1757 = vmatprep.subr.bf16.mxu0 %v1185
    %1758 = vmatpush2.bf16.msra.mxu0 %v1184
    %1759 = vmatprep.subr.bf16.mxu0 %v1181
    %1760 = vmatpush2.bf16.msra.mxu0 %v1180
    %1761 = vmatprep.subr.bf16.mxu0 %v1177
    %1762 = vmatpush2.bf16.msra.mxu0 %v1176
    %1763 = vmatprep.mubr.bf16.mxu0 %v395
    %1764 = vmatmul.mubr.bf16.gmra.mxu0 %v394
    %v1765 = vpop.f32.mrf.mxu0
    %v1766 = vadd.f32 %v1725, %v1765
    %v1767 = vpop.f32.mrf.mxu0
    %v1768 = vadd.f32 %v1727, %v1767
    %v1769 = vpop.f32.mrf.mxu0
    %v1770 = vpop.f32.mrf.mxu0
    %1771 = vdwg.mxu0
    %1772 = vmatprep.subr.bf16.mxu0 %v1237
    %1773 = vmatpush1.bf16.msra.mxu0 %v1236
    %1774 = vmatprep.subr.bf16.mxu0 %v1233
    %1775 = vmatpush1.bf16.msra.mxu0 %v1232
    %1776 = vmatprep.subr.bf16.mxu0 %v1229
    %1777 = vmatpush1.bf16.msra.mxu0 %v1228
    %1778 = vmatprep.subr.bf16.mxu0 %v1225
    %1779 = vmatpush1.bf16.msra.mxu0 %v1224
    %1780 = vmatprep.subr.bf16.mxu0 %v1221
    %1781 = vmatpush1.bf16.msra.mxu0 %v1220
    %1782 = vmatprep.subr.bf16.mxu0 %v1217
    %1783 = vmatpush1.bf16.msra.mxu0 %v1216
    %1784 = vmatprep.subr.bf16.mxu0 %v1213
    %1785 = vmatpush1.bf16.msra.mxu0 %v1212
    %1786 = vmatprep.subr.bf16.mxu0 %v1209
    %1787 = vmatpush1.bf16.msra.mxu0 %v1208
    %1788 = vmatprep.subr.bf16.mxu0 %v1269
    %1789 = vmatpush2.bf16.msra.mxu0 %v1268
    %1790 = vmatprep.subr.bf16.mxu0 %v1265
    %1791 = vmatpush2.bf16.msra.mxu0 %v1264
    %1792 = vmatprep.subr.bf16.mxu0 %v1261
    %1793 = vmatpush2.bf16.msra.mxu0 %v1260
    %1794 = vmatprep.subr.bf16.mxu0 %v1257
    %1795 = vmatpush2.bf16.msra.mxu0 %v1256
    %1796 = vmatprep.subr.bf16.mxu0 %v1253
    %1797 = vmatpush2.bf16.msra.mxu0 %v1252
    %1798 = vmatprep.subr.bf16.mxu0 %v1249
    %1799 = vmatpush2.bf16.msra.mxu0 %v1248
    %1800 = vmatprep.subr.bf16.mxu0 %v1245
    %1801 = vmatpush2.bf16.msra.mxu0 %v1244
    %1802 = vmatprep.subr.bf16.mxu0 %v1241
    %1803 = vmatpush2.bf16.msra.mxu0 %v1240
    %1804 = vmatprep.mubr.bf16.mxu0 %v397
    %1805 = vmatmul.mubr.bf16.gmra.mxu0 %v396
    %v1806 = vpop.f32.mrf.mxu0
    %v1807 = vadd.f32 %v1766, %v1806
    %v1808 = vpop.f32.mrf.mxu0
    %v1809 = vadd.f32 %v1768, %v1808
    %v1810 = vpop.f32.mrf.mxu0
    %v1811 = vpop.f32.mrf.mxu0
    %1812 = vdwg.mxu0
    %1813 = vmatprep.subr.bf16.mxu0 %v1301
    %1814 = vmatpush1.bf16.msra.mxu0 %v1300
    %1815 = vmatprep.subr.bf16.mxu0 %v1297
    %1816 = vmatpush1.bf16.msra.mxu0 %v1296
    %1817 = vmatprep.subr.bf16.mxu0 %v1293
    %1818 = vmatpush1.bf16.msra.mxu0 %v1292
    %1819 = vmatprep.subr.bf16.mxu0 %v1289
    %1820 = vmatpush1.bf16.msra.mxu0 %v1288
    %1821 = vmatprep.subr.bf16.mxu0 %v1285
    %1822 = vmatpush1.bf16.msra.mxu0 %v1284
    %1823 = vmatprep.subr.bf16.mxu0 %v1281
    %1824 = vmatpush1.bf16.msra.mxu0 %v1280
    %1825 = vmatprep.subr.bf16.mxu0 %v1277
    %1826 = vmatpush1.bf16.msra.mxu0 %v1276
    %1827 = vmatprep.subr.bf16.mxu0 %v1273
    %1828 = vmatpush1.bf16.msra.mxu0 %v1272
    %1829 = vmatprep.subr.bf16.mxu0 0
    %1830 = vmatpush2.bf16.msra.mxu0 0
    %1831 = vmatprep.subr.bf16.mxu0 0
    %1832 = vmatpush2.bf16.msra.mxu0 0
    %1833 = vmatprep.subr.bf16.mxu0 0
    %1834 = vmatpush2.bf16.msra.mxu0 0
    %1835 = vmatprep.subr.bf16.mxu0 0
    %1836 = vmatpush2.bf16.msra.mxu0 0
    %1837 = vmatprep.subr.bf16.mxu0 0
    %1838 = vmatpush2.bf16.msra.mxu0 0
    %1839 = vmatprep.subr.bf16.mxu0 0
    %1840 = vmatpush2.bf16.msra.mxu0 0
    %1841 = vmatprep.subr.bf16.mxu0 0
    %1842 = vmatpush2.bf16.msra.mxu0 0
    %1843 = vmatprep.subr.bf16.mxu0 0
    %1844 = vmatpush2.bf16.msra.mxu0 0
    %1845 = vmatprep.mubr.bf16.mxu0 0
    %1846 = vmatmul.mubr.bf16.gmra.mxu0 %v398
    %v1847 = vpop.f32.mrf.mxu0
    %v1848 = vadd.f32 %v1807, %v1847
    %v1849 = vpop.f32.mrf.mxu0
    %v1850 = vadd.f32 %v1809, %v1849
    %v1851 = vpop.f32.mrf.mxu0
    %v1852 = vpop.f32.mrf.mxu0
    %1853 = vdwg.mxu0
    %v1854 = vmax.f32 %v1684, 0.0
    %v1855 = vmax.f32 %v1686, 0.0
    %v1856 = vmax.f32 %v1848, 0.0
    %v1857 = vmax.f32 %v1850, 0.0
    %v1858 = vpack.c.bf16 %v1854, %v1854
    %v1859 = vpack.c.bf16 %v1855, %v1855
    %v1860 = vpack.c.bf16 %v1856, %v1856
    %v1861 = vpack.c.bf16 %v1857, %v1857
    %v1862 = vld [vmem:[#allocation8] sm:$0xff]
    %v1863 = vld [vmem:[#allocation8 + $0x8] sm:$0xff]
    %v1864 = vld [vmem:[#allocation8 + $0x10] sm:$0xff]
    %v1865 = vld [vmem:[#allocation8 + $0x18] sm:$0xff]
    %v1866 = vld [vmem:[#allocation8 + $0x20] sm:$0xff]
    %v1867 = vld [vmem:[#allocation8 + $0x28] sm:$0xff]
    %v1868 = vld [vmem:[#allocation8 + $0x30] sm:$0xff]
    %v1869 = vld [vmem:[#allocation8 + $0x38] sm:$0xff]
    %v1870 = vld [vmem:[#allocation8 + $0x40] sm:$0xff]
    %v1871 = vld [vmem:[#allocation8 + $0x48] sm:$0xff]
    %v1872 = vld [vmem:[#allocation8 + $0x50] sm:$0xff]
    %v1873 = vld [vmem:[#allocation8 + $0x58] sm:$0xff]
    %v1874 = vld [vmem:[#allocation8 + $0x60] sm:$0xff]
    %v1875 = vld [vmem:[#allocation8 + $0x68] sm:$0xff]
    %v1876 = vld [vmem:[#allocation8 + $0x70] sm:$0xff]
    %v1877 = vld [vmem:[#allocation8 + $0x78] sm:$0xff]
    %v1878 = vld [vmem:[#allocation8 + $0x80] sm:$0xff]
    %v1879 = vld [vmem:[#allocation8 + $0x88] sm:$0xff]
    %v1880 = vld [vmem:[#allocation8 + $0x90] sm:$0xff]
    %v1881 = vld [vmem:[#allocation8 + $0x98] sm:$0xff]
    %v1882 = vld [vmem:[#allocation8 + $0xa0] sm:$0xff]
    %v1883 = vld [vmem:[#allocation8 + $0xa8] sm:$0xff]
    %v1884 = vld [vmem:[#allocation8 + $0xb0] sm:$0xff]
    %v1885 = vld [vmem:[#allocation8 + $0xb8] sm:$0xff]
    %v1886 = vld [vmem:[#allocation8 + $0xc0] sm:$0xff]
    %v1887 = vld [vmem:[#allocation8 + $0xc8] sm:$0xff]
    %v1888 = vld [vmem:[#allocation8 + $0xd0] sm:$0xff]
    %v1889 = vld [vmem:[#allocation8 + $0xd8] sm:$0xff]
    %v1890 = vld [vmem:[#allocation8 + $0xe0] sm:$0xff]
    %v1891 = vld [vmem:[#allocation8 + $0xe8] sm:$0xff]
    %v1892 = vld [vmem:[#allocation8 + $0xf0] sm:$0xff]
    %v1893 = vld [vmem:[#allocation8 + $0xf8] sm:$0xff]
    %v1894 = vld [vmem:[#allocation8 + $0x100] sm:$0xff]
    %v1895 = vld [vmem:[#allocation8 + $0x108] sm:$0xff]
    %v1896 = vld [vmem:[#allocation8 + $0x110] sm:$0xff]
    %v1897 = vld [vmem:[#allocation8 + $0x118] sm:$0xff]
    %v1898 = vld [vmem:[#allocation8 + $0x120] sm:$0xff]
    %v1899 = vld [vmem:[#allocation8 + $0x128] sm:$0xff]
    %v1900 = vld [vmem:[#allocation8 + $0x130] sm:$0xff]
    %v1901 = vld [vmem:[#allocation8 + $0x138] sm:$0xff]
    %v1902 = vld [vmem:[#allocation8 + $0x140] sm:$0xff]
    %v1903 = vld [vmem:[#allocation8 + $0x148] sm:$0xff]
    %v1904 = vld [vmem:[#allocation8 + $0x150] sm:$0xff]
    %v1905 = vld [vmem:[#allocation8 + $0x158] sm:$0xff]
    %v1906 = vld [vmem:[#allocation8 + $0x160] sm:$0xff]
    %v1907 = vld [vmem:[#allocation8 + $0x168] sm:$0xff]
    %v1908 = vld [vmem:[#allocation8 + $0x170] sm:$0xff]
    %v1909 = vld [vmem:[#allocation8 + $0x178] sm:$0xff]
    %v1910 = vld [vmem:[#allocation8 + $0x180] sm:$0xff]
    %v1911 = vld [vmem:[#allocation8 + $0x188] sm:$0xff]
    %v1912 = vld [vmem:[#allocation8 + $0x190] sm:$0xff]
    %v1913 = vld [vmem:[#allocation8 + $0x198] sm:$0xff]
    %v1914 = vld [vmem:[#allocation8 + $0x1a0] sm:$0xff]
    %v1915 = vld [vmem:[#allocation8 + $0x1a8] sm:$0xff]
    %v1916 = vld [vmem:[#allocation8 + $0x1b0] sm:$0xff]
    %v1917 = vld [vmem:[#allocation8 + $0x1b8] sm:$0xff]
    %v1918 = vld [vmem:[#allocation8 + $0x1c0] sm:$0xff]
    %v1919 = vld [vmem:[#allocation8 + $0x1c8] sm:$0xff]
    %v1920 = vld [vmem:[#allocation8 + $0x1d0] sm:$0xff]
    %v1921 = vld [vmem:[#allocation8 + $0x1d8] sm:$0xff]
    %v1922 = vld [vmem:[#allocation8 + $0x1e0] sm:$0xff]
    %v1923 = vld [vmem:[#allocation8 + $0x1e8] sm:$0xff]
    %v1924 = vld [vmem:[#allocation8 + $0x1f0] sm:$0xff]
    %v1925 = vld [vmem:[#allocation8 + $0x1f8] sm:$0xff]
    %v1926 = vld [vmem:[#allocation8 + $0x200] sm:$0xff]
    %v1927 = vld [vmem:[#allocation8 + $0x208] sm:$0xff]
    %v1928 = vld [vmem:[#allocation8 + $0x210] sm:$0xff]
    %v1929 = vld [vmem:[#allocation8 + $0x218] sm:$0xff]
    %v1930 = vld [vmem:[#allocation8 + $0x220] sm:$0xff]
    %v1931 = vld [vmem:[#allocation8 + $0x228] sm:$0xff]
    %v1932 = vld [vmem:[#allocation8 + $0x230] sm:$0xff]
    %v1933 = vld [vmem:[#allocation8 + $0x238] sm:$0xff]
    %v1934 = vld [vmem:[#allocation8 + $0x240] sm:$0xff]
    %v1935 = vld [vmem:[#allocation8 + $0x248] sm:$0xff]
    %v1936 = vld [vmem:[#allocation8 + $0x250] sm:$0xff]
    %v1937 = vld [vmem:[#allocation8 + $0x258] sm:$0xff]
    %v1938 = vld [vmem:[#allocation8 + $0x260] sm:$0xff]
    %v1939 = vld [vmem:[#allocation8 + $0x268] sm:$0xff]
    %v1940 = vld [vmem:[#allocation8 + $0x270] sm:$0xff]
    %v1941 = vld [vmem:[#allocation8 + $0x278] sm:$0xff]
    %v1942 = vld [vmem:[#allocation8 + $0x280] sm:$0xff]
    %v1943 = vld [vmem:[#allocation8 + $0x288] sm:$0xff]
    %v1944 = vld [vmem:[#allocation8 + $0x290] sm:$0xff]
    %v1945 = vld [vmem:[#allocation8 + $0x298] sm:$0xff]
    %v1946 = vld [vmem:[#allocation8 + $0x2a0] sm:$0xff]
    %v1947 = vld [vmem:[#allocation8 + $0x2a8] sm:$0xff]
    %v1948 = vld [vmem:[#allocation8 + $0x2b0] sm:$0xff]
    %v1949 = vld [vmem:[#allocation8 + $0x2b8] sm:$0xff]
    %v1950 = vld [vmem:[#allocation8 + $0x2c0] sm:$0xff]
    %v1951 = vld [vmem:[#allocation8 + $0x2c8] sm:$0xff]
    %v1952 = vld [vmem:[#allocation8 + $0x2d0] sm:$0xff]
    %v1953 = vld [vmem:[#allocation8 + $0x2d8] sm:$0xff]
    %v1954 = vld [vmem:[#allocation8 + $0x2e0] sm:$0xff]
    %v1955 = vld [vmem:[#allocation8 + $0x2e8] sm:$0xff]
    %v1956 = vld [vmem:[#allocation8 + $0x2f0] sm:$0xff]
    %v1957 = vld [vmem:[#allocation8 + $0x2f8] sm:$0xff]
    %v1958 = vld [vmem:[#allocation8 + $0x300] sm:$0xff]
    %v1959 = vld [vmem:[#allocation8 + $0x308] sm:$0xff]
    %v1960 = vld [vmem:[#allocation8 + $0x310] sm:$0xff]
    %v1961 = vld [vmem:[#allocation8 + $0x318] sm:$0xff]
    %v1962 = vld [vmem:[#allocation8 + $0x320] sm:$0xff]
    %v1963 = vld [vmem:[#allocation8 + $0x328] sm:$0xff]
    %v1964 = vld [vmem:[#allocation8 + $0x330] sm:$0xff]
    %v1965 = vld [vmem:[#allocation8 + $0x338] sm:$0xff]
    %v1966 = vld [vmem:[#allocation8 + $0x340] sm:$0xff]
    %v1967 = vld [vmem:[#allocation8 + $0x348] sm:$0xff]
    %v1968 = vld [vmem:[#allocation8 + $0x350] sm:$0xff]
    %v1969 = vld [vmem:[#allocation8 + $0x358] sm:$0xff]
    %v1970 = vld [vmem:[#allocation8 + $0x360] sm:$0xff]
    %v1971 = vld [vmem:[#allocation8 + $0x368] sm:$0xff]
    %v1972 = vld [vmem:[#allocation8 + $0x370] sm:$0xff]
    %v1973 = vld [vmem:[#allocation8 + $0x378] sm:$0xff]
    %v1974 = vld [vmem:[#allocation8 + $0x380] sm:$0xff]
    %v1975 = vld [vmem:[#allocation8 + $0x388] sm:$0xff]
    %v1976 = vld [vmem:[#allocation8 + $0x390] sm:$0xff]
    %v1977 = vld [vmem:[#allocation8 + $0x398] sm:$0xff]
    %v1978 = vld [vmem:[#allocation8 + $0x3a0] sm:$0xff]
    %v1979 = vld [vmem:[#allocation8 + $0x3a8] sm:$0xff]
    %v1980 = vld [vmem:[#allocation8 + $0x3b0] sm:$0xff]
    %v1981 = vld [vmem:[#allocation8 + $0x3b8] sm:$0xff]
    %v1982 = vld [vmem:[#allocation8 + $0x3c0] sm:$0xff]
    %v1983 = vld [vmem:[#allocation8 + $0x3c8] sm:$0xff]
    %v1984 = vld [vmem:[#allocation8 + $0x3d0] sm:$0xff]
    %v1985 = vld [vmem:[#allocation8 + $0x3d8] sm:$0xff]
    %v1986 = vld [vmem:[#allocation8 + $0x3e0] sm:$0xff]
    %v1987 = vld [vmem:[#allocation8 + $0x3e8] sm:$0xff]
    %v1988 = vld [vmem:[#allocation8 + $0x3f0] sm:$0xff]
    %v1989 = vld [vmem:[#allocation8 + $0x3f8] sm:$0xff]
    %v1990 = vld [vmem:[%s4] sm:$0xf]
    %v1992 = vlaneseq
    %v1993 = vshrl.u32 %v1992, 7
    %v1994 = vsub.s32 0, %v1993
    %v1995 = vrot.slane %v1990, %v1994
    %v1996 = vlaneseq
    %v1997 = vshrl.u32 %v1996, 7
    %v1998 = vsub.s32 1, %v1997
    %v1999 = vrot.slane %v1990, %v1998
    %v2000 = vlaneseq
    %v2001 = vshrl.u32 %v2000, 7
    %v2002 = vsub.s32 2, %v2001
    %v2003 = vrot.slane %v1990, %v2002
    %v2004 = vlaneseq
    %v2005 = vshrl.u32 %v2004, 7
    %v2006 = vsub.s32 3, %v2005
    %v2007 = vrot.slane %v1990, %v2006
    %v2140 = vunpack.c.l.b16 %v1862
    %v2141 = vunpack.c.h.b16 %v1862
    %v2142 = vunpack.c.l.b16 %v1863
    %v2143 = vunpack.c.h.b16 %v1863
    %v2144 = vunpack.c.l.b16 %v1864
    %v2145 = vunpack.c.h.b16 %v1864
    %v2146 = vunpack.c.l.b16 %v1865
    %v2147 = vunpack.c.h.b16 %v1865
    %v2148 = vunpack.c.l.b16 %v1866
    %v2149 = vunpack.c.h.b16 %v1866
    %v2150 = vunpack.c.l.b16 %v1867
    %v2151 = vunpack.c.h.b16 %v1867
    %v2152 = vunpack.c.l.b16 %v1868
    %v2153 = vunpack.c.h.b16 %v1868
    %v2154 = vunpack.c.l.b16 %v1869
    %v2155 = vunpack.c.h.b16 %v1869
    %v2156 = vunpack.c.l.b16 %v1870
    %v2157 = vunpack.c.h.b16 %v1870
    %v2158 = vunpack.c.l.b16 %v1871
    %v2159 = vunpack.c.h.b16 %v1871
    %v2160 = vunpack.c.l.b16 %v1872
    %v2161 = vunpack.c.h.b16 %v1872
    %v2162 = vunpack.c.l.b16 %v1873
    %v2163 = vunpack.c.h.b16 %v1873
    %v2164 = vunpack.c.l.b16 %v1874
    %v2165 = vunpack.c.h.b16 %v1874
    %v2166 = vunpack.c.l.b16 %v1875
    %v2167 = vunpack.c.h.b16 %v1875
    %v2168 = vunpack.c.l.b16 %v1876
    %v2169 = vunpack.c.h.b16 %v1876
    %v2170 = vunpack.c.l.b16 %v1877
    %v2171 = vunpack.c.h.b16 %v1877
    %v2172 = vunpack.c.l.b16 %v1878
    %v2173 = vunpack.c.h.b16 %v1878
    %v2174 = vunpack.c.l.b16 %v1879
    %v2175 = vunpack.c.h.b16 %v1879
    %v2176 = vunpack.c.l.b16 %v1880
    %v2177 = vunpack.c.h.b16 %v1880
    %v2178 = vunpack.c.l.b16 %v1881
    %v2179 = vunpack.c.h.b16 %v1881
    %v2180 = vunpack.c.l.b16 %v1882
    %v2181 = vunpack.c.h.b16 %v1882
    %v2182 = vunpack.c.l.b16 %v1883
    %v2183 = vunpack.c.h.b16 %v1883
    %v2184 = vunpack.c.l.b16 %v1884
    %v2185 = vunpack.c.h.b16 %v1884
    %v2186 = vunpack.c.l.b16 %v1885
    %v2187 = vunpack.c.h.b16 %v1885
    %v2188 = vunpack.c.l.b16 %v1886
    %v2189 = vunpack.c.h.b16 %v1886
    %v2190 = vunpack.c.l.b16 %v1887
    %v2191 = vunpack.c.h.b16 %v1887
    %v2192 = vunpack.c.l.b16 %v1888
    %v2193 = vunpack.c.h.b16 %v1888
    %v2194 = vunpack.c.l.b16 %v1889
    %v2195 = vunpack.c.h.b16 %v1889
    %v2196 = vunpack.c.l.b16 %v1890
    %v2197 = vunpack.c.h.b16 %v1890
    %v2198 = vunpack.c.l.b16 %v1891
    %v2199 = vunpack.c.h.b16 %v1891
    %v2200 = vunpack.c.l.b16 %v1892
    %v2201 = vunpack.c.h.b16 %v1892
    %v2202 = vunpack.c.l.b16 %v1893
    %v2203 = vunpack.c.h.b16 %v1893
    %v2204 = vunpack.c.l.b16 %v1894
    %v2205 = vunpack.c.h.b16 %v1894
    %v2206 = vunpack.c.l.b16 %v1895
    %v2207 = vunpack.c.h.b16 %v1895
    %v2208 = vunpack.c.l.b16 %v1896
    %v2209 = vunpack.c.h.b16 %v1896
    %v2210 = vunpack.c.l.b16 %v1897
    %v2211 = vunpack.c.h.b16 %v1897
    %v2212 = vunpack.c.l.b16 %v1898
    %v2213 = vunpack.c.h.b16 %v1898
    %v2214 = vunpack.c.l.b16 %v1899
    %v2215 = vunpack.c.h.b16 %v1899
    %v2216 = vunpack.c.l.b16 %v1900
    %v2217 = vunpack.c.h.b16 %v1900
    %v2218 = vunpack.c.l.b16 %v1901
    %v2219 = vunpack.c.h.b16 %v1901
    %v2220 = vunpack.c.l.b16 %v1902
    %v2221 = vunpack.c.h.b16 %v1902
    %v2222 = vunpack.c.l.b16 %v1903
    %v2223 = vunpack.c.h.b16 %v1903
    %v2224 = vunpack.c.l.b16 %v1904
    %v2225 = vunpack.c.h.b16 %v1904
    %v2226 = vunpack.c.l.b16 %v1905
    %v2227 = vunpack.c.h.b16 %v1905
    %v2228 = vunpack.c.l.b16 %v1906
    %v2229 = vunpack.c.h.b16 %v1906
    %v2230 = vunpack.c.l.b16 %v1907
    %v2231 = vunpack.c.h.b16 %v1907
    %v2232 = vunpack.c.l.b16 %v1908
    %v2233 = vunpack.c.h.b16 %v1908
    %v2234 = vunpack.c.l.b16 %v1909
    %v2235 = vunpack.c.h.b16 %v1909
    %v2236 = vunpack.c.l.b16 %v1910
    %v2237 = vunpack.c.h.b16 %v1910
    %v2238 = vunpack.c.l.b16 %v1911
    %v2239 = vunpack.c.h.b16 %v1911
    %v2240 = vunpack.c.l.b16 %v1912
    %v2241 = vunpack.c.h.b16 %v1912
    %v2242 = vunpack.c.l.b16 %v1913
    %v2243 = vunpack.c.h.b16 %v1913
    %v2244 = vunpack.c.l.b16 %v1914
    %v2245 = vunpack.c.h.b16 %v1914
    %v2246 = vunpack.c.l.b16 %v1915
    %v2247 = vunpack.c.h.b16 %v1915
    %v2248 = vunpack.c.l.b16 %v1916
    %v2249 = vunpack.c.h.b16 %v1916
    %v2250 = vunpack.c.l.b16 %v1917
    %v2251 = vunpack.c.h.b16 %v1917
    %v2252 = vunpack.c.l.b16 %v1918
    %v2253 = vunpack.c.h.b16 %v1918
    %v2254 = vunpack.c.l.b16 %v1919
    %v2255 = vunpack.c.h.b16 %v1919
    %v2256 = vunpack.c.l.b16 %v1920
    %v2257 = vunpack.c.h.b16 %v1920
    %v2258 = vunpack.c.l.b16 %v1921
    %v2259 = vunpack.c.h.b16 %v1921
    %v2260 = vunpack.c.l.b16 %v1922
    %v2261 = vunpack.c.h.b16 %v1922
    %v2262 = vunpack.c.l.b16 %v1923
    %v2263 = vunpack.c.h.b16 %v1923
    %v2264 = vunpack.c.l.b16 %v1924
    %v2265 = vunpack.c.h.b16 %v1924
    %v2266 = vunpack.c.l.b16 %v1925
    %v2267 = vunpack.c.h.b16 %v1925
    %v2268 = vunpack.c.l.b16 %v1926
    %v2269 = vunpack.c.h.b16 %v1926
    %v2270 = vunpack.c.l.b16 %v1927
    %v2271 = vunpack.c.h.b16 %v1927
    %v2272 = vunpack.c.l.b16 %v1928
    %v2273 = vunpack.c.h.b16 %v1928
    %v2274 = vunpack.c.l.b16 %v1929
    %v2275 = vunpack.c.h.b16 %v1929
    %v2276 = vunpack.c.l.b16 %v1930
    %v2277 = vunpack.c.h.b16 %v1930
    %v2278 = vunpack.c.l.b16 %v1931
    %v2279 = vunpack.c.h.b16 %v1931
    %v2280 = vunpack.c.l.b16 %v1932
    %v2281 = vunpack.c.h.b16 %v1932
    %v2282 = vunpack.c.l.b16 %v1933
    %v2283 = vunpack.c.h.b16 %v1933
    %v2284 = vunpack.c.l.b16 %v1934
    %v2285 = vunpack.c.h.b16 %v1934
    %v2286 = vunpack.c.l.b16 %v1935
    %v2287 = vunpack.c.h.b16 %v1935
    %v2288 = vunpack.c.l.b16 %v1936
    %v2289 = vunpack.c.h.b16 %v1936
    %v2290 = vunpack.c.l.b16 %v1937
    %v2291 = vunpack.c.h.b16 %v1937
    %v2292 = vunpack.c.l.b16 %v1938
    %v2293 = vunpack.c.h.b16 %v1938
    %v2294 = vunpack.c.l.b16 %v1939
    %v2295 = vunpack.c.h.b16 %v1939
    %v2296 = vunpack.c.l.b16 %v1940
    %v2297 = vunpack.c.h.b16 %v1940
    %v2298 = vunpack.c.l.b16 %v1941
    %v2299 = vunpack.c.h.b16 %v1941
    %v2300 = vunpack.c.l.b16 %v1942
    %v2301 = vunpack.c.h.b16 %v1942
    %v2302 = vunpack.c.l.b16 %v1943
    %v2303 = vunpack.c.h.b16 %v1943
    %v2304 = vunpack.c.l.b16 %v1944
    %v2305 = vunpack.c.h.b16 %v1944
    %v2306 = vunpack.c.l.b16 %v1945
    %v2307 = vunpack.c.h.b16 %v1945
    %v2308 = vunpack.c.l.b16 %v1946
    %v2309 = vunpack.c.h.b16 %v1946
    %v2310 = vunpack.c.l.b16 %v1947
    %v2311 = vunpack.c.h.b16 %v1947
    %v2312 = vunpack.c.l.b16 %v1948
    %v2313 = vunpack.c.h.b16 %v1948
    %v2314 = vunpack.c.l.b16 %v1949
    %v2315 = vunpack.c.h.b16 %v1949
    %v2316 = vunpack.c.l.b16 %v1950
    %v2317 = vunpack.c.h.b16 %v1950
    %v2318 = vunpack.c.l.b16 %v1951
    %v2319 = vunpack.c.h.b16 %v1951
    %v2320 = vunpack.c.l.b16 %v1952
    %v2321 = vunpack.c.h.b16 %v1952
    %v2322 = vunpack.c.l.b16 %v1953
    %v2323 = vunpack.c.h.b16 %v1953
    %v2324 = vunpack.c.l.b16 %v1954
    %v2325 = vunpack.c.h.b16 %v1954
    %v2326 = vunpack.c.l.b16 %v1955
    %v2327 = vunpack.c.h.b16 %v1955
    %v2328 = vunpack.c.l.b16 %v1956
    %v2329 = vunpack.c.h.b16 %v1956
    %v2330 = vunpack.c.l.b16 %v1957
    %v2331 = vunpack.c.h.b16 %v1957
    %v2332 = vunpack.c.l.b16 %v1958
    %v2333 = vunpack.c.h.b16 %v1958
    %v2334 = vunpack.c.l.b16 %v1959
    %v2335 = vunpack.c.h.b16 %v1959
    %v2336 = vunpack.c.l.b16 %v1960
    %v2337 = vunpack.c.h.b16 %v1960
    %v2338 = vunpack.c.l.b16 %v1961
    %v2339 = vunpack.c.h.b16 %v1961
    %v2340 = vunpack.c.l.b16 %v1962
    %v2341 = vunpack.c.h.b16 %v1962
    %v2342 = vunpack.c.l.b16 %v1963
    %v2343 = vunpack.c.h.b16 %v1963
    %v2344 = vunpack.c.l.b16 %v1964
    %v2345 = vunpack.c.h.b16 %v1964
    %v2346 = vunpack.c.l.b16 %v1965
    %v2347 = vunpack.c.h.b16 %v1965
    %v2348 = vunpack.c.l.b16 %v1966
    %v2349 = vunpack.c.h.b16 %v1966
    %v2350 = vunpack.c.l.b16 %v1967
    %v2351 = vunpack.c.h.b16 %v1967
    %v2352 = vunpack.c.l.b16 %v1968
    %v2353 = vunpack.c.h.b16 %v1968
    %v2354 = vunpack.c.l.b16 %v1969
    %v2355 = vunpack.c.h.b16 %v1969
    %v2356 = vunpack.c.l.b16 %v1970
    %v2357 = vunpack.c.h.b16 %v1970
    %v2358 = vunpack.c.l.b16 %v1971
    %v2359 = vunpack.c.h.b16 %v1971
    %v2360 = vunpack.c.l.b16 %v1972
    %v2361 = vunpack.c.h.b16 %v1972
    %v2362 = vunpack.c.l.b16 %v1973
    %v2363 = vunpack.c.h.b16 %v1973
    %v2364 = vunpack.c.l.b16 %v1974
    %v2365 = vunpack.c.h.b16 %v1974
    %v2366 = vunpack.c.l.b16 %v1975
    %v2367 = vunpack.c.h.b16 %v1975
    %v2368 = vunpack.c.l.b16 %v1976
    %v2369 = vunpack.c.h.b16 %v1976
    %v2370 = vunpack.c.l.b16 %v1977
    %v2371 = vunpack.c.h.b16 %v1977
    %v2372 = vunpack.c.l.b16 %v1978
    %v2373 = vunpack.c.h.b16 %v1978
    %v2374 = vunpack.c.l.b16 %v1979
    %v2375 = vunpack.c.h.b16 %v1979
    %v2376 = vunpack.c.l.b16 %v1980
    %v2377 = vunpack.c.h.b16 %v1980
    %v2378 = vunpack.c.l.b16 %v1981
    %v2379 = vunpack.c.h.b16 %v1981
    %v2380 = vunpack.c.l.b16 %v1982
    %v2381 = vunpack.c.h.b16 %v1982
    %v2382 = vunpack.c.l.b16 %v1983
    %v2383 = vunpack.c.h.b16 %v1983
    %v2384 = vunpack.c.l.b16 %v1984
    %v2385 = vunpack.c.h.b16 %v1984
    %v2386 = vunpack.c.l.b16 %v1985
    %v2387 = vunpack.c.h.b16 %v1985
    %v2388 = vunpack.c.l.b16 %v1986
    %v2389 = vunpack.c.h.b16 %v1986
    %v2390 = vunpack.c.l.b16 %v1987
    %v2391 = vunpack.c.h.b16 %v1987
    %v2392 = vunpack.c.l.b16 %v1988
    %v2393 = vunpack.c.h.b16 %v1988
    %v2394 = vunpack.c.l.b16 %v1989
    %v2395 = vunpack.c.h.b16 %v1989
    %v2396 = vpack.c.b16 %v2144, %v2140
    %v2397 = vpack.c.b16 %v2145, %v2141
    %v2398 = vpack.c.b16 %v2146, %v2142
    %v2399 = vpack.c.b16 %v2147, %v2143
    %v2400 = vpack.c.b16 %v2152, %v2148
    %v2401 = vpack.c.b16 %v2153, %v2149
    %v2402 = vpack.c.b16 %v2154, %v2150
    %v2403 = vpack.c.b16 %v2155, %v2151
    %v2404 = vpack.c.b16 %v2160, %v2156
    %v2405 = vpack.c.b16 %v2161, %v2157
    %v2406 = vpack.c.b16 %v2162, %v2158
    %v2407 = vpack.c.b16 %v2163, %v2159
    %v2408 = vpack.c.b16 %v2168, %v2164
    %v2409 = vpack.c.b16 %v2169, %v2165
    %v2410 = vpack.c.b16 %v2170, %v2166
    %v2411 = vpack.c.b16 %v2171, %v2167
    %v2412 = vpack.c.b16 %v2176, %v2172
    %v2413 = vpack.c.b16 %v2177, %v2173
    %v2414 = vpack.c.b16 %v2178, %v2174
    %v2415 = vpack.c.b16 %v2179, %v2175
    %v2416 = vpack.c.b16 %v2184, %v2180
    %v2417 = vpack.c.b16 %v2185, %v2181
    %v2418 = vpack.c.b16 %v2186, %v2182
    %v2419 = vpack.c.b16 %v2187, %v2183
    %v2420 = vpack.c.b16 %v2192, %v2188
    %v2421 = vpack.c.b16 %v2193, %v2189
    %v2422 = vpack.c.b16 %v2194, %v2190
    %v2423 = vpack.c.b16 %v2195, %v2191
    %v2424 = vpack.c.b16 %v2200, %v2196
    %v2425 = vpack.c.b16 %v2201, %v2197
    %v2426 = vpack.c.b16 %v2202, %v2198
    %v2427 = vpack.c.b16 %v2203, %v2199
    %v2428 = vpack.c.b16 %v2208, %v2204
    %v2429 = vpack.c.b16 %v2209, %v2205
    %v2430 = vpack.c.b16 %v2210, %v2206
    %v2431 = vpack.c.b16 %v2211, %v2207
    %v2432 = vpack.c.b16 %v2216, %v2212
    %v2433 = vpack.c.b16 %v2217, %v2213
    %v2434 = vpack.c.b16 %v2218, %v2214
    %v2435 = vpack.c.b16 %v2219, %v2215
    %v2436 = vpack.c.b16 %v2224, %v2220
    %v2437 = vpack.c.b16 %v2225, %v2221
    %v2438 = vpack.c.b16 %v2226, %v2222
    %v2439 = vpack.c.b16 %v2227, %v2223
    %v2440 = vpack.c.b16 %v2232, %v2228
    %v2441 = vpack.c.b16 %v2233, %v2229
    %v2442 = vpack.c.b16 %v2234, %v2230
    %v2443 = vpack.c.b16 %v2235, %v2231
    %v2444 = vpack.c.b16 %v2240, %v2236
    %v2445 = vpack.c.b16 %v2241, %v2237
    %v2446 = vpack.c.b16 %v2242, %v2238
    %v2447 = vpack.c.b16 %v2243, %v2239
    %v2448 = vpack.c.b16 %v2248, %v2244
    %v2449 = vpack.c.b16 %v2249, %v2245
    %v2450 = vpack.c.b16 %v2250, %v2246
    %v2451 = vpack.c.b16 %v2251, %v2247
    %v2452 = vpack.c.b16 %v2256, %v2252
    %v2453 = vpack.c.b16 %v2257, %v2253
    %v2454 = vpack.c.b16 %v2258, %v2254
    %v2455 = vpack.c.b16 %v2259, %v2255
    %v2456 = vpack.c.b16 %v2264, %v2260
    %v2457 = vpack.c.b16 %v2265, %v2261
    %v2458 = vpack.c.b16 %v2266, %v2262
    %v2459 = vpack.c.b16 %v2267, %v2263
    %v2460 = vpack.c.b16 %v2272, %v2268
    %v2461 = vpack.c.b16 %v2273, %v2269
    %v2462 = vpack.c.b16 %v2274, %v2270
    %v2463 = vpack.c.b16 %v2275, %v2271
    %v2464 = vpack.c.b16 %v2280, %v2276
    %v2465 = vpack.c.b16 %v2281, %v2277
    %v2466 = vpack.c.b16 %v2282, %v2278
    %v2467 = vpack.c.b16 %v2283, %v2279
    %v2468 = vpack.c.b16 %v2288, %v2284
    %v2469 = vpack.c.b16 %v2289, %v2285
    %v2470 = vpack.c.b16 %v2290, %v2286
    %v2471 = vpack.c.b16 %v2291, %v2287
    %v2472 = vpack.c.b16 %v2296, %v2292
    %v2473 = vpack.c.b16 %v2297, %v2293
    %v2474 = vpack.c.b16 %v2298, %v2294
    %v2475 = vpack.c.b16 %v2299, %v2295
    %v2476 = vpack.c.b16 %v2304, %v2300
    %v2477 = vpack.c.b16 %v2305, %v2301
    %v2478 = vpack.c.b16 %v2306, %v2302
    %v2479 = vpack.c.b16 %v2307, %v2303
    %v2480 = vpack.c.b16 %v2312, %v2308
    %v2481 = vpack.c.b16 %v2313, %v2309
    %v2482 = vpack.c.b16 %v2314, %v2310
    %v2483 = vpack.c.b16 %v2315, %v2311
    %v2484 = vpack.c.b16 %v2320, %v2316
    %v2485 = vpack.c.b16 %v2321, %v2317
    %v2486 = vpack.c.b16 %v2322, %v2318
    %v2487 = vpack.c.b16 %v2323, %v2319
    %v2488 = vpack.c.b16 %v2328, %v2324
    %v2489 = vpack.c.b16 %v2329, %v2325
    %v2490 = vpack.c.b16 %v2330, %v2326
    %v2491 = vpack.c.b16 %v2331, %v2327
    %v2492 = vpack.c.b16 %v2336, %v2332
    %v2493 = vpack.c.b16 %v2337, %v2333
    %v2494 = vpack.c.b16 %v2338, %v2334
    %v2495 = vpack.c.b16 %v2339, %v2335
    %v2496 = vpack.c.b16 %v2344, %v2340
    %v2497 = vpack.c.b16 %v2345, %v2341
    %v2498 = vpack.c.b16 %v2346, %v2342
    %v2499 = vpack.c.b16 %v2347, %v2343
    %v2500 = vpack.c.b16 %v2352, %v2348
    %v2501 = vpack.c.b16 %v2353, %v2349
    %v2502 = vpack.c.b16 %v2354, %v2350
    %v2503 = vpack.c.b16 %v2355, %v2351
    %v2504 = vpack.c.b16 %v2360, %v2356
    %v2505 = vpack.c.b16 %v2361, %v2357
    %v2506 = vpack.c.b16 %v2362, %v2358
    %v2507 = vpack.c.b16 %v2363, %v2359
    %v2508 = vpack.c.b16 %v2368, %v2364
    %v2509 = vpack.c.b16 %v2369, %v2365
    %v2510 = vpack.c.b16 %v2370, %v2366
    %v2511 = vpack.c.b16 %v2371, %v2367
    %v2512 = vpack.c.b16 %v2376, %v2372
    %v2513 = vpack.c.b16 %v2377, %v2373
    %v2514 = vpack.c.b16 %v2378, %v2374
    %v2515 = vpack.c.b16 %v2379, %v2375
    %v2516 = vpack.c.b16 %v2384, %v2380
    %v2517 = vpack.c.b16 %v2385, %v2381
    %v2518 = vpack.c.b16 %v2386, %v2382
    %v2519 = vpack.c.b16 %v2387, %v2383
    %v2520 = vpack.c.b16 %v2392, %v2388
    %v2521 = vpack.c.b16 %v2393, %v2389
    %v2522 = vpack.c.b16 %v2394, %v2390
    %v2523 = vpack.c.b16 %v2395, %v2391
    %2652 = vmatprep.subr.bf16.mxu0 %v2425
    %2653 = vmatpush1.bf16.msra.mxu0 %v2424
    %2654 = vmatprep.subr.bf16.mxu0 %v2421
    %2655 = vmatpush1.bf16.msra.mxu0 %v2420
    %2656 = vmatprep.subr.bf16.mxu0 %v2417
    %2657 = vmatpush1.bf16.msra.mxu0 %v2416
    %2658 = vmatprep.subr.bf16.mxu0 %v2413
    %2659 = vmatpush1.bf16.msra.mxu0 %v2412
    %2660 = vmatprep.subr.bf16.mxu0 %v2409
    %2661 = vmatpush1.bf16.msra.mxu0 %v2408
    %2662 = vmatprep.subr.bf16.mxu0 %v2405
    %2663 = vmatpush1.bf16.msra.mxu0 %v2404
    %2664 = vmatprep.subr.bf16.mxu0 %v2401
    %2665 = vmatpush1.bf16.msra.mxu0 %v2400
    %2666 = vmatprep.subr.bf16.mxu0 %v2397
    %2667 = vmatpush1.bf16.msra.mxu0 %v2396
    %2668 = vmatprep.subr.bf16.mxu0 %v2457
    %2669 = vmatpush2.bf16.msra.mxu0 %v2456
    %2670 = vmatprep.subr.bf16.mxu0 %v2453
    %2671 = vmatpush2.bf16.msra.mxu0 %v2452
    %2672 = vmatprep.subr.bf16.mxu0 %v2449
    %2673 = vmatpush2.bf16.msra.mxu0 %v2448
    %2674 = vmatprep.subr.bf16.mxu0 %v2445
    %2675 = vmatpush2.bf16.msra.mxu0 %v2444
    %2676 = vmatprep.subr.bf16.mxu0 %v2441
    %2677 = vmatpush2.bf16.msra.mxu0 %v2440
    %2678 = vmatprep.subr.bf16.mxu0 %v2437
    %2679 = vmatpush2.bf16.msra.mxu0 %v2436
    %2680 = vmatprep.subr.bf16.mxu0 %v2433
    %2681 = vmatpush2.bf16.msra.mxu0 %v2432
    %2682 = vmatprep.subr.bf16.mxu0 %v2429
    %2683 = vmatpush2.bf16.msra.mxu0 %v2428
    %2684 = vmatprep.mubr.bf16.mxu0 %v1859
    %2685 = vmatmul.mubr.bf16.gmra.mxu0 %v1858
    %v2686 = vpop.f32.mrf.mxu0
    %v2687 = vadd.f32 %v1995, %v2686
    %v2688 = vpop.f32.mrf.mxu0
    %v2689 = vadd.f32 %v1999, %v2688
    %v2690 = vpop.f32.mrf.mxu0
    %v2691 = vpop.f32.mrf.mxu0
    %2692 = vdwg.mxu0
    %2693 = vmatprep.subr.bf16.mxu0 %v2489
    %2694 = vmatpush1.bf16.msra.mxu0 %v2488
    %2695 = vmatprep.subr.bf16.mxu0 %v2485
    %2696 = vmatpush1.bf16.msra.mxu0 %v2484
    %2697 = vmatprep.subr.bf16.mxu0 %v2481
    %2698 = vmatpush1.bf16.msra.mxu0 %v2480
    %2699 = vmatprep.subr.bf16.mxu0 %v2477
    %2700 = vmatpush1.bf16.msra.mxu0 %v2476
    %2701 = vmatprep.subr.bf16.mxu0 %v2473
    %2702 = vmatpush1.bf16.msra.mxu0 %v2472
    %2703 = vmatprep.subr.bf16.mxu0 %v2469
    %2704 = vmatpush1.bf16.msra.mxu0 %v2468
    %2705 = vmatprep.subr.bf16.mxu0 %v2465
    %2706 = vmatpush1.bf16.msra.mxu0 %v2464
    %2707 = vmatprep.subr.bf16.mxu0 %v2461
    %2708 = vmatpush1.bf16.msra.mxu0 %v2460
    %2709 = vmatprep.subr.bf16.mxu0 %v2521
    %2710 = vmatpush2.bf16.msra.mxu0 %v2520
    %2711 = vmatprep.subr.bf16.mxu0 %v2517
    %2712 = vmatpush2.bf16.msra.mxu0 %v2516
    %2713 = vmatprep.subr.bf16.mxu0 %v2513
    %2714 = vmatpush2.bf16.msra.mxu0 %v2512
    %2715 = vmatprep.subr.bf16.mxu0 %v2509
    %2716 = vmatpush2.bf16.msra.mxu0 %v2508
    %2717 = vmatprep.subr.bf16.mxu0 %v2505
    %2718 = vmatpush2.bf16.msra.mxu0 %v2504
    %2719 = vmatprep.subr.bf16.mxu0 %v2501
    %2720 = vmatpush2.bf16.msra.mxu0 %v2500
    %2721 = vmatprep.subr.bf16.mxu0 %v2497
    %2722 = vmatpush2.bf16.msra.mxu0 %v2496
    %2723 = vmatprep.subr.bf16.mxu0 %v2493
    %2724 = vmatpush2.bf16.msra.mxu0 %v2492
    %2725 = vmatprep.mubr.bf16.mxu0 %v1861
    %2726 = vmatmul.mubr.bf16.gmra.mxu0 %v1860
    %v2727 = vpop.f32.mrf.mxu0
    %v2728 = vadd.f32 %v2687, %v2727
    %v2729 = vpop.f32.mrf.mxu0
    %v2730 = vadd.f32 %v2689, %v2729
    %v2731 = vpop.f32.mrf.mxu0
    %v2732 = vpop.f32.mrf.mxu0
    %2733 = vdwg.mxu0
    %2734 = vmatprep.subr.bf16.mxu0 %v2427
    %2735 = vmatpush1.bf16.msra.mxu0 %v2426
    %2736 = vmatprep.subr.bf16.mxu0 %v2423
    %2737 = vmatpush1.bf16.msra.mxu0 %v2422
    %2738 = vmatprep.subr.bf16.mxu0 %v2419
    %2739 = vmatpush1.bf16.msra.mxu0 %v2418
    %2740 = vmatprep.subr.bf16.mxu0 %v2415
    %2741 = vmatpush1.bf16.msra.mxu0 %v2414
    %2742 = vmatprep.subr.bf16.mxu0 %v2411
    %2743 = vmatpush1.bf16.msra.mxu0 %v2410
    %2744 = vmatprep.subr.bf16.mxu0 %v2407
    %2745 = vmatpush1.bf16.msra.mxu0 %v2406
    %2746 = vmatprep.subr.bf16.mxu0 %v2403
    %2747 = vmatpush1.bf16.msra.mxu0 %v2402
    %2748 = vmatprep.subr.bf16.mxu0 %v2399
    %2749 = vmatpush1.bf16.msra.mxu0 %v2398
    %2750 = vmatprep.subr.bf16.mxu0 %v2459
    %2751 = vmatpush2.bf16.msra.mxu0 %v2458
    %2752 = vmatprep.subr.bf16.mxu0 %v2455
    %2753 = vmatpush2.bf16.msra.mxu0 %v2454
    %2754 = vmatprep.subr.bf16.mxu0 %v2451
    %2755 = vmatpush2.bf16.msra.mxu0 %v2450
    %2756 = vmatprep.subr.bf16.mxu0 %v2447
    %2757 = vmatpush2.bf16.msra.mxu0 %v2446
    %2758 = vmatprep.subr.bf16.mxu0 %v2443
    %2759 = vmatpush2.bf16.msra.mxu0 %v2442
    %2760 = vmatprep.subr.bf16.mxu0 %v2439
    %2761 = vmatpush2.bf16.msra.mxu0 %v2438
    %2762 = vmatprep.subr.bf16.mxu0 %v2435
    %2763 = vmatpush2.bf16.msra.mxu0 %v2434
    %2764 = vmatprep.subr.bf16.mxu0 %v2431
    %2765 = vmatpush2.bf16.msra.mxu0 %v2430
    %2766 = vmatprep.mubr.bf16.mxu0 %v1859
    %2767 = vmatmul.mubr.bf16.gmra.mxu0 %v1858
    %v2768 = vpop.f32.mrf.mxu0
    %v2769 = vadd.f32 %v2003, %v2768
    %v2770 = vpop.f32.mrf.mxu0
    %v2771 = vadd.f32 %v2007, %v2770
    %v2772 = vpop.f32.mrf.mxu0
    %v2773 = vpop.f32.mrf.mxu0
    %2774 = vdwg.mxu0
    %2775 = vmatprep.subr.bf16.mxu0 %v2491
    %2776 = vmatpush1.bf16.msra.mxu0 %v2490
    %2777 = vmatprep.subr.bf16.mxu0 %v2487
    %2778 = vmatpush1.bf16.msra.mxu0 %v2486
    %2779 = vmatprep.subr.bf16.mxu0 %v2483
    %2780 = vmatpush1.bf16.msra.mxu0 %v2482
    %2781 = vmatprep.subr.bf16.mxu0 %v2479
    %2782 = vmatpush1.bf16.msra.mxu0 %v2478
    %2783 = vmatprep.subr.bf16.mxu0 %v2475
    %2784 = vmatpush1.bf16.msra.mxu0 %v2474
    %2785 = vmatprep.subr.bf16.mxu0 %v2471
    %2786 = vmatpush1.bf16.msra.mxu0 %v2470
    %2787 = vmatprep.subr.bf16.mxu0 %v2467
    %2788 = vmatpush1.bf16.msra.mxu0 %v2466
    %2789 = vmatprep.subr.bf16.mxu0 %v2463
    %2790 = vmatpush1.bf16.msra.mxu0 %v2462
    %2791 = vmatprep.subr.bf16.mxu0 %v2523
    %2792 = vmatpush2.bf16.msra.mxu0 %v2522
    %2793 = vmatprep.subr.bf16.mxu0 %v2519
    %2794 = vmatpush2.bf16.msra.mxu0 %v2518
    %2795 = vmatprep.subr.bf16.mxu0 %v2515
    %2796 = vmatpush2.bf16.msra.mxu0 %v2514
    %2797 = vmatprep.subr.bf16.mxu0 %v2511
    %2798 = vmatpush2.bf16.msra.mxu0 %v2510
    %2799 = vmatprep.subr.bf16.mxu0 %v2507
    %2800 = vmatpush2.bf16.msra.mxu0 %v2506
    %2801 = vmatprep.subr.bf16.mxu0 %v2503
    %2802 = vmatpush2.bf16.msra.mxu0 %v2502
    %2803 = vmatprep.subr.bf16.mxu0 %v2499
    %2804 = vmatpush2.bf16.msra.mxu0 %v2498
    %2805 = vmatprep.subr.bf16.mxu0 %v2495
    %2806 = vmatpush2.bf16.msra.mxu0 %v2494
    %2807 = vmatprep.mubr.bf16.mxu0 %v1861
    %2808 = vmatmul.mubr.bf16.gmra.mxu0 %v1860
    %v2809 = vpop.f32.mrf.mxu0
    %v2810 = vadd.f32 %v2769, %v2809
    %v2811 = vpop.f32.mrf.mxu0
    %v2812 = vadd.f32 %v2771, %v2811
    %v2813 = vpop.f32.mrf.mxu0
    %v2814 = vpop.f32.mrf.mxu0
    %2815 = vdwg.mxu0
    %v2816 = vmax.f32 %v2728, 0.0
    %v2817 = vmax.f32 %v2730, 0.0
    %v2818 = vmax.f32 %v2810, 0.0
    %v2819 = vmax.f32 %v2812, 0.0
    %v2820 = vpack.c.bf16 %v2816, %v2816
    %v2821 = vpack.c.bf16 %v2817, %v2817
    %v2822 = vpack.c.bf16 %v2818, %v2818
    %v2823 = vpack.c.bf16 %v2819, %v2819
    %v2824 = vld [vmem:[#allocation10] sm:$0xff]
    %v2825 = vld [vmem:[#allocation10 + $0x8] sm:$0xff]
    %v2826 = vld [vmem:[#allocation10 + $0x10] sm:$0xff]
    %v2827 = vld [vmem:[#allocation10 + $0x18] sm:$0xff]
    %v2828 = vld [vmem:[#allocation10 + $0x20] sm:$0xff]
    %v2829 = vld [vmem:[#allocation10 + $0x28] sm:$0xff]
    %v2830 = vld [vmem:[#allocation10 + $0x30] sm:$0xff]
    %v2831 = vld [vmem:[#allocation10 + $0x38] sm:$0xff]
    %v2832 = vld [vmem:[#allocation10 + $0x40] sm:$0xff]
    %v2833 = vld [vmem:[#allocation10 + $0x48] sm:$0xff]
    %v2834 = vld [vmem:[#allocation10 + $0x50] sm:$0xff]
    %v2835 = vld [vmem:[#allocation10 + $0x58] sm:$0xff]
    %v2836 = vld [vmem:[#allocation10 + $0x60] sm:$0xff]
    %v2837 = vld [vmem:[#allocation10 + $0x68] sm:$0xff]
    %v2838 = vld [vmem:[#allocation10 + $0x70] sm:$0xff]
    %v2839 = vld [vmem:[#allocation10 + $0x78] sm:$0xff]
    %v2840 = vld [vmem:[#allocation10 + $0x80] sm:$0xff]
    %v2841 = vld [vmem:[#allocation10 + $0x88] sm:$0xff]
    %v2842 = vld [vmem:[#allocation10 + $0x90] sm:$0xff]
    %v2843 = vld [vmem:[#allocation10 + $0x98] sm:$0xff]
    %v2844 = vld [vmem:[#allocation10 + $0xa0] sm:$0xff]
    %v2845 = vld [vmem:[#allocation10 + $0xa8] sm:$0xff]
    %v2846 = vld [vmem:[#allocation10 + $0xb0] sm:$0xff]
    %v2847 = vld [vmem:[#allocation10 + $0xb8] sm:$0xff]
    %v2848 = vld [vmem:[#allocation10 + $0xc0] sm:$0xff]
    %v2849 = vld [vmem:[#allocation10 + $0xc8] sm:$0xff]
    %v2850 = vld [vmem:[#allocation10 + $0xd0] sm:$0xff]
    %v2851 = vld [vmem:[#allocation10 + $0xd8] sm:$0xff]
    %v2852 = vld [vmem:[#allocation10 + $0xe0] sm:$0xff]
    %v2853 = vld [vmem:[#allocation10 + $0xe8] sm:$0xff]
    %v2854 = vld [vmem:[#allocation10 + $0xf0] sm:$0xff]
    %v2855 = vld [vmem:[#allocation10 + $0xf8] sm:$0xff]
    %v2856 = vld [vmem:[#allocation10 + $0x100] sm:$0xff]
    %v2857 = vld [vmem:[#allocation10 + $0x108] sm:$0xff]
    %v2858 = vld [vmem:[#allocation10 + $0x110] sm:$0xff]
    %v2859 = vld [vmem:[#allocation10 + $0x118] sm:$0xff]
    %v2860 = vld [vmem:[#allocation10 + $0x120] sm:$0xff]
    %v2861 = vld [vmem:[#allocation10 + $0x128] sm:$0xff]
    %v2862 = vld [vmem:[#allocation10 + $0x130] sm:$0xff]
    %v2863 = vld [vmem:[#allocation10 + $0x138] sm:$0xff]
    %v2864 = vld [vmem:[#allocation10 + $0x140] sm:$0xff]
    %v2865 = vld [vmem:[#allocation10 + $0x148] sm:$0xff]
    %v2866 = vld [vmem:[#allocation10 + $0x150] sm:$0xff]
    %v2867 = vld [vmem:[#allocation10 + $0x158] sm:$0xff]
    %v2868 = vld [vmem:[#allocation10 + $0x160] sm:$0xff]
    %v2869 = vld [vmem:[#allocation10 + $0x168] sm:$0xff]
    %v2870 = vld [vmem:[#allocation10 + $0x170] sm:$0xff]
    %v2871 = vld [vmem:[#allocation10 + $0x178] sm:$0xff]
    %v2872 = vld [vmem:[#allocation10 + $0x180] sm:$0xff]
    %v2873 = vld [vmem:[#allocation10 + $0x188] sm:$0xff]
    %v2874 = vld [vmem:[#allocation10 + $0x190] sm:$0xff]
    %v2875 = vld [vmem:[#allocation10 + $0x198] sm:$0xff]
    %v2876 = vld [vmem:[#allocation10 + $0x1a0] sm:$0xff]
    %v2877 = vld [vmem:[#allocation10 + $0x1a8] sm:$0xff]
    %v2878 = vld [vmem:[#allocation10 + $0x1b0] sm:$0xff]
    %v2879 = vld [vmem:[#allocation10 + $0x1b8] sm:$0xff]
    %v2880 = vld [vmem:[#allocation10 + $0x1c0] sm:$0xff]
    %v2881 = vld [vmem:[#allocation10 + $0x1c8] sm:$0xff]
    %v2882 = vld [vmem:[#allocation10 + $0x1d0] sm:$0xff]
    %v2883 = vld [vmem:[#allocation10 + $0x1d8] sm:$0xff]
    %v2884 = vld [vmem:[#allocation10 + $0x1e0] sm:$0xff]
    %v2885 = vld [vmem:[#allocation10 + $0x1e8] sm:$0xff]
    %v2886 = vld [vmem:[#allocation10 + $0x1f0] sm:$0xff]
    %v2887 = vld [vmem:[#allocation10 + $0x1f8] sm:$0xff]
    %v2888 = vld [vmem:[#allocation10 + $0x200] sm:$0xff]
    %v2889 = vld [vmem:[#allocation10 + $0x208] sm:$0xff]
    %v2890 = vld [vmem:[#allocation10 + $0x210] sm:$0xff]
    %v2891 = vld [vmem:[#allocation10 + $0x218] sm:$0xff]
    %v2892 = vld [vmem:[#allocation10 + $0x220] sm:$0xff]
    %v2893 = vld [vmem:[#allocation10 + $0x228] sm:$0xff]
    %v2894 = vld [vmem:[#allocation10 + $0x230] sm:$0xff]
    %v2895 = vld [vmem:[#allocation10 + $0x238] sm:$0xff]
    %v2896 = vld [vmem:[#allocation10 + $0x240] sm:$0xff]
    %v2897 = vld [vmem:[#allocation10 + $0x248] sm:$0xff]
    %v2898 = vld [vmem:[#allocation10 + $0x250] sm:$0xff]
    %v2899 = vld [vmem:[#allocation10 + $0x258] sm:$0xff]
    %v2900 = vld [vmem:[#allocation10 + $0x260] sm:$0xff]
    %v2901 = vld [vmem:[#allocation10 + $0x268] sm:$0xff]
    %v2902 = vld [vmem:[#allocation10 + $0x270] sm:$0xff]
    %v2903 = vld [vmem:[#allocation10 + $0x278] sm:$0xff]
    %v2904 = vld [vmem:[#allocation10 + $0x280] sm:$0xff]
    %v2905 = vld [vmem:[#allocation10 + $0x288] sm:$0xff]
    %v2906 = vld [vmem:[#allocation10 + $0x290] sm:$0xff]
    %v2907 = vld [vmem:[#allocation10 + $0x298] sm:$0xff]
    %v2908 = vld [vmem:[#allocation10 + $0x2a0] sm:$0xff]
    %v2909 = vld [vmem:[#allocation10 + $0x2a8] sm:$0xff]
    %v2910 = vld [vmem:[#allocation10 + $0x2b0] sm:$0xff]
    %v2911 = vld [vmem:[#allocation10 + $0x2b8] sm:$0xff]
    %v2912 = vld [vmem:[#allocation10 + $0x2c0] sm:$0xff]
    %v2913 = vld [vmem:[#allocation10 + $0x2c8] sm:$0xff]
    %v2914 = vld [vmem:[#allocation10 + $0x2d0] sm:$0xff]
    %v2915 = vld [vmem:[#allocation10 + $0x2d8] sm:$0xff]
    %v2916 = vld [vmem:[#allocation10 + $0x2e0] sm:$0xff]
    %v2917 = vld [vmem:[#allocation10 + $0x2e8] sm:$0xff]
    %v2918 = vld [vmem:[#allocation10 + $0x2f0] sm:$0xff]
    %v2919 = vld [vmem:[#allocation10 + $0x2f8] sm:$0xff]
    %v2920 = vld [vmem:[#allocation10 + $0x300] sm:$0xff]
    %v2921 = vld [vmem:[#allocation10 + $0x308] sm:$0xff]
    %v2922 = vld [vmem:[#allocation10 + $0x310] sm:$0xff]
    %v2923 = vld [vmem:[#allocation10 + $0x318] sm:$0xff]
    %v2924 = vld [vmem:[#allocation10 + $0x320] sm:$0xff]
    %v2925 = vld [vmem:[#allocation10 + $0x328] sm:$0xff]
    %v2926 = vld [vmem:[#allocation10 + $0x330] sm:$0xff]
    %v2927 = vld [vmem:[#allocation10 + $0x338] sm:$0xff]
    %v2928 = vld [vmem:[#allocation10 + $0x340] sm:$0xff]
    %v2929 = vld [vmem:[#allocation10 + $0x348] sm:$0xff]
    %v2930 = vld [vmem:[#allocation10 + $0x350] sm:$0xff]
    %v2931 = vld [vmem:[#allocation10 + $0x358] sm:$0xff]
    %v2932 = vld [vmem:[#allocation10 + $0x360] sm:$0xff]
    %v2933 = vld [vmem:[#allocation10 + $0x368] sm:$0xff]
    %v2934 = vld [vmem:[#allocation10 + $0x370] sm:$0xff]
    %v2935 = vld [vmem:[#allocation10 + $0x378] sm:$0xff]
    %v2936 = vld [vmem:[#allocation10 + $0x380] sm:$0xff]
    %v2937 = vld [vmem:[#allocation10 + $0x388] sm:$0xff]
    %v2938 = vld [vmem:[#allocation10 + $0x390] sm:$0xff]
    %v2939 = vld [vmem:[#allocation10 + $0x398] sm:$0xff]
    %v2940 = vld [vmem:[#allocation10 + $0x3a0] sm:$0xff]
    %v2941 = vld [vmem:[#allocation10 + $0x3a8] sm:$0xff]
    %v2942 = vld [vmem:[#allocation10 + $0x3b0] sm:$0xff]
    %v2943 = vld [vmem:[#allocation10 + $0x3b8] sm:$0xff]
    %v2944 = vld [vmem:[#allocation10 + $0x3c0] sm:$0xff]
    %v2945 = vld [vmem:[#allocation10 + $0x3c8] sm:$0xff]
    %v2946 = vld [vmem:[#allocation10 + $0x3d0] sm:$0xff]
    %v2947 = vld [vmem:[#allocation10 + $0x3d8] sm:$0xff]
    %v2948 = vld [vmem:[#allocation10 + $0x3e0] sm:$0xff]
    %v2949 = vld [vmem:[#allocation10 + $0x3e8] sm:$0xff]
    %v2950 = vld [vmem:[#allocation10 + $0x3f0] sm:$0xff]
    %v2951 = vld [vmem:[#allocation10 + $0x3f8] sm:$0xff]
    %v2952 = vld [vmem:[%s6] sm:$0xf]
    %v2954 = vlaneseq
    %v2955 = vshrl.u32 %v2954, 7
    %v2956 = vsub.s32 0, %v2955
    %v2957 = vrot.slane %v2952, %v2956
    %v2958 = vlaneseq
    %v2959 = vshrl.u32 %v2958, 7
    %v2960 = vsub.s32 1, %v2959
    %v2961 = vrot.slane %v2952, %v2960
    %v2962 = vlaneseq
    %v2963 = vshrl.u32 %v2962, 7
    %v2964 = vsub.s32 2, %v2963
    %v2965 = vrot.slane %v2952, %v2964
    %v2966 = vlaneseq
    %v2967 = vshrl.u32 %v2966, 7
    %v2968 = vsub.s32 3, %v2967
    %v2969 = vrot.slane %v2952, %v2968
    %v3102 = vunpack.c.l.b16 %v2824
    %v3103 = vunpack.c.h.b16 %v2824
    %v3104 = vunpack.c.l.b16 %v2825
    %v3105 = vunpack.c.h.b16 %v2825
    %v3106 = vunpack.c.l.b16 %v2826
    %v3107 = vunpack.c.h.b16 %v2826
    %v3108 = vunpack.c.l.b16 %v2827
    %v3109 = vunpack.c.h.b16 %v2827
    %v3110 = vunpack.c.l.b16 %v2828
    %v3111 = vunpack.c.h.b16 %v2828
    %v3112 = vunpack.c.l.b16 %v2829
    %v3113 = vunpack.c.h.b16 %v2829
    %v3114 = vunpack.c.l.b16 %v2830
    %v3115 = vunpack.c.h.b16 %v2830
    %v3116 = vunpack.c.l.b16 %v2831
    %v3117 = vunpack.c.h.b16 %v2831
    %v3118 = vunpack.c.l.b16 %v2832
    %v3119 = vunpack.c.h.b16 %v2832
    %v3120 = vunpack.c.l.b16 %v2833
    %v3121 = vunpack.c.h.b16 %v2833
    %v3122 = vunpack.c.l.b16 %v2834
    %v3123 = vunpack.c.h.b16 %v2834
    %v3124 = vunpack.c.l.b16 %v2835
    %v3125 = vunpack.c.h.b16 %v2835
    %v3126 = vunpack.c.l.b16 %v2836
    %v3127 = vunpack.c.h.b16 %v2836
    %v3128 = vunpack.c.l.b16 %v2837
    %v3129 = vunpack.c.h.b16 %v2837
    %v3130 = vunpack.c.l.b16 %v2838
    %v3131 = vunpack.c.h.b16 %v2838
    %v3132 = vunpack.c.l.b16 %v2839
    %v3133 = vunpack.c.h.b16 %v2839
    %v3134 = vunpack.c.l.b16 %v2840
    %v3135 = vunpack.c.h.b16 %v2840
    %v3136 = vunpack.c.l.b16 %v2841
    %v3137 = vunpack.c.h.b16 %v2841
    %v3138 = vunpack.c.l.b16 %v2842
    %v3139 = vunpack.c.h.b16 %v2842
    %v3140 = vunpack.c.l.b16 %v2843
    %v3141 = vunpack.c.h.b16 %v2843
    %v3142 = vunpack.c.l.b16 %v2844
    %v3143 = vunpack.c.h.b16 %v2844
    %v3144 = vunpack.c.l.b16 %v2845
    %v3145 = vunpack.c.h.b16 %v2845
    %v3146 = vunpack.c.l.b16 %v2846
    %v3147 = vunpack.c.h.b16 %v2846
    %v3148 = vunpack.c.l.b16 %v2847
    %v3149 = vunpack.c.h.b16 %v2847
    %v3150 = vunpack.c.l.b16 %v2848
    %v3151 = vunpack.c.h.b16 %v2848
    %v3152 = vunpack.c.l.b16 %v2849
    %v3153 = vunpack.c.h.b16 %v2849
    %v3154 = vunpack.c.l.b16 %v2850
    %v3155 = vunpack.c.h.b16 %v2850
    %v3156 = vunpack.c.l.b16 %v2851
    %v3157 = vunpack.c.h.b16 %v2851
    %v3158 = vunpack.c.l.b16 %v2852
    %v3159 = vunpack.c.h.b16 %v2852
    %v3160 = vunpack.c.l.b16 %v2853
    %v3161 = vunpack.c.h.b16 %v2853
    %v3162 = vunpack.c.l.b16 %v2854
    %v3163 = vunpack.c.h.b16 %v2854
    %v3164 = vunpack.c.l.b16 %v2855
    %v3165 = vunpack.c.h.b16 %v2855
    %v3166 = vunpack.c.l.b16 %v2856
    %v3167 = vunpack.c.h.b16 %v2856
    %v3168 = vunpack.c.l.b16 %v2857
    %v3169 = vunpack.c.h.b16 %v2857
    %v3170 = vunpack.c.l.b16 %v2858
    %v3171 = vunpack.c.h.b16 %v2858
    %v3172 = vunpack.c.l.b16 %v2859
    %v3173 = vunpack.c.h.b16 %v2859
    %v3174 = vunpack.c.l.b16 %v2860
    %v3175 = vunpack.c.h.b16 %v2860
    %v3176 = vunpack.c.l.b16 %v2861
    %v3177 = vunpack.c.h.b16 %v2861
    %v3178 = vunpack.c.l.b16 %v2862
    %v3179 = vunpack.c.h.b16 %v2862
    %v3180 = vunpack.c.l.b16 %v2863
    %v3181 = vunpack.c.h.b16 %v2863
    %v3182 = vunpack.c.l.b16 %v2864
    %v3183 = vunpack.c.h.b16 %v2864
    %v3184 = vunpack.c.l.b16 %v2865
    %v3185 = vunpack.c.h.b16 %v2865
    %v3186 = vunpack.c.l.b16 %v2866
    %v3187 = vunpack.c.h.b16 %v2866
    %v3188 = vunpack.c.l.b16 %v2867
    %v3189 = vunpack.c.h.b16 %v2867
    %v3190 = vunpack.c.l.b16 %v2868
    %v3191 = vunpack.c.h.b16 %v2868
    %v3192 = vunpack.c.l.b16 %v2869
    %v3193 = vunpack.c.h.b16 %v2869
    %v3194 = vunpack.c.l.b16 %v2870
    %v3195 = vunpack.c.h.b16 %v2870
    %v3196 = vunpack.c.l.b16 %v2871
    %v3197 = vunpack.c.h.b16 %v2871
    %v3198 = vunpack.c.l.b16 %v2872
    %v3199 = vunpack.c.h.b16 %v2872
    %v3200 = vunpack.c.l.b16 %v2873
    %v3201 = vunpack.c.h.b16 %v2873
    %v3202 = vunpack.c.l.b16 %v2874
    %v3203 = vunpack.c.h.b16 %v2874
    %v3204 = vunpack.c.l.b16 %v2875
    %v3205 = vunpack.c.h.b16 %v2875
    %v3206 = vunpack.c.l.b16 %v2876
    %v3207 = vunpack.c.h.b16 %v2876
    %v3208 = vunpack.c.l.b16 %v2877
    %v3209 = vunpack.c.h.b16 %v2877
    %v3210 = vunpack.c.l.b16 %v2878
    %v3211 = vunpack.c.h.b16 %v2878
    %v3212 = vunpack.c.l.b16 %v2879
    %v3213 = vunpack.c.h.b16 %v2879
    %v3214 = vunpack.c.l.b16 %v2880
    %v3215 = vunpack.c.h.b16 %v2880
    %v3216 = vunpack.c.l.b16 %v2881
    %v3217 = vunpack.c.h.b16 %v2881
    %v3218 = vunpack.c.l.b16 %v2882
    %v3219 = vunpack.c.h.b16 %v2882
    %v3220 = vunpack.c.l.b16 %v2883
    %v3221 = vunpack.c.h.b16 %v2883
    %v3222 = vunpack.c.l.b16 %v2884
    %v3223 = vunpack.c.h.b16 %v2884
    %v3224 = vunpack.c.l.b16 %v2885
    %v3225 = vunpack.c.h.b16 %v2885
    %v3226 = vunpack.c.l.b16 %v2886
    %v3227 = vunpack.c.h.b16 %v2886
    %v3228 = vunpack.c.l.b16 %v2887
    %v3229 = vunpack.c.h.b16 %v2887
    %v3230 = vunpack.c.l.b16 %v2888
    %v3231 = vunpack.c.h.b16 %v2888
    %v3232 = vunpack.c.l.b16 %v2889
    %v3233 = vunpack.c.h.b16 %v2889
    %v3234 = vunpack.c.l.b16 %v2890
    %v3235 = vunpack.c.h.b16 %v2890
    %v3236 = vunpack.c.l.b16 %v2891
    %v3237 = vunpack.c.h.b16 %v2891
    %v3238 = vunpack.c.l.b16 %v2892
    %v3239 = vunpack.c.h.b16 %v2892
    %v3240 = vunpack.c.l.b16 %v2893
    %v3241 = vunpack.c.h.b16 %v2893
    %v3242 = vunpack.c.l.b16 %v2894
    %v3243 = vunpack.c.h.b16 %v2894
    %v3244 = vunpack.c.l.b16 %v2895
    %v3245 = vunpack.c.h.b16 %v2895
    %v3246 = vunpack.c.l.b16 %v2896
    %v3247 = vunpack.c.h.b16 %v2896
    %v3248 = vunpack.c.l.b16 %v2897
    %v3249 = vunpack.c.h.b16 %v2897
    %v3250 = vunpack.c.l.b16 %v2898
    %v3251 = vunpack.c.h.b16 %v2898
    %v3252 = vunpack.c.l.b16 %v2899
    %v3253 = vunpack.c.h.b16 %v2899
    %v3254 = vunpack.c.l.b16 %v2900
    %v3255 = vunpack.c.h.b16 %v2900
    %v3256 = vunpack.c.l.b16 %v2901
    %v3257 = vunpack.c.h.b16 %v2901
    %v3258 = vunpack.c.l.b16 %v2902
    %v3259 = vunpack.c.h.b16 %v2902
    %v3260 = vunpack.c.l.b16 %v2903
    %v3261 = vunpack.c.h.b16 %v2903
    %v3262 = vunpack.c.l.b16 %v2904
    %v3263 = vunpack.c.h.b16 %v2904
    %v3264 = vunpack.c.l.b16 %v2905
    %v3265 = vunpack.c.h.b16 %v2905
    %v3266 = vunpack.c.l.b16 %v2906
    %v3267 = vunpack.c.h.b16 %v2906
    %v3268 = vunpack.c.l.b16 %v2907
    %v3269 = vunpack.c.h.b16 %v2907
    %v3270 = vunpack.c.l.b16 %v2908
    %v3271 = vunpack.c.h.b16 %v2908
    %v3272 = vunpack.c.l.b16 %v2909
    %v3273 = vunpack.c.h.b16 %v2909
    %v3274 = vunpack.c.l.b16 %v2910
    %v3275 = vunpack.c.h.b16 %v2910
    %v3276 = vunpack.c.l.b16 %v2911
    %v3277 = vunpack.c.h.b16 %v2911
    %v3278 = vunpack.c.l.b16 %v2912
    %v3279 = vunpack.c.h.b16 %v2912
    %v3280 = vunpack.c.l.b16 %v2913
    %v3281 = vunpack.c.h.b16 %v2913
    %v3282 = vunpack.c.l.b16 %v2914
    %v3283 = vunpack.c.h.b16 %v2914
    %v3284 = vunpack.c.l.b16 %v2915
    %v3285 = vunpack.c.h.b16 %v2915
    %v3286 = vunpack.c.l.b16 %v2916
    %v3287 = vunpack.c.h.b16 %v2916
    %v3288 = vunpack.c.l.b16 %v2917
    %v3289 = vunpack.c.h.b16 %v2917
    %v3290 = vunpack.c.l.b16 %v2918
    %v3291 = vunpack.c.h.b16 %v2918
    %v3292 = vunpack.c.l.b16 %v2919
    %v3293 = vunpack.c.h.b16 %v2919
    %v3294 = vunpack.c.l.b16 %v2920
    %v3295 = vunpack.c.h.b16 %v2920
    %v3296 = vunpack.c.l.b16 %v2921
    %v3297 = vunpack.c.h.b16 %v2921
    %v3298 = vunpack.c.l.b16 %v2922
    %v3299 = vunpack.c.h.b16 %v2922
    %v3300 = vunpack.c.l.b16 %v2923
    %v3301 = vunpack.c.h.b16 %v2923
    %v3302 = vunpack.c.l.b16 %v2924
    %v3303 = vunpack.c.h.b16 %v2924
    %v3304 = vunpack.c.l.b16 %v2925
    %v3305 = vunpack.c.h.b16 %v2925
    %v3306 = vunpack.c.l.b16 %v2926
    %v3307 = vunpack.c.h.b16 %v2926
    %v3308 = vunpack.c.l.b16 %v2927
    %v3309 = vunpack.c.h.b16 %v2927
    %v3310 = vunpack.c.l.b16 %v2928
    %v3311 = vunpack.c.h.b16 %v2928
    %v3312 = vunpack.c.l.b16 %v2929
    %v3313 = vunpack.c.h.b16 %v2929
    %v3314 = vunpack.c.l.b16 %v2930
    %v3315 = vunpack.c.h.b16 %v2930
    %v3316 = vunpack.c.l.b16 %v2931
    %v3317 = vunpack.c.h.b16 %v2931
    %v3318 = vunpack.c.l.b16 %v2932
    %v3319 = vunpack.c.h.b16 %v2932
    %v3320 = vunpack.c.l.b16 %v2933
    %v3321 = vunpack.c.h.b16 %v2933
    %v3322 = vunpack.c.l.b16 %v2934
    %v3323 = vunpack.c.h.b16 %v2934
    %v3324 = vunpack.c.l.b16 %v2935
    %v3325 = vunpack.c.h.b16 %v2935
    %v3326 = vunpack.c.l.b16 %v2936
    %v3327 = vunpack.c.h.b16 %v2936
    %v3328 = vunpack.c.l.b16 %v2937
    %v3329 = vunpack.c.h.b16 %v2937
    %v3330 = vunpack.c.l.b16 %v2938
    %v3331 = vunpack.c.h.b16 %v2938
    %v3332 = vunpack.c.l.b16 %v2939
    %v3333 = vunpack.c.h.b16 %v2939
    %v3334 = vunpack.c.l.b16 %v2940
    %v3335 = vunpack.c.h.b16 %v2940
    %v3336 = vunpack.c.l.b16 %v2941
    %v3337 = vunpack.c.h.b16 %v2941
    %v3338 = vunpack.c.l.b16 %v2942
    %v3339 = vunpack.c.h.b16 %v2942
    %v3340 = vunpack.c.l.b16 %v2943
    %v3341 = vunpack.c.h.b16 %v2943
    %v3342 = vunpack.c.l.b16 %v2944
    %v3343 = vunpack.c.h.b16 %v2944
    %v3344 = vunpack.c.l.b16 %v2945
    %v3345 = vunpack.c.h.b16 %v2945
    %v3346 = vunpack.c.l.b16 %v2946
    %v3347 = vunpack.c.h.b16 %v2946
    %v3348 = vunpack.c.l.b16 %v2947
    %v3349 = vunpack.c.h.b16 %v2947
    %v3350 = vunpack.c.l.b16 %v2948
    %v3351 = vunpack.c.h.b16 %v2948
    %v3352 = vunpack.c.l.b16 %v2949
    %v3353 = vunpack.c.h.b16 %v2949
    %v3354 = vunpack.c.l.b16 %v2950
    %v3355 = vunpack.c.h.b16 %v2950
    %v3356 = vunpack.c.l.b16 %v2951
    %v3357 = vunpack.c.h.b16 %v2951
    %v3358 = vpack.c.b16 %v3106, %v3102
    %v3359 = vpack.c.b16 %v3107, %v3103
    %v3360 = vpack.c.b16 %v3108, %v3104
    %v3361 = vpack.c.b16 %v3109, %v3105
    %v3362 = vpack.c.b16 %v3114, %v3110
    %v3363 = vpack.c.b16 %v3115, %v3111
    %v3364 = vpack.c.b16 %v3116, %v3112
    %v3365 = vpack.c.b16 %v3117, %v3113
    %v3366 = vpack.c.b16 %v3122, %v3118
    %v3367 = vpack.c.b16 %v3123, %v3119
    %v3368 = vpack.c.b16 %v3124, %v3120
    %v3369 = vpack.c.b16 %v3125, %v3121
    %v3370 = vpack.c.b16 %v3130, %v3126
    %v3371 = vpack.c.b16 %v3131, %v3127
    %v3372 = vpack.c.b16 %v3132, %v3128
    %v3373 = vpack.c.b16 %v3133, %v3129
    %v3374 = vpack.c.b16 %v3138, %v3134
    %v3375 = vpack.c.b16 %v3139, %v3135
    %v3376 = vpack.c.b16 %v3140, %v3136
    %v3377 = vpack.c.b16 %v3141, %v3137
    %v3378 = vpack.c.b16 %v3146, %v3142
    %v3379 = vpack.c.b16 %v3147, %v3143
    %v3380 = vpack.c.b16 %v3148, %v3144
    %v3381 = vpack.c.b16 %v3149, %v3145
    %v3382 = vpack.c.b16 %v3154, %v3150
    %v3383 = vpack.c.b16 %v3155, %v3151
    %v3384 = vpack.c.b16 %v3156, %v3152
    %v3385 = vpack.c.b16 %v3157, %v3153
    %v3386 = vpack.c.b16 %v3162, %v3158
    %v3387 = vpack.c.b16 %v3163, %v3159
    %v3388 = vpack.c.b16 %v3164, %v3160
    %v3389 = vpack.c.b16 %v3165, %v3161
    %v3390 = vpack.c.b16 %v3170, %v3166
    %v3391 = vpack.c.b16 %v3171, %v3167
    %v3392 = vpack.c.b16 %v3172, %v3168
    %v3393 = vpack.c.b16 %v3173, %v3169
    %v3394 = vpack.c.b16 %v3178, %v3174
    %v3395 = vpack.c.b16 %v3179, %v3175
    %v3396 = vpack.c.b16 %v3180, %v3176
    %v3397 = vpack.c.b16 %v3181, %v3177
    %v3398 = vpack.c.b16 %v3186, %v3182
    %v3399 = vpack.c.b16 %v3187, %v3183
    %v3400 = vpack.c.b16 %v3188, %v3184
    %v3401 = vpack.c.b16 %v3189, %v3185
    %v3402 = vpack.c.b16 %v3194, %v3190
    %v3403 = vpack.c.b16 %v3195, %v3191
    %v3404 = vpack.c.b16 %v3196, %v3192
    %v3405 = vpack.c.b16 %v3197, %v3193
    %v3406 = vpack.c.b16 %v3202, %v3198
    %v3407 = vpack.c.b16 %v3203, %v3199
    %v3408 = vpack.c.b16 %v3204, %v3200
    %v3409 = vpack.c.b16 %v3205, %v3201
    %v3410 = vpack.c.b16 %v3210, %v3206
    %v3411 = vpack.c.b16 %v3211, %v3207
    %v3412 = vpack.c.b16 %v3212, %v3208
    %v3413 = vpack.c.b16 %v3213, %v3209
    %v3414 = vpack.c.b16 %v3218, %v3214
    %v3415 = vpack.c.b16 %v3219, %v3215
    %v3416 = vpack.c.b16 %v3220, %v3216
    %v3417 = vpack.c.b16 %v3221, %v3217
    %v3418 = vpack.c.b16 %v3226, %v3222
    %v3419 = vpack.c.b16 %v3227, %v3223
    %v3420 = vpack.c.b16 %v3228, %v3224
    %v3421 = vpack.c.b16 %v3229, %v3225
    %v3422 = vpack.c.b16 %v3234, %v3230
    %v3423 = vpack.c.b16 %v3235, %v3231
    %v3424 = vpack.c.b16 %v3236, %v3232
    %v3425 = vpack.c.b16 %v3237, %v3233
    %v3426 = vpack.c.b16 %v3242, %v3238
    %v3427 = vpack.c.b16 %v3243, %v3239
    %v3428 = vpack.c.b16 %v3244, %v3240
    %v3429 = vpack.c.b16 %v3245, %v3241
    %v3430 = vpack.c.b16 %v3250, %v3246
    %v3431 = vpack.c.b16 %v3251, %v3247
    %v3432 = vpack.c.b16 %v3252, %v3248
    %v3433 = vpack.c.b16 %v3253, %v3249
    %v3434 = vpack.c.b16 %v3258, %v3254
    %v3435 = vpack.c.b16 %v3259, %v3255
    %v3436 = vpack.c.b16 %v3260, %v3256
    %v3437 = vpack.c.b16 %v3261, %v3257
    %v3438 = vpack.c.b16 %v3266, %v3262
    %v3439 = vpack.c.b16 %v3267, %v3263
    %v3440 = vpack.c.b16 %v3268, %v3264
    %v3441 = vpack.c.b16 %v3269, %v3265
    %v3442 = vpack.c.b16 %v3274, %v3270
    %v3443 = vpack.c.b16 %v3275, %v3271
    %v3444 = vpack.c.b16 %v3276, %v3272
    %v3445 = vpack.c.b16 %v3277, %v3273
    %v3446 = vpack.c.b16 %v3282, %v3278
    %v3447 = vpack.c.b16 %v3283, %v3279
    %v3448 = vpack.c.b16 %v3284, %v3280
    %v3449 = vpack.c.b16 %v3285, %v3281
    %v3450 = vpack.c.b16 %v3290, %v3286
    %v3451 = vpack.c.b16 %v3291, %v3287
    %v3452 = vpack.c.b16 %v3292, %v3288
    %v3453 = vpack.c.b16 %v3293, %v3289
    %v3454 = vpack.c.b16 %v3298, %v3294
    %v3455 = vpack.c.b16 %v3299, %v3295
    %v3456 = vpack.c.b16 %v3300, %v3296
    %v3457 = vpack.c.b16 %v3301, %v3297
    %v3458 = vpack.c.b16 %v3306, %v3302
    %v3459 = vpack.c.b16 %v3307, %v3303
    %v3460 = vpack.c.b16 %v3308, %v3304
    %v3461 = vpack.c.b16 %v3309, %v3305
    %v3462 = vpack.c.b16 %v3314, %v3310
    %v3463 = vpack.c.b16 %v3315, %v3311
    %v3464 = vpack.c.b16 %v3316, %v3312
    %v3465 = vpack.c.b16 %v3317, %v3313
    %v3466 = vpack.c.b16 %v3322, %v3318
    %v3467 = vpack.c.b16 %v3323, %v3319
    %v3468 = vpack.c.b16 %v3324, %v3320
    %v3469 = vpack.c.b16 %v3325, %v3321
    %v3470 = vpack.c.b16 %v3330, %v3326
    %v3471 = vpack.c.b16 %v3331, %v3327
    %v3472 = vpack.c.b16 %v3332, %v3328
    %v3473 = vpack.c.b16 %v3333, %v3329
    %v3474 = vpack.c.b16 %v3338, %v3334
    %v3475 = vpack.c.b16 %v3339, %v3335
    %v3476 = vpack.c.b16 %v3340, %v3336
    %v3477 = vpack.c.b16 %v3341, %v3337
    %v3478 = vpack.c.b16 %v3346, %v3342
    %v3479 = vpack.c.b16 %v3347, %v3343
    %v3480 = vpack.c.b16 %v3348, %v3344
    %v3481 = vpack.c.b16 %v3349, %v3345
    %v3482 = vpack.c.b16 %v3354, %v3350
    %v3483 = vpack.c.b16 %v3355, %v3351
    %v3484 = vpack.c.b16 %v3356, %v3352
    %v3485 = vpack.c.b16 %v3357, %v3353
    %3614 = vmatprep.subr.bf16.mxu0 %v3387
    %3615 = vmatpush1.bf16.msra.mxu0 %v3386
    %3616 = vmatprep.subr.bf16.mxu0 %v3383
    %3617 = vmatpush1.bf16.msra.mxu0 %v3382
    %3618 = vmatprep.subr.bf16.mxu0 %v3379
    %3619 = vmatpush1.bf16.msra.mxu0 %v3378
    %3620 = vmatprep.subr.bf16.mxu0 %v3375
    %3621 = vmatpush1.bf16.msra.mxu0 %v3374
    %3622 = vmatprep.subr.bf16.mxu0 %v3371
    %3623 = vmatpush1.bf16.msra.mxu0 %v3370
    %3624 = vmatprep.subr.bf16.mxu0 %v3367
    %3625 = vmatpush1.bf16.msra.mxu0 %v3366
    %3626 = vmatprep.subr.bf16.mxu0 %v3363
    %3627 = vmatpush1.bf16.msra.mxu0 %v3362
    %3628 = vmatprep.subr.bf16.mxu0 %v3359
    %3629 = vmatpush1.bf16.msra.mxu0 %v3358
    %3630 = vmatprep.subr.bf16.mxu0 %v3419
    %3631 = vmatpush2.bf16.msra.mxu0 %v3418
    %3632 = vmatprep.subr.bf16.mxu0 %v3415
    %3633 = vmatpush2.bf16.msra.mxu0 %v3414
    %3634 = vmatprep.subr.bf16.mxu0 %v3411
    %3635 = vmatpush2.bf16.msra.mxu0 %v3410
    %3636 = vmatprep.subr.bf16.mxu0 %v3407
    %3637 = vmatpush2.bf16.msra.mxu0 %v3406
    %3638 = vmatprep.subr.bf16.mxu0 %v3403
    %3639 = vmatpush2.bf16.msra.mxu0 %v3402
    %3640 = vmatprep.subr.bf16.mxu0 %v3399
    %3641 = vmatpush2.bf16.msra.mxu0 %v3398
    %3642 = vmatprep.subr.bf16.mxu0 %v3395
    %3643 = vmatpush2.bf16.msra.mxu0 %v3394
    %3644 = vmatprep.subr.bf16.mxu0 %v3391
    %3645 = vmatpush2.bf16.msra.mxu0 %v3390
    %3646 = vmatprep.mubr.bf16.mxu0 %v2821
    %3647 = vmatmul.mubr.bf16.gmra.mxu0 %v2820
    %v3648 = vpop.f32.mrf.mxu0
    %v3649 = vadd.f32 %v2957, %v3648
    %v3650 = vpop.f32.mrf.mxu0
    %v3651 = vadd.f32 %v2961, %v3650
    %v3652 = vpop.f32.mrf.mxu0
    %v3653 = vpop.f32.mrf.mxu0
    %3654 = vdwg.mxu0
    %3655 = vmatprep.subr.bf16.mxu0 %v3451
    %3656 = vmatpush1.bf16.msra.mxu0 %v3450
    %3657 = vmatprep.subr.bf16.mxu0 %v3447
    %3658 = vmatpush1.bf16.msra.mxu0 %v3446
    %3659 = vmatprep.subr.bf16.mxu0 %v3443
    %3660 = vmatpush1.bf16.msra.mxu0 %v3442
    %3661 = vmatprep.subr.bf16.mxu0 %v3439
    %3662 = vmatpush1.bf16.msra.mxu0 %v3438
    %3663 = vmatprep.subr.bf16.mxu0 %v3435
    %3664 = vmatpush1.bf16.msra.mxu0 %v3434
    %3665 = vmatprep.subr.bf16.mxu0 %v3431
    %3666 = vmatpush1.bf16.msra.mxu0 %v3430
    %3667 = vmatprep.subr.bf16.mxu0 %v3427
    %3668 = vmatpush1.bf16.msra.mxu0 %v3426
    %3669 = vmatprep.subr.bf16.mxu0 %v3423
    %3670 = vmatpush1.bf16.msra.mxu0 %v3422
    %3671 = vmatprep.subr.bf16.mxu0 %v3483
    %3672 = vmatpush2.bf16.msra.mxu0 %v3482
    %3673 = vmatprep.subr.bf16.mxu0 %v3479
    %3674 = vmatpush2.bf16.msra.mxu0 %v3478
    %3675 = vmatprep.subr.bf16.mxu0 %v3475
    %3676 = vmatpush2.bf16.msra.mxu0 %v3474
    %3677 = vmatprep.subr.bf16.mxu0 %v3471
    %3678 = vmatpush2.bf16.msra.mxu0 %v3470
    %3679 = vmatprep.subr.bf16.mxu0 %v3467
    %3680 = vmatpush2.bf16.msra.mxu0 %v3466
    %3681 = vmatprep.subr.bf16.mxu0 %v3463
    %3682 = vmatpush2.bf16.msra.mxu0 %v3462
    %3683 = vmatprep.subr.bf16.mxu0 %v3459
    %3684 = vmatpush2.bf16.msra.mxu0 %v3458
    %3685 = vmatprep.subr.bf16.mxu0 %v3455
    %3686 = vmatpush2.bf16.msra.mxu0 %v3454
    %3687 = vmatprep.mubr.bf16.mxu0 %v2823
    %3688 = vmatmul.mubr.bf16.gmra.mxu0 %v2822
    %v3689 = vpop.f32.mrf.mxu0
    %v3690 = vadd.f32 %v3649, %v3689
    %v3691 = vpop.f32.mrf.mxu0
    %v3692 = vadd.f32 %v3651, %v3691
    %v3693 = vpop.f32.mrf.mxu0
    %v3694 = vpop.f32.mrf.mxu0
    %3695 = vdwg.mxu0
    %3696 = vmatprep.subr.bf16.mxu0 %v3389
    %3697 = vmatpush1.bf16.msra.mxu0 %v3388
    %3698 = vmatprep.subr.bf16.mxu0 %v3385
    %3699 = vmatpush1.bf16.msra.mxu0 %v3384
    %3700 = vmatprep.subr.bf16.mxu0 %v3381
    %3701 = vmatpush1.bf16.msra.mxu0 %v3380
    %3702 = vmatprep.subr.bf16.mxu0 %v3377
    %3703 = vmatpush1.bf16.msra.mxu0 %v3376
    %3704 = vmatprep.subr.bf16.mxu0 %v3373
    %3705 = vmatpush1.bf16.msra.mxu0 %v3372
    %3706 = vmatprep.subr.bf16.mxu0 %v3369
    %3707 = vmatpush1.bf16.msra.mxu0 %v3368
    %3708 = vmatprep.subr.bf16.mxu0 %v3365
    %3709 = vmatpush1.bf16.msra.mxu0 %v3364
    %3710 = vmatprep.subr.bf16.mxu0 %v3361
    %3711 = vmatpush1.bf16.msra.mxu0 %v3360
    %3712 = vmatprep.subr.bf16.mxu0 %v3421
    %3713 = vmatpush2.bf16.msra.mxu0 %v3420
    %3714 = vmatprep.subr.bf16.mxu0 %v3417
    %3715 = vmatpush2.bf16.msra.mxu0 %v3416
    %3716 = vmatprep.subr.bf16.mxu0 %v3413
    %3717 = vmatpush2.bf16.msra.mxu0 %v3412
    %3718 = vmatprep.subr.bf16.mxu0 %v3409
    %3719 = vmatpush2.bf16.msra.mxu0 %v3408
    %3720 = vmatprep.subr.bf16.mxu0 %v3405
    %3721 = vmatpush2.bf16.msra.mxu0 %v3404
    %3722 = vmatprep.subr.bf16.mxu0 %v3401
    %3723 = vmatpush2.bf16.msra.mxu0 %v3400
    %3724 = vmatprep.subr.bf16.mxu0 %v3397
    %3725 = vmatpush2.bf16.msra.mxu0 %v3396
    %3726 = vmatprep.subr.bf16.mxu0 %v3393
    %3727 = vmatpush2.bf16.msra.mxu0 %v3392
    %3728 = vmatprep.mubr.bf16.mxu0 %v2821
    %3729 = vmatmul.mubr.bf16.gmra.mxu0 %v2820
    %v3730 = vpop.f32.mrf.mxu0
    %v3731 = vadd.f32 %v2965, %v3730
    %v3732 = vpop.f32.mrf.mxu0
    %v3733 = vadd.f32 %v2969, %v3732
    %v3734 = vpop.f32.mrf.mxu0
    %v3735 = vpop.f32.mrf.mxu0
    %3736 = vdwg.mxu0
    %3737 = vmatprep.subr.bf16.mxu0 %v3453
    %3738 = vmatpush1.bf16.msra.mxu0 %v3452
    %3739 = vmatprep.subr.bf16.mxu0 %v3449
    %3740 = vmatpush1.bf16.msra.mxu0 %v3448
    %3741 = vmatprep.subr.bf16.mxu0 %v3445
    %3742 = vmatpush1.bf16.msra.mxu0 %v3444
    %3743 = vmatprep.subr.bf16.mxu0 %v3441
    %3744 = vmatpush1.bf16.msra.mxu0 %v3440
    %3745 = vmatprep.subr.bf16.mxu0 %v3437
    %3746 = vmatpush1.bf16.msra.mxu0 %v3436
    %3747 = vmatprep.subr.bf16.mxu0 %v3433
    %3748 = vmatpush1.bf16.msra.mxu0 %v3432
    %3749 = vmatprep.subr.bf16.mxu0 %v3429
    %3750 = vmatpush1.bf16.msra.mxu0 %v3428
    %3751 = vmatprep.subr.bf16.mxu0 %v3425
    %3752 = vmatpush1.bf16.msra.mxu0 %v3424
    %3753 = vmatprep.subr.bf16.mxu0 %v3485
    %3754 = vmatpush2.bf16.msra.mxu0 %v3484
    %3755 = vmatprep.subr.bf16.mxu0 %v3481
    %3756 = vmatpush2.bf16.msra.mxu0 %v3480
    %3757 = vmatprep.subr.bf16.mxu0 %v3477
    %3758 = vmatpush2.bf16.msra.mxu0 %v3476
    %3759 = vmatprep.subr.bf16.mxu0 %v3473
    %3760 = vmatpush2.bf16.msra.mxu0 %v3472
    %3761 = vmatprep.subr.bf16.mxu0 %v3469
    %3762 = vmatpush2.bf16.msra.mxu0 %v3468
    %3763 = vmatprep.subr.bf16.mxu0 %v3465
    %3764 = vmatpush2.bf16.msra.mxu0 %v3464
    %3765 = vmatprep.subr.bf16.mxu0 %v3461
    %3766 = vmatpush2.bf16.msra.mxu0 %v3460
    %3767 = vmatprep.subr.bf16.mxu0 %v3457
    %3768 = vmatpush2.bf16.msra.mxu0 %v3456
    %3769 = vmatprep.mubr.bf16.mxu0 %v2823
    %3770 = vmatmul.mubr.bf16.gmra.mxu0 %v2822
    %v3771 = vpop.f32.mrf.mxu0
    %v3772 = vadd.f32 %v3731, %v3771
    %v3773 = vpop.f32.mrf.mxu0
    %v3774 = vadd.f32 %v3733, %v3773
    %v3775 = vpop.f32.mrf.mxu0
    %v3776 = vpop.f32.mrf.mxu0
    %3777 = vdwg.mxu0
    %v3778 = vmax.f32 %v3690, 0.0
    %v3779 = vmax.f32 %v3692, 0.0
    %v3780 = vmax.f32 %v3772, 0.0
    %v3781 = vmax.f32 %v3774, 0.0
    %v3782 = vpack.c.bf16 %v3778, %v3778
    %v3783 = vpack.c.bf16 %v3779, %v3779
    %v3784 = vpack.c.bf16 %v3780, %v3780
    %v3785 = vpack.c.bf16 %v3781, %v3781
    %3786 = vmatprep.subr.bf16.mxu0 %v3387
    %3787 = vmatpush1.bf16.msra.mxu0 %v3386
    %3788 = vmatprep.subr.bf16.mxu0 %v3383
    %3789 = vmatpush1.bf16.msra.mxu0 %v3382
    %3790 = vmatprep.subr.bf16.mxu0 %v3379
    %3791 = vmatpush1.bf16.msra.mxu0 %v3378
    %3792 = vmatprep.subr.bf16.mxu0 %v3375
    %3793 = vmatpush1.bf16.msra.mxu0 %v3374
    %3794 = vmatprep.subr.bf16.mxu0 %v3371
    %3795 = vmatpush1.bf16.msra.mxu0 %v3370
    %3796 = vmatprep.subr.bf16.mxu0 %v3367
    %3797 = vmatpush1.bf16.msra.mxu0 %v3366
    %3798 = vmatprep.subr.bf16.mxu0 %v3363
    %3799 = vmatpush1.bf16.msra.mxu0 %v3362
    %3800 = vmatprep.subr.bf16.mxu0 %v3359
    %3801 = vmatpush1.bf16.msra.mxu0 %v3358
    %3802 = vmatprep.subr.bf16.mxu0 %v3419
    %3803 = vmatpush2.bf16.msra.mxu0 %v3418
    %3804 = vmatprep.subr.bf16.mxu0 %v3415
    %3805 = vmatpush2.bf16.msra.mxu0 %v3414
    %3806 = vmatprep.subr.bf16.mxu0 %v3411
    %3807 = vmatpush2.bf16.msra.mxu0 %v3410
    %3808 = vmatprep.subr.bf16.mxu0 %v3407
    %3809 = vmatpush2.bf16.msra.mxu0 %v3406
    %3810 = vmatprep.subr.bf16.mxu0 %v3403
    %3811 = vmatpush2.bf16.msra.mxu0 %v3402
    %3812 = vmatprep.subr.bf16.mxu0 %v3399
    %3813 = vmatpush2.bf16.msra.mxu0 %v3398
    %3814 = vmatprep.subr.bf16.mxu0 %v3395
    %3815 = vmatpush2.bf16.msra.mxu0 %v3394
    %3816 = vmatprep.subr.bf16.mxu0 %v3391
    %3817 = vmatpush2.bf16.msra.mxu0 %v3390
    %3818 = vmatprep.mubr.bf16.mxu0 %v3783
    %3819 = vmatmul.mubr.bf16.gmra.mxu0 %v3782
    %v3820 = vpop.f32.mrf.mxu0
    %v3821 = vadd.f32 %v2957, %v3820
    %v3822 = vpop.f32.mrf.mxu0
    %v3823 = vadd.f32 %v2961, %v3822
    %v3824 = vpop.f32.mrf.mxu0
    %v3825 = vpop.f32.mrf.mxu0
    %3826 = vdwg.mxu0
    %3827 = vmatprep.subr.bf16.mxu0 %v3451
    %3828 = vmatpush1.bf16.msra.mxu0 %v3450
    %3829 = vmatprep.subr.bf16.mxu0 %v3447
    %3830 = vmatpush1.bf16.msra.mxu0 %v3446
    %3831 = vmatprep.subr.bf16.mxu0 %v3443
    %3832 = vmatpush1.bf16.msra.mxu0 %v3442
    %3833 = vmatprep.subr.bf16.mxu0 %v3439
    %3834 = vmatpush1.bf16.msra.mxu0 %v3438
    %3835 = vmatprep.subr.bf16.mxu0 %v3435
    %3836 = vmatpush1.bf16.msra.mxu0 %v3434
    %3837 = vmatprep.subr.bf16.mxu0 %v3431
    %3838 = vmatpush1.bf16.msra.mxu0 %v3430
    %3839 = vmatprep.subr.bf16.mxu0 %v3427
    %3840 = vmatpush1.bf16.msra.mxu0 %v3426
    %3841 = vmatprep.subr.bf16.mxu0 %v3423
    %3842 = vmatpush1.bf16.msra.mxu0 %v3422
    %3843 = vmatprep.subr.bf16.mxu0 %v3483
    %3844 = vmatpush2.bf16.msra.mxu0 %v3482
    %3845 = vmatprep.subr.bf16.mxu0 %v3479
    %3846 = vmatpush2.bf16.msra.mxu0 %v3478
    %3847 = vmatprep.subr.bf16.mxu0 %v3475
    %3848 = vmatpush2.bf16.msra.mxu0 %v3474
    %3849 = vmatprep.subr.bf16.mxu0 %v3471
    %3850 = vmatpush2.bf16.msra.mxu0 %v3470
    %3851 = vmatprep.subr.bf16.mxu0 %v3467
    %3852 = vmatpush2.bf16.msra.mxu0 %v3466
    %3853 = vmatprep.subr.bf16.mxu0 %v3463
    %3854 = vmatpush2.bf16.msra.mxu0 %v3462
    %3855 = vmatprep.subr.bf16.mxu0 %v3459
    %3856 = vmatpush2.bf16.msra.mxu0 %v3458
    %3857 = vmatprep.subr.bf16.mxu0 %v3455
    %3858 = vmatpush2.bf16.msra.mxu0 %v3454
    %3859 = vmatprep.mubr.bf16.mxu0 %v3785
    %3860 = vmatmul.mubr.bf16.gmra.mxu0 %v3784
    %v3861 = vpop.f32.mrf.mxu0
    %v3862 = vadd.f32 %v3821, %v3861
    %v3863 = vpop.f32.mrf.mxu0
    %v3864 = vadd.f32 %v3823, %v3863
    %v3865 = vpop.f32.mrf.mxu0
    %v3866 = vpop.f32.mrf.mxu0
    %3867 = vdwg.mxu0
    %3868 = vmatprep.subr.bf16.mxu0 %v3389
    %3869 = vmatpush1.bf16.msra.mxu0 %v3388
    %3870 = vmatprep.subr.bf16.mxu0 %v3385
    %3871 = vmatpush1.bf16.msra.mxu0 %v3384
    %3872 = vmatprep.subr.bf16.mxu0 %v3381
    %3873 = vmatpush1.bf16.msra.mxu0 %v3380
    %3874 = vmatprep.subr.bf16.mxu0 %v3377
    %3875 = vmatpush1.bf16.msra.mxu0 %v3376
    %3876 = vmatprep.subr.bf16.mxu0 %v3373
    %3877 = vmatpush1.bf16.msra.mxu0 %v3372
    %3878 = vmatprep.subr.bf16.mxu0 %v3369
    %3879 = vmatpush1.bf16.msra.mxu0 %v3368
    %3880 = vmatprep.subr.bf16.mxu0 %v3365
    %3881 = vmatpush1.bf16.msra.mxu0 %v3364
    %3882 = vmatprep.subr.bf16.mxu0 %v3361
    %3883 = vmatpush1.bf16.msra.mxu0 %v3360
    %3884 = vmatprep.subr.bf16.mxu0 %v3421
    %3885 = vmatpush2.bf16.msra.mxu0 %v3420
    %3886 = vmatprep.subr.bf16.mxu0 %v3417
    %3887 = vmatpush2.bf16.msra.mxu0 %v3416
    %3888 = vmatprep.subr.bf16.mxu0 %v3413
    %3889 = vmatpush2.bf16.msra.mxu0 %v3412
    %3890 = vmatprep.subr.bf16.mxu0 %v3409
    %3891 = vmatpush2.bf16.msra.mxu0 %v3408
    %3892 = vmatprep.subr.bf16.mxu0 %v3405
    %3893 = vmatpush2.bf16.msra.mxu0 %v3404
    %3894 = vmatprep.subr.bf16.mxu0 %v3401
    %3895 = vmatpush2.bf16.msra.mxu0 %v3400
    %3896 = vmatprep.subr.bf16.mxu0 %v3397
    %3897 = vmatpush2.bf16.msra.mxu0 %v3396
    %3898 = vmatprep.subr.bf16.mxu0 %v3393
    %3899 = vmatpush2.bf16.msra.mxu0 %v3392
    %3900 = vmatprep.mubr.bf16.mxu0 %v3783
    %3901 = vmatmul.mubr.bf16.gmra.mxu0 %v3782
    %v3902 = vpop.f32.mrf.mxu0
    %v3903 = vadd.f32 %v2965, %v3902
    %v3904 = vpop.f32.mrf.mxu0
    %v3905 = vadd.f32 %v2969, %v3904
    %v3906 = vpop.f32.mrf.mxu0
    %v3907 = vpop.f32.mrf.mxu0
    %3908 = vdwg.mxu0
    %3909 = vmatprep.subr.bf16.mxu0 %v3453
    %3910 = vmatpush1.bf16.msra.mxu0 %v3452
    %3911 = vmatprep.subr.bf16.mxu0 %v3449
    %3912 = vmatpush1.bf16.msra.mxu0 %v3448
    %3913 = vmatprep.subr.bf16.mxu0 %v3445
    %3914 = vmatpush1.bf16.msra.mxu0 %v3444
    %3915 = vmatprep.subr.bf16.mxu0 %v3441
    %3916 = vmatpush1.bf16.msra.mxu0 %v3440
    %3917 = vmatprep.subr.bf16.mxu0 %v3437
    %3918 = vmatpush1.bf16.msra.mxu0 %v3436
    %3919 = vmatprep.subr.bf16.mxu0 %v3433
    %3920 = vmatpush1.bf16.msra.mxu0 %v3432
    %3921 = vmatprep.subr.bf16.mxu0 %v3429
    %3922 = vmatpush1.bf16.msra.mxu0 %v3428
    %3923 = vmatprep.subr.bf16.mxu0 %v3425
    %3924 = vmatpush1.bf16.msra.mxu0 %v3424
    %3925 = vmatprep.subr.bf16.mxu0 %v3485
    %3926 = vmatpush2.bf16.msra.mxu0 %v3484
    %3927 = vmatprep.subr.bf16.mxu0 %v3481
    %3928 = vmatpush2.bf16.msra.mxu0 %v3480
    %3929 = vmatprep.subr.bf16.mxu0 %v3477
    %3930 = vmatpush2.bf16.msra.mxu0 %v3476
    %3931 = vmatprep.subr.bf16.mxu0 %v3473
    %3932 = vmatpush2.bf16.msra.mxu0 %v3472
    %3933 = vmatprep.subr.bf16.mxu0 %v3469
    %3934 = vmatpush2.bf16.msra.mxu0 %v3468
    %3935 = vmatprep.subr.bf16.mxu0 %v3465
    %3936 = vmatpush2.bf16.msra.mxu0 %v3464
    %3937 = vmatprep.subr.bf16.mxu0 %v3461
    %3938 = vmatpush2.bf16.msra.mxu0 %v3460
    %3939 = vmatprep.subr.bf16.mxu0 %v3457
    %3940 = vmatpush2.bf16.msra.mxu0 %v3456
    %3941 = vmatprep.mubr.bf16.mxu0 %v3785
    %3942 = vmatmul.mubr.bf16.gmra.mxu0 %v3784
    %v3943 = vpop.f32.mrf.mxu0
    %v3944 = vadd.f32 %v3903, %v3943
    %v3945 = vpop.f32.mrf.mxu0
    %v3946 = vadd.f32 %v3905, %v3945
    %v3947 = vpop.f32.mrf.mxu0
    %v3948 = vpop.f32.mrf.mxu0
    %3949 = vdwg.mxu0
    %v3950 = vmax.f32 %v3862, 0.0
    %v3951 = vmax.f32 %v3864, 0.0
    %v3952 = vmax.f32 %v3944, 0.0
    %v3953 = vmax.f32 %v3946, 0.0
    %v3954 = vpack.c.bf16 %v3950, %v3950
    %v3955 = vpack.c.bf16 %v3951, %v3951
    %v3956 = vpack.c.bf16 %v3952, %v3952
    %v3957 = vpack.c.bf16 %v3953, %v3953
    %v3958 = vld [vmem:[#allocation11] sm:$0xff]
    %v3959 = vld [vmem:[#allocation11 + $0x8] sm:$0xff]
    %v3960 = vld [vmem:[#allocation11 + $0x10] sm:$0xff]
    %v3961 = vld [vmem:[#allocation11 + $0x18] sm:$0xff]
    %v3962 = vld [vmem:[#allocation11 + $0x20] sm:$0xff]
    %v3963 = vld [vmem:[#allocation11 + $0x28] sm:$0xff]
    %v3964 = vld [vmem:[#allocation11 + $0x30] sm:$0xff]
    %v3965 = vld [vmem:[#allocation11 + $0x38] sm:$0xff]
    %v3966 = vld [vmem:[#allocation11 + $0x40] sm:$0xff]
    %v3967 = vld [vmem:[#allocation11 + $0x48] sm:$0xff]
    %v3968 = vld [vmem:[#allocation11 + $0x50] sm:$0xff]
    %v3969 = vld [vmem:[#allocation11 + $0x58] sm:$0xff]
    %v3970 = vld [vmem:[#allocation11 + $0x60] sm:$0xff]
    %v3971 = vld [vmem:[#allocation11 + $0x68] sm:$0xff]
    %v3972 = vld [vmem:[#allocation11 + $0x70] sm:$0xff]
    %v3973 = vld [vmem:[#allocation11 + $0x78] sm:$0xff]
    %v3974 = vld [vmem:[#allocation11 + $0x80] sm:$0xff]
    %v3975 = vld [vmem:[#allocation11 + $0x88] sm:$0xff]
    %v3976 = vld [vmem:[#allocation11 + $0x90] sm:$0xff]
    %v3977 = vld [vmem:[#allocation11 + $0x98] sm:$0xff]
    %v3978 = vld [vmem:[#allocation11 + $0xa0] sm:$0xff]
    %v3979 = vld [vmem:[#allocation11 + $0xa8] sm:$0xff]
    %v3980 = vld [vmem:[#allocation11 + $0xb0] sm:$0xff]
    %v3981 = vld [vmem:[#allocation11 + $0xb8] sm:$0xff]
    %v3982 = vld [vmem:[#allocation11 + $0xc0] sm:$0xff]
    %v3983 = vld [vmem:[#allocation11 + $0xc8] sm:$0xff]
    %v3984 = vld [vmem:[#allocation11 + $0xd0] sm:$0xff]
    %v3985 = vld [vmem:[#allocation11 + $0xd8] sm:$0xff]
    %v3986 = vld [vmem:[#allocation11 + $0xe0] sm:$0xff]
    %v3987 = vld [vmem:[#allocation11 + $0xe8] sm:$0xff]
    %v3988 = vld [vmem:[#allocation11 + $0xf0] sm:$0xff]
    %v3989 = vld [vmem:[#allocation11 + $0xf8] sm:$0xff]
    %v3990 = vld [vmem:[#allocation11 + $0x100] sm:$0xff]
    %v3991 = vld [vmem:[#allocation11 + $0x108] sm:$0xff]
    %v3992 = vld [vmem:[#allocation11 + $0x110] sm:$0xff]
    %v3993 = vld [vmem:[#allocation11 + $0x118] sm:$0xff]
    %v3994 = vld [vmem:[#allocation11 + $0x120] sm:$0xff]
    %v3995 = vld [vmem:[#allocation11 + $0x128] sm:$0xff]
    %v3996 = vld [vmem:[#allocation11 + $0x130] sm:$0xff]
    %v3997 = vld [vmem:[#allocation11 + $0x138] sm:$0xff]
    %v3998 = vld [vmem:[#allocation11 + $0x140] sm:$0xff]
    %v3999 = vld [vmem:[#allocation11 + $0x148] sm:$0xff]
    %v4000 = vld [vmem:[#allocation11 + $0x150] sm:$0xff]
    %v4001 = vld [vmem:[#allocation11 + $0x158] sm:$0xff]
    %v4002 = vld [vmem:[#allocation11 + $0x160] sm:$0xff]
    %v4003 = vld [vmem:[#allocation11 + $0x168] sm:$0xff]
    %v4004 = vld [vmem:[#allocation11 + $0x170] sm:$0xff]
    %v4005 = vld [vmem:[#allocation11 + $0x178] sm:$0xff]
    %v4006 = vld [vmem:[#allocation11 + $0x180] sm:$0xff]
    %v4007 = vld [vmem:[#allocation11 + $0x188] sm:$0xff]
    %v4008 = vld [vmem:[#allocation11 + $0x190] sm:$0xff]
    %v4009 = vld [vmem:[#allocation11 + $0x198] sm:$0xff]
    %v4010 = vld [vmem:[#allocation11 + $0x1a0] sm:$0xff]
    %v4011 = vld [vmem:[#allocation11 + $0x1a8] sm:$0xff]
    %v4012 = vld [vmem:[#allocation11 + $0x1b0] sm:$0xff]
    %v4013 = vld [vmem:[#allocation11 + $0x1b8] sm:$0xff]
    %v4014 = vld [vmem:[#allocation11 + $0x1c0] sm:$0xff]
    %v4015 = vld [vmem:[#allocation11 + $0x1c8] sm:$0xff]
    %v4016 = vld [vmem:[#allocation11 + $0x1d0] sm:$0xff]
    %v4017 = vld [vmem:[#allocation11 + $0x1d8] sm:$0xff]
    %v4018 = vld [vmem:[#allocation11 + $0x1e0] sm:$0xff]
    %v4019 = vld [vmem:[#allocation11 + $0x1e8] sm:$0xff]
    %v4020 = vld [vmem:[#allocation11 + $0x1f0] sm:$0xff]
    %v4021 = vld [vmem:[#allocation11 + $0x1f8] sm:$0xff]
    %v4022 = vld [vmem:[#allocation11 + $0x200] sm:$0xff]
    %v4023 = vld [vmem:[#allocation11 + $0x208] sm:$0xff]
    %v4024 = vld [vmem:[#allocation11 + $0x210] sm:$0xff]
    %v4025 = vld [vmem:[#allocation11 + $0x218] sm:$0xff]
    %v4026 = vld [vmem:[#allocation11 + $0x220] sm:$0xff]
    %v4027 = vld [vmem:[#allocation11 + $0x228] sm:$0xff]
    %v4028 = vld [vmem:[#allocation11 + $0x230] sm:$0xff]
    %v4029 = vld [vmem:[#allocation11 + $0x238] sm:$0xff]
    %v4030 = vld [vmem:[#allocation11 + $0x240] sm:$0xff]
    %v4031 = vld [vmem:[#allocation11 + $0x248] sm:$0xff]
    %v4032 = vld [vmem:[#allocation11 + $0x250] sm:$0xff]
    %v4033 = vld [vmem:[#allocation11 + $0x258] sm:$0xff]
    %v4034 = vld [vmem:[#allocation11 + $0x260] sm:$0xff]
    %v4035 = vld [vmem:[#allocation11 + $0x268] sm:$0xff]
    %v4036 = vld [vmem:[#allocation11 + $0x270] sm:$0xff]
    %v4037 = vld [vmem:[#allocation11 + $0x278] sm:$0xff]
    %v4038 = vld [vmem:[#allocation11 + $0x280] sm:$0xff]
    %v4039 = vld [vmem:[#allocation11 + $0x288] sm:$0xff]
    %v4040 = vld [vmem:[#allocation11 + $0x290] sm:$0xff]
    %v4041 = vld [vmem:[#allocation11 + $0x298] sm:$0xff]
    %v4042 = vld [vmem:[#allocation11 + $0x2a0] sm:$0xff]
    %v4043 = vld [vmem:[#allocation11 + $0x2a8] sm:$0xff]
    %v4044 = vld [vmem:[#allocation11 + $0x2b0] sm:$0xff]
    %v4045 = vld [vmem:[#allocation11 + $0x2b8] sm:$0xff]
    %v4046 = vld [vmem:[#allocation11 + $0x2c0] sm:$0xff]
    %v4047 = vld [vmem:[#allocation11 + $0x2c8] sm:$0xff]
    %v4048 = vld [vmem:[#allocation11 + $0x2d0] sm:$0xff]
    %v4049 = vld [vmem:[#allocation11 + $0x2d8] sm:$0xff]
    %v4050 = vld [vmem:[#allocation11 + $0x2e0] sm:$0xff]
    %v4051 = vld [vmem:[#allocation11 + $0x2e8] sm:$0xff]
    %v4052 = vld [vmem:[#allocation11 + $0x2f0] sm:$0xff]
    %v4053 = vld [vmem:[#allocation11 + $0x2f8] sm:$0xff]
    %v4054 = vld [vmem:[#allocation11 + $0x300] sm:$0xff]
    %v4055 = vld [vmem:[#allocation11 + $0x308] sm:$0xff]
    %v4056 = vld [vmem:[#allocation11 + $0x310] sm:$0xff]
    %v4057 = vld [vmem:[#allocation11 + $0x318] sm:$0xff]
    %v4058 = vld [vmem:[#allocation11 + $0x320] sm:$0xff]
    %v4059 = vld [vmem:[#allocation11 + $0x328] sm:$0xff]
    %v4060 = vld [vmem:[#allocation11 + $0x330] sm:$0xff]
    %v4061 = vld [vmem:[#allocation11 + $0x338] sm:$0xff]
    %v4062 = vld [vmem:[#allocation11 + $0x340] sm:$0xff]
    %v4063 = vld [vmem:[#allocation11 + $0x348] sm:$0xff]
    %v4064 = vld [vmem:[#allocation11 + $0x350] sm:$0xff]
    %v4065 = vld [vmem:[#allocation11 + $0x358] sm:$0xff]
    %v4066 = vld [vmem:[#allocation11 + $0x360] sm:$0xff]
    %v4067 = vld [vmem:[#allocation11 + $0x368] sm:$0xff]
    %v4068 = vld [vmem:[#allocation11 + $0x370] sm:$0xff]
    %v4069 = vld [vmem:[#allocation11 + $0x378] sm:$0xff]
    %v4070 = vld [vmem:[#allocation11 + $0x380] sm:$0xff]
    %v4071 = vld [vmem:[#allocation11 + $0x388] sm:$0xff]
    %v4072 = vld [vmem:[#allocation11 + $0x390] sm:$0xff]
    %v4073 = vld [vmem:[#allocation11 + $0x398] sm:$0xff]
    %v4074 = vld [vmem:[#allocation11 + $0x3a0] sm:$0xff]
    %v4075 = vld [vmem:[#allocation11 + $0x3a8] sm:$0xff]
    %v4076 = vld [vmem:[#allocation11 + $0x3b0] sm:$0xff]
    %v4077 = vld [vmem:[#allocation11 + $0x3b8] sm:$0xff]
    %v4078 = vld [vmem:[#allocation11 + $0x3c0] sm:$0xff]
    %v4079 = vld [vmem:[#allocation11 + $0x3c8] sm:$0xff]
    %v4080 = vld [vmem:[#allocation11 + $0x3d0] sm:$0xff]
    %v4081 = vld [vmem:[#allocation11 + $0x3d8] sm:$0xff]
    %v4082 = vld [vmem:[#allocation11 + $0x3e0] sm:$0xff]
    %v4083 = vld [vmem:[#allocation11 + $0x3e8] sm:$0xff]
    %v4084 = vld [vmem:[#allocation11 + $0x3f0] sm:$0xff]
    %v4085 = vld [vmem:[#allocation11 + $0x3f8] sm:$0xff]
    %v4086 = vld [vmem:[%s8] sm:$0xf]
    %v4088 = vlaneseq
    %v4089 = vshrl.u32 %v4088, 7
    %v4090 = vsub.s32 0, %v4089
    %v4091 = vrot.slane %v4086, %v4090
    %v4092 = vlaneseq
    %v4093 = vshrl.u32 %v4092, 7
    %v4094 = vsub.s32 1, %v4093
    %v4095 = vrot.slane %v4086, %v4094
    %v4096 = vlaneseq
    %v4097 = vshrl.u32 %v4096, 7
    %v4098 = vsub.s32 2, %v4097
    %v4099 = vrot.slane %v4086, %v4098
    %v4100 = vlaneseq
    %v4101 = vshrl.u32 %v4100, 7
    %v4102 = vsub.s32 3, %v4101
    %v4103 = vrot.slane %v4086, %v4102
    %v4236 = vunpack.c.l.b16 %v3958
    %v4237 = vunpack.c.h.b16 %v3958
    %v4238 = vunpack.c.l.b16 %v3959
    %v4239 = vunpack.c.h.b16 %v3959
    %v4240 = vunpack.c.l.b16 %v3960
    %v4241 = vunpack.c.h.b16 %v3960
    %v4242 = vunpack.c.l.b16 %v3961
    %v4243 = vunpack.c.h.b16 %v3961
    %v4244 = vunpack.c.l.b16 %v3962
    %v4245 = vunpack.c.h.b16 %v3962
    %v4246 = vunpack.c.l.b16 %v3963
    %v4247 = vunpack.c.h.b16 %v3963
    %v4248 = vunpack.c.l.b16 %v3964
    %v4249 = vunpack.c.h.b16 %v3964
    %v4250 = vunpack.c.l.b16 %v3965
    %v4251 = vunpack.c.h.b16 %v3965
    %v4252 = vunpack.c.l.b16 %v3966
    %v4253 = vunpack.c.h.b16 %v3966
    %v4254 = vunpack.c.l.b16 %v3967
    %v4255 = vunpack.c.h.b16 %v3967
    %v4256 = vunpack.c.l.b16 %v3968
    %v4257 = vunpack.c.h.b16 %v3968
    %v4258 = vunpack.c.l.b16 %v3969
    %v4259 = vunpack.c.h.b16 %v3969
    %v4260 = vunpack.c.l.b16 %v3970
    %v4261 = vunpack.c.h.b16 %v3970
    %v4262 = vunpack.c.l.b16 %v3971
    %v4263 = vunpack.c.h.b16 %v3971
    %v4264 = vunpack.c.l.b16 %v3972
    %v4265 = vunpack.c.h.b16 %v3972
    %v4266 = vunpack.c.l.b16 %v3973
    %v4267 = vunpack.c.h.b16 %v3973
    %v4268 = vunpack.c.l.b16 %v3974
    %v4269 = vunpack.c.h.b16 %v3974
    %v4270 = vunpack.c.l.b16 %v3975
    %v4271 = vunpack.c.h.b16 %v3975
    %v4272 = vunpack.c.l.b16 %v3976
    %v4273 = vunpack.c.h.b16 %v3976
    %v4274 = vunpack.c.l.b16 %v3977
    %v4275 = vunpack.c.h.b16 %v3977
    %v4276 = vunpack.c.l.b16 %v3978
    %v4277 = vunpack.c.h.b16 %v3978
    %v4278 = vunpack.c.l.b16 %v3979
    %v4279 = vunpack.c.h.b16 %v3979
    %v4280 = vunpack.c.l.b16 %v3980
    %v4281 = vunpack.c.h.b16 %v3980
    %v4282 = vunpack.c.l.b16 %v3981
    %v4283 = vunpack.c.h.b16 %v3981
    %v4284 = vunpack.c.l.b16 %v3982
    %v4285 = vunpack.c.h.b16 %v3982
    %v4286 = vunpack.c.l.b16 %v3983
    %v4287 = vunpack.c.h.b16 %v3983
    %v4288 = vunpack.c.l.b16 %v3984
    %v4289 = vunpack.c.h.b16 %v3984
    %v4290 = vunpack.c.l.b16 %v3985
    %v4291 = vunpack.c.h.b16 %v3985
    %v4292 = vunpack.c.l.b16 %v3986
    %v4293 = vunpack.c.h.b16 %v3986
    %v4294 = vunpack.c.l.b16 %v3987
    %v4295 = vunpack.c.h.b16 %v3987
    %v4296 = vunpack.c.l.b16 %v3988
    %v4297 = vunpack.c.h.b16 %v3988
    %v4298 = vunpack.c.l.b16 %v3989
    %v4299 = vunpack.c.h.b16 %v3989
    %v4300 = vunpack.c.l.b16 %v3990
    %v4301 = vunpack.c.h.b16 %v3990
    %v4302 = vunpack.c.l.b16 %v3991
    %v4303 = vunpack.c.h.b16 %v3991
    %v4304 = vunpack.c.l.b16 %v3992
    %v4305 = vunpack.c.h.b16 %v3992
    %v4306 = vunpack.c.l.b16 %v3993
    %v4307 = vunpack.c.h.b16 %v3993
    %v4308 = vunpack.c.l.b16 %v3994
    %v4309 = vunpack.c.h.b16 %v3994
    %v4310 = vunpack.c.l.b16 %v3995
    %v4311 = vunpack.c.h.b16 %v3995
    %v4312 = vunpack.c.l.b16 %v3996
    %v4313 = vunpack.c.h.b16 %v3996
    %v4314 = vunpack.c.l.b16 %v3997
    %v4315 = vunpack.c.h.b16 %v3997
    %v4316 = vunpack.c.l.b16 %v3998
    %v4317 = vunpack.c.h.b16 %v3998
    %v4318 = vunpack.c.l.b16 %v3999
    %v4319 = vunpack.c.h.b16 %v3999
    %v4320 = vunpack.c.l.b16 %v4000
    %v4321 = vunpack.c.h.b16 %v4000
    %v4322 = vunpack.c.l.b16 %v4001
    %v4323 = vunpack.c.h.b16 %v4001
    %v4324 = vunpack.c.l.b16 %v4002
    %v4325 = vunpack.c.h.b16 %v4002
    %v4326 = vunpack.c.l.b16 %v4003
    %v4327 = vunpack.c.h.b16 %v4003
    %v4328 = vunpack.c.l.b16 %v4004
    %v4329 = vunpack.c.h.b16 %v4004
    %v4330 = vunpack.c.l.b16 %v4005
    %v4331 = vunpack.c.h.b16 %v4005
    %v4332 = vunpack.c.l.b16 %v4006
    %v4333 = vunpack.c.h.b16 %v4006
    %v4334 = vunpack.c.l.b16 %v4007
    %v4335 = vunpack.c.h.b16 %v4007
    %v4336 = vunpack.c.l.b16 %v4008
    %v4337 = vunpack.c.h.b16 %v4008
    %v4338 = vunpack.c.l.b16 %v4009
    %v4339 = vunpack.c.h.b16 %v4009
    %v4340 = vunpack.c.l.b16 %v4010
    %v4341 = vunpack.c.h.b16 %v4010
    %v4342 = vunpack.c.l.b16 %v4011
    %v4343 = vunpack.c.h.b16 %v4011
    %v4344 = vunpack.c.l.b16 %v4012
    %v4345 = vunpack.c.h.b16 %v4012
    %v4346 = vunpack.c.l.b16 %v4013
    %v4347 = vunpack.c.h.b16 %v4013
    %v4348 = vunpack.c.l.b16 %v4014
    %v4349 = vunpack.c.h.b16 %v4014
    %v4350 = vunpack.c.l.b16 %v4015
    %v4351 = vunpack.c.h.b16 %v4015
    %v4352 = vunpack.c.l.b16 %v4016
    %v4353 = vunpack.c.h.b16 %v4016
    %v4354 = vunpack.c.l.b16 %v4017
    %v4355 = vunpack.c.h.b16 %v4017
    %v4356 = vunpack.c.l.b16 %v4018
    %v4357 = vunpack.c.h.b16 %v4018
    %v4358 = vunpack.c.l.b16 %v4019
    %v4359 = vunpack.c.h.b16 %v4019
    %v4360 = vunpack.c.l.b16 %v4020
    %v4361 = vunpack.c.h.b16 %v4020
    %v4362 = vunpack.c.l.b16 %v4021
    %v4363 = vunpack.c.h.b16 %v4021
    %v4364 = vunpack.c.l.b16 %v4022
    %v4365 = vunpack.c.h.b16 %v4022
    %v4366 = vunpack.c.l.b16 %v4023
    %v4367 = vunpack.c.h.b16 %v4023
    %v4368 = vunpack.c.l.b16 %v4024
    %v4369 = vunpack.c.h.b16 %v4024
    %v4370 = vunpack.c.l.b16 %v4025
    %v4371 = vunpack.c.h.b16 %v4025
    %v4372 = vunpack.c.l.b16 %v4026
    %v4373 = vunpack.c.h.b16 %v4026
    %v4374 = vunpack.c.l.b16 %v4027
    %v4375 = vunpack.c.h.b16 %v4027
    %v4376 = vunpack.c.l.b16 %v4028
    %v4377 = vunpack.c.h.b16 %v4028
    %v4378 = vunpack.c.l.b16 %v4029
    %v4379 = vunpack.c.h.b16 %v4029
    %v4380 = vunpack.c.l.b16 %v4030
    %v4381 = vunpack.c.h.b16 %v4030
    %v4382 = vunpack.c.l.b16 %v4031
    %v4383 = vunpack.c.h.b16 %v4031
    %v4384 = vunpack.c.l.b16 %v4032
    %v4385 = vunpack.c.h.b16 %v4032
    %v4386 = vunpack.c.l.b16 %v4033
    %v4387 = vunpack.c.h.b16 %v4033
    %v4388 = vunpack.c.l.b16 %v4034
    %v4389 = vunpack.c.h.b16 %v4034
    %v4390 = vunpack.c.l.b16 %v4035
    %v4391 = vunpack.c.h.b16 %v4035
    %v4392 = vunpack.c.l.b16 %v4036
    %v4393 = vunpack.c.h.b16 %v4036
    %v4394 = vunpack.c.l.b16 %v4037
    %v4395 = vunpack.c.h.b16 %v4037
    %v4396 = vunpack.c.l.b16 %v4038
    %v4397 = vunpack.c.h.b16 %v4038
    %v4398 = vunpack.c.l.b16 %v4039
    %v4399 = vunpack.c.h.b16 %v4039
    %v4400 = vunpack.c.l.b16 %v4040
    %v4401 = vunpack.c.h.b16 %v4040
    %v4402 = vunpack.c.l.b16 %v4041
    %v4403 = vunpack.c.h.b16 %v4041
    %v4404 = vunpack.c.l.b16 %v4042
    %v4405 = vunpack.c.h.b16 %v4042
    %v4406 = vunpack.c.l.b16 %v4043
    %v4407 = vunpack.c.h.b16 %v4043
    %v4408 = vunpack.c.l.b16 %v4044
    %v4409 = vunpack.c.h.b16 %v4044
    %v4410 = vunpack.c.l.b16 %v4045
    %v4411 = vunpack.c.h.b16 %v4045
    %v4412 = vunpack.c.l.b16 %v4046
    %v4413 = vunpack.c.h.b16 %v4046
    %v4414 = vunpack.c.l.b16 %v4047
    %v4415 = vunpack.c.h.b16 %v4047
    %v4416 = vunpack.c.l.b16 %v4048
    %v4417 = vunpack.c.h.b16 %v4048
    %v4418 = vunpack.c.l.b16 %v4049
    %v4419 = vunpack.c.h.b16 %v4049
    %v4420 = vunpack.c.l.b16 %v4050
    %v4421 = vunpack.c.h.b16 %v4050
    %v4422 = vunpack.c.l.b16 %v4051
    %v4423 = vunpack.c.h.b16 %v4051
    %v4424 = vunpack.c.l.b16 %v4052
    %v4425 = vunpack.c.h.b16 %v4052
    %v4426 = vunpack.c.l.b16 %v4053
    %v4427 = vunpack.c.h.b16 %v4053
    %v4428 = vunpack.c.l.b16 %v4054
    %v4429 = vunpack.c.h.b16 %v4054
    %v4430 = vunpack.c.l.b16 %v4055
    %v4431 = vunpack.c.h.b16 %v4055
    %v4432 = vunpack.c.l.b16 %v4056
    %v4433 = vunpack.c.h.b16 %v4056
    %v4434 = vunpack.c.l.b16 %v4057
    %v4435 = vunpack.c.h.b16 %v4057
    %v4436 = vunpack.c.l.b16 %v4058
    %v4437 = vunpack.c.h.b16 %v4058
    %v4438 = vunpack.c.l.b16 %v4059
    %v4439 = vunpack.c.h.b16 %v4059
    %v4440 = vunpack.c.l.b16 %v4060
    %v4441 = vunpack.c.h.b16 %v4060
    %v4442 = vunpack.c.l.b16 %v4061
    %v4443 = vunpack.c.h.b16 %v4061
    %v4444 = vunpack.c.l.b16 %v4062
    %v4445 = vunpack.c.h.b16 %v4062
    %v4446 = vunpack.c.l.b16 %v4063
    %v4447 = vunpack.c.h.b16 %v4063
    %v4448 = vunpack.c.l.b16 %v4064
    %v4449 = vunpack.c.h.b16 %v4064
    %v4450 = vunpack.c.l.b16 %v4065
    %v4451 = vunpack.c.h.b16 %v4065
    %v4452 = vunpack.c.l.b16 %v4066
    %v4453 = vunpack.c.h.b16 %v4066
    %v4454 = vunpack.c.l.b16 %v4067
    %v4455 = vunpack.c.h.b16 %v4067
    %v4456 = vunpack.c.l.b16 %v4068
    %v4457 = vunpack.c.h.b16 %v4068
    %v4458 = vunpack.c.l.b16 %v4069
    %v4459 = vunpack.c.h.b16 %v4069
    %v4460 = vunpack.c.l.b16 %v4070
    %v4461 = vunpack.c.h.b16 %v4070
    %v4462 = vunpack.c.l.b16 %v4071
    %v4463 = vunpack.c.h.b16 %v4071
    %v4464 = vunpack.c.l.b16 %v4072
    %v4465 = vunpack.c.h.b16 %v4072
    %v4466 = vunpack.c.l.b16 %v4073
    %v4467 = vunpack.c.h.b16 %v4073
    %v4468 = vunpack.c.l.b16 %v4074
    %v4469 = vunpack.c.h.b16 %v4074
    %v4470 = vunpack.c.l.b16 %v4075
    %v4471 = vunpack.c.h.b16 %v4075
    %v4472 = vunpack.c.l.b16 %v4076
    %v4473 = vunpack.c.h.b16 %v4076
    %v4474 = vunpack.c.l.b16 %v4077
    %v4475 = vunpack.c.h.b16 %v4077
    %v4476 = vunpack.c.l.b16 %v4078
    %v4477 = vunpack.c.h.b16 %v4078
    %v4478 = vunpack.c.l.b16 %v4079
    %v4479 = vunpack.c.h.b16 %v4079
    %v4480 = vunpack.c.l.b16 %v4080
    %v4481 = vunpack.c.h.b16 %v4080
    %v4482 = vunpack.c.l.b16 %v4081
    %v4483 = vunpack.c.h.b16 %v4081
    %v4484 = vunpack.c.l.b16 %v4082
    %v4485 = vunpack.c.h.b16 %v4082
    %v4486 = vunpack.c.l.b16 %v4083
    %v4487 = vunpack.c.h.b16 %v4083
    %v4488 = vunpack.c.l.b16 %v4084
    %v4489 = vunpack.c.h.b16 %v4084
    %v4490 = vunpack.c.l.b16 %v4085
    %v4491 = vunpack.c.h.b16 %v4085
    %v4492 = vpack.c.b16 %v4240, %v4236
    %v4493 = vpack.c.b16 %v4241, %v4237
    %v4494 = vpack.c.b16 %v4242, %v4238
    %v4495 = vpack.c.b16 %v4243, %v4239
    %v4496 = vpack.c.b16 %v4248, %v4244
    %v4497 = vpack.c.b16 %v4249, %v4245
    %v4498 = vpack.c.b16 %v4250, %v4246
    %v4499 = vpack.c.b16 %v4251, %v4247
    %v4500 = vpack.c.b16 %v4256, %v4252
    %v4501 = vpack.c.b16 %v4257, %v4253
    %v4502 = vpack.c.b16 %v4258, %v4254
    %v4503 = vpack.c.b16 %v4259, %v4255
    %v4504 = vpack.c.b16 %v4264, %v4260
    %v4505 = vpack.c.b16 %v4265, %v4261
    %v4506 = vpack.c.b16 %v4266, %v4262
    %v4507 = vpack.c.b16 %v4267, %v4263
    %v4508 = vpack.c.b16 %v4272, %v4268
    %v4509 = vpack.c.b16 %v4273, %v4269
    %v4510 = vpack.c.b16 %v4274, %v4270
    %v4511 = vpack.c.b16 %v4275, %v4271
    %v4512 = vpack.c.b16 %v4280, %v4276
    %v4513 = vpack.c.b16 %v4281, %v4277
    %v4514 = vpack.c.b16 %v4282, %v4278
    %v4515 = vpack.c.b16 %v4283, %v4279
    %v4516 = vpack.c.b16 %v4288, %v4284
    %v4517 = vpack.c.b16 %v4289, %v4285
    %v4518 = vpack.c.b16 %v4290, %v4286
    %v4519 = vpack.c.b16 %v4291, %v4287
    %v4520 = vpack.c.b16 %v4296, %v4292
    %v4521 = vpack.c.b16 %v4297, %v4293
    %v4522 = vpack.c.b16 %v4298, %v4294
    %v4523 = vpack.c.b16 %v4299, %v4295
    %v4524 = vpack.c.b16 %v4304, %v4300
    %v4525 = vpack.c.b16 %v4305, %v4301
    %v4526 = vpack.c.b16 %v4306, %v4302
    %v4527 = vpack.c.b16 %v4307, %v4303
    %v4528 = vpack.c.b16 %v4312, %v4308
    %v4529 = vpack.c.b16 %v4313, %v4309
    %v4530 = vpack.c.b16 %v4314, %v4310
    %v4531 = vpack.c.b16 %v4315, %v4311
    %v4532 = vpack.c.b16 %v4320, %v4316
    %v4533 = vpack.c.b16 %v4321, %v4317
    %v4534 = vpack.c.b16 %v4322, %v4318
    %v4535 = vpack.c.b16 %v4323, %v4319
    %v4536 = vpack.c.b16 %v4328, %v4324
    %v4537 = vpack.c.b16 %v4329, %v4325
    %v4538 = vpack.c.b16 %v4330, %v4326
    %v4539 = vpack.c.b16 %v4331, %v4327
    %v4540 = vpack.c.b16 %v4336, %v4332
    %v4541 = vpack.c.b16 %v4337, %v4333
    %v4542 = vpack.c.b16 %v4338, %v4334
    %v4543 = vpack.c.b16 %v4339, %v4335
    %v4544 = vpack.c.b16 %v4344, %v4340
    %v4545 = vpack.c.b16 %v4345, %v4341
    %v4546 = vpack.c.b16 %v4346, %v4342
    %v4547 = vpack.c.b16 %v4347, %v4343
    %v4548 = vpack.c.b16 %v4352, %v4348
    %v4549 = vpack.c.b16 %v4353, %v4349
    %v4550 = vpack.c.b16 %v4354, %v4350
    %v4551 = vpack.c.b16 %v4355, %v4351
    %v4552 = vpack.c.b16 %v4360, %v4356
    %v4553 = vpack.c.b16 %v4361, %v4357
    %v4554 = vpack.c.b16 %v4362, %v4358
    %v4555 = vpack.c.b16 %v4363, %v4359
    %v4556 = vpack.c.b16 %v4368, %v4364
    %v4557 = vpack.c.b16 %v4369, %v4365
    %v4558 = vpack.c.b16 %v4370, %v4366
    %v4559 = vpack.c.b16 %v4371, %v4367
    %v4560 = vpack.c.b16 %v4376, %v4372
    %v4561 = vpack.c.b16 %v4377, %v4373
    %v4562 = vpack.c.b16 %v4378, %v4374
    %v4563 = vpack.c.b16 %v4379, %v4375
    %v4564 = vpack.c.b16 %v4384, %v4380
    %v4565 = vpack.c.b16 %v4385, %v4381
    %v4566 = vpack.c.b16 %v4386, %v4382
    %v4567 = vpack.c.b16 %v4387, %v4383
    %v4568 = vpack.c.b16 %v4392, %v4388
    %v4569 = vpack.c.b16 %v4393, %v4389
    %v4570 = vpack.c.b16 %v4394, %v4390
    %v4571 = vpack.c.b16 %v4395, %v4391
    %v4572 = vpack.c.b16 %v4400, %v4396
    %v4573 = vpack.c.b16 %v4401, %v4397
    %v4574 = vpack.c.b16 %v4402, %v4398
    %v4575 = vpack.c.b16 %v4403, %v4399
    %v4576 = vpack.c.b16 %v4408, %v4404
    %v4577 = vpack.c.b16 %v4409, %v4405
    %v4578 = vpack.c.b16 %v4410, %v4406
    %v4579 = vpack.c.b16 %v4411, %v4407
    %v4580 = vpack.c.b16 %v4416, %v4412
    %v4581 = vpack.c.b16 %v4417, %v4413
    %v4582 = vpack.c.b16 %v4418, %v4414
    %v4583 = vpack.c.b16 %v4419, %v4415
    %v4584 = vpack.c.b16 %v4424, %v4420
    %v4585 = vpack.c.b16 %v4425, %v4421
    %v4586 = vpack.c.b16 %v4426, %v4422
    %v4587 = vpack.c.b16 %v4427, %v4423
    %v4588 = vpack.c.b16 %v4432, %v4428
    %v4589 = vpack.c.b16 %v4433, %v4429
    %v4590 = vpack.c.b16 %v4434, %v4430
    %v4591 = vpack.c.b16 %v4435, %v4431
    %v4592 = vpack.c.b16 %v4440, %v4436
    %v4593 = vpack.c.b16 %v4441, %v4437
    %v4594 = vpack.c.b16 %v4442, %v4438
    %v4595 = vpack.c.b16 %v4443, %v4439
    %v4596 = vpack.c.b16 %v4448, %v4444
    %v4597 = vpack.c.b16 %v4449, %v4445
    %v4598 = vpack.c.b16 %v4450, %v4446
    %v4599 = vpack.c.b16 %v4451, %v4447
    %v4600 = vpack.c.b16 %v4456, %v4452
    %v4601 = vpack.c.b16 %v4457, %v4453
    %v4602 = vpack.c.b16 %v4458, %v4454
    %v4603 = vpack.c.b16 %v4459, %v4455
    %v4604 = vpack.c.b16 %v4464, %v4460
    %v4605 = vpack.c.b16 %v4465, %v4461
    %v4606 = vpack.c.b16 %v4466, %v4462
    %v4607 = vpack.c.b16 %v4467, %v4463
    %v4608 = vpack.c.b16 %v4472, %v4468
    %v4609 = vpack.c.b16 %v4473, %v4469
    %v4610 = vpack.c.b16 %v4474, %v4470
    %v4611 = vpack.c.b16 %v4475, %v4471
    %v4612 = vpack.c.b16 %v4480, %v4476
    %v4613 = vpack.c.b16 %v4481, %v4477
    %v4614 = vpack.c.b16 %v4482, %v4478
    %v4615 = vpack.c.b16 %v4483, %v4479
    %v4616 = vpack.c.b16 %v4488, %v4484
    %v4617 = vpack.c.b16 %v4489, %v4485
    %v4618 = vpack.c.b16 %v4490, %v4486
    %v4619 = vpack.c.b16 %v4491, %v4487
    %4748 = vmatprep.subr.bf16.mxu0 %v4521
    %4749 = vmatpush1.bf16.msra.mxu0 %v4520
    %4750 = vmatprep.subr.bf16.mxu0 %v4517
    %4751 = vmatpush1.bf16.msra.mxu0 %v4516
    %4752 = vmatprep.subr.bf16.mxu0 %v4513
    %4753 = vmatpush1.bf16.msra.mxu0 %v4512
    %4754 = vmatprep.subr.bf16.mxu0 %v4509
    %4755 = vmatpush1.bf16.msra.mxu0 %v4508
    %4756 = vmatprep.subr.bf16.mxu0 %v4505
    %4757 = vmatpush1.bf16.msra.mxu0 %v4504
    %4758 = vmatprep.subr.bf16.mxu0 %v4501
    %4759 = vmatpush1.bf16.msra.mxu0 %v4500
    %4760 = vmatprep.subr.bf16.mxu0 %v4497
    %4761 = vmatpush1.bf16.msra.mxu0 %v4496
    %4762 = vmatprep.subr.bf16.mxu0 %v4493
    %4763 = vmatpush1.bf16.msra.mxu0 %v4492
    %4764 = vmatprep.subr.bf16.mxu0 %v4553
    %4765 = vmatpush2.bf16.msra.mxu0 %v4552
    %4766 = vmatprep.subr.bf16.mxu0 %v4549
    %4767 = vmatpush2.bf16.msra.mxu0 %v4548
    %4768 = vmatprep.subr.bf16.mxu0 %v4545
    %4769 = vmatpush2.bf16.msra.mxu0 %v4544
    %4770 = vmatprep.subr.bf16.mxu0 %v4541
    %4771 = vmatpush2.bf16.msra.mxu0 %v4540
    %4772 = vmatprep.subr.bf16.mxu0 %v4537
    %4773 = vmatpush2.bf16.msra.mxu0 %v4536
    %4774 = vmatprep.subr.bf16.mxu0 %v4533
    %4775 = vmatpush2.bf16.msra.mxu0 %v4532
    %4776 = vmatprep.subr.bf16.mxu0 %v4529
    %4777 = vmatpush2.bf16.msra.mxu0 %v4528
    %4778 = vmatprep.subr.bf16.mxu0 %v4525
    %4779 = vmatpush2.bf16.msra.mxu0 %v4524
    %4780 = vmatprep.mubr.bf16.mxu0 %v3955
    %4781 = vmatmul.mubr.bf16.gmra.mxu0 %v3954
    %v4782 = vpop.f32.mrf.mxu0
    %v4783 = vadd.f32 %v4091, %v4782
    %v4784 = vpop.f32.mrf.mxu0
    %v4785 = vadd.f32 %v4095, %v4784
    %v4786 = vpop.f32.mrf.mxu0
    %v4787 = vpop.f32.mrf.mxu0
    %4788 = vdwg.mxu0
    %4789 = vmatprep.subr.bf16.mxu0 %v4585
    %4790 = vmatpush1.bf16.msra.mxu0 %v4584
    %4791 = vmatprep.subr.bf16.mxu0 %v4581
    %4792 = vmatpush1.bf16.msra.mxu0 %v4580
    %4793 = vmatprep.subr.bf16.mxu0 %v4577
    %4794 = vmatpush1.bf16.msra.mxu0 %v4576
    %4795 = vmatprep.subr.bf16.mxu0 %v4573
    %4796 = vmatpush1.bf16.msra.mxu0 %v4572
    %4797 = vmatprep.subr.bf16.mxu0 %v4569
    %4798 = vmatpush1.bf16.msra.mxu0 %v4568
    %4799 = vmatprep.subr.bf16.mxu0 %v4565
    %4800 = vmatpush1.bf16.msra.mxu0 %v4564
    %4801 = vmatprep.subr.bf16.mxu0 %v4561
    %4802 = vmatpush1.bf16.msra.mxu0 %v4560
    %4803 = vmatprep.subr.bf16.mxu0 %v4557
    %4804 = vmatpush1.bf16.msra.mxu0 %v4556
    %4805 = vmatprep.subr.bf16.mxu0 %v4617
    %4806 = vmatpush2.bf16.msra.mxu0 %v4616
    %4807 = vmatprep.subr.bf16.mxu0 %v4613
    %4808 = vmatpush2.bf16.msra.mxu0 %v4612
    %4809 = vmatprep.subr.bf16.mxu0 %v4609
    %4810 = vmatpush2.bf16.msra.mxu0 %v4608
    %4811 = vmatprep.subr.bf16.mxu0 %v4605
    %4812 = vmatpush2.bf16.msra.mxu0 %v4604
    %4813 = vmatprep.subr.bf16.mxu0 %v4601
    %4814 = vmatpush2.bf16.msra.mxu0 %v4600
    %4815 = vmatprep.subr.bf16.mxu0 %v4597
    %4816 = vmatpush2.bf16.msra.mxu0 %v4596
    %4817 = vmatprep.subr.bf16.mxu0 %v4593
    %4818 = vmatpush2.bf16.msra.mxu0 %v4592
    %4819 = vmatprep.subr.bf16.mxu0 %v4589
    %4820 = vmatpush2.bf16.msra.mxu0 %v4588
    %4821 = vmatprep.mubr.bf16.mxu0 %v3957
    %4822 = vmatmul.mubr.bf16.gmra.mxu0 %v3956
    %v4823 = vpop.f32.mrf.mxu0
    %v4824 = vadd.f32 %v4783, %v4823
    %v4825 = vpop.f32.mrf.mxu0
    %v4826 = vadd.f32 %v4785, %v4825
    %v4827 = vpop.f32.mrf.mxu0
    %v4828 = vpop.f32.mrf.mxu0
    %4829 = vdwg.mxu0
    %4830 = vmatprep.subr.bf16.mxu0 %v4523
    %4831 = vmatpush1.bf16.msra.mxu0 %v4522
    %4832 = vmatprep.subr.bf16.mxu0 %v4519
    %4833 = vmatpush1.bf16.msra.mxu0 %v4518
    %4834 = vmatprep.subr.bf16.mxu0 %v4515
    %4835 = vmatpush1.bf16.msra.mxu0 %v4514
    %4836 = vmatprep.subr.bf16.mxu0 %v4511
    %4837 = vmatpush1.bf16.msra.mxu0 %v4510
    %4838 = vmatprep.subr.bf16.mxu0 %v4507
    %4839 = vmatpush1.bf16.msra.mxu0 %v4506
    %4840 = vmatprep.subr.bf16.mxu0 %v4503
    %4841 = vmatpush1.bf16.msra.mxu0 %v4502
    %4842 = vmatprep.subr.bf16.mxu0 %v4499
    %4843 = vmatpush1.bf16.msra.mxu0 %v4498
    %4844 = vmatprep.subr.bf16.mxu0 %v4495
    %4845 = vmatpush1.bf16.msra.mxu0 %v4494
    %4846 = vmatprep.subr.bf16.mxu0 %v4555
    %4847 = vmatpush2.bf16.msra.mxu0 %v4554
    %4848 = vmatprep.subr.bf16.mxu0 %v4551
    %4849 = vmatpush2.bf16.msra.mxu0 %v4550
    %4850 = vmatprep.subr.bf16.mxu0 %v4547
    %4851 = vmatpush2.bf16.msra.mxu0 %v4546
    %4852 = vmatprep.subr.bf16.mxu0 %v4543
    %4853 = vmatpush2.bf16.msra.mxu0 %v4542
    %4854 = vmatprep.subr.bf16.mxu0 %v4539
    %4855 = vmatpush2.bf16.msra.mxu0 %v4538
    %4856 = vmatprep.subr.bf16.mxu0 %v4535
    %4857 = vmatpush2.bf16.msra.mxu0 %v4534
    %4858 = vmatprep.subr.bf16.mxu0 %v4531
    %4859 = vmatpush2.bf16.msra.mxu0 %v4530
    %4860 = vmatprep.subr.bf16.mxu0 %v4527
    %4861 = vmatpush2.bf16.msra.mxu0 %v4526
    %4862 = vmatprep.mubr.bf16.mxu0 %v3955
    %4863 = vmatmul.mubr.bf16.gmra.mxu0 %v3954
    %v4864 = vpop.f32.mrf.mxu0
    %v4865 = vadd.f32 %v4099, %v4864
    %v4866 = vpop.f32.mrf.mxu0
    %v4867 = vadd.f32 %v4103, %v4866
    %v4868 = vpop.f32.mrf.mxu0
    %v4869 = vpop.f32.mrf.mxu0
    %4870 = vdwg.mxu0
    %4871 = vmatprep.subr.bf16.mxu0 %v4587
    %4872 = vmatpush1.bf16.msra.mxu0 %v4586
    %4873 = vmatprep.subr.bf16.mxu0 %v4583
    %4874 = vmatpush1.bf16.msra.mxu0 %v4582
    %4875 = vmatprep.subr.bf16.mxu0 %v4579
    %4876 = vmatpush1.bf16.msra.mxu0 %v4578
    %4877 = vmatprep.subr.bf16.mxu0 %v4575
    %4878 = vmatpush1.bf16.msra.mxu0 %v4574
    %4879 = vmatprep.subr.bf16.mxu0 %v4571
    %4880 = vmatpush1.bf16.msra.mxu0 %v4570
    %4881 = vmatprep.subr.bf16.mxu0 %v4567
    %4882 = vmatpush1.bf16.msra.mxu0 %v4566
    %4883 = vmatprep.subr.bf16.mxu0 %v4563
    %4884 = vmatpush1.bf16.msra.mxu0 %v4562
    %4885 = vmatprep.subr.bf16.mxu0 %v4559
    %4886 = vmatpush1.bf16.msra.mxu0 %v4558
    %4887 = vmatprep.subr.bf16.mxu0 %v4619
    %4888 = vmatpush2.bf16.msra.mxu0 %v4618
    %4889 = vmatprep.subr.bf16.mxu0 %v4615
    %4890 = vmatpush2.bf16.msra.mxu0 %v4614
    %4891 = vmatprep.subr.bf16.mxu0 %v4611
    %4892 = vmatpush2.bf16.msra.mxu0 %v4610
    %4893 = vmatprep.subr.bf16.mxu0 %v4607
    %4894 = vmatpush2.bf16.msra.mxu0 %v4606
    %4895 = vmatprep.subr.bf16.mxu0 %v4603
    %4896 = vmatpush2.bf16.msra.mxu0 %v4602
    %4897 = vmatprep.subr.bf16.mxu0 %v4599
    %4898 = vmatpush2.bf16.msra.mxu0 %v4598
    %4899 = vmatprep.subr.bf16.mxu0 %v4595
    %4900 = vmatpush2.bf16.msra.mxu0 %v4594
    %4901 = vmatprep.subr.bf16.mxu0 %v4591
    %4902 = vmatpush2.bf16.msra.mxu0 %v4590
    %4903 = vmatprep.mubr.bf16.mxu0 %v3957
    %4904 = vmatmul.mubr.bf16.gmra.mxu0 %v3956
    %v4905 = vpop.f32.mrf.mxu0
    %v4906 = vadd.f32 %v4865, %v4905
    %v4907 = vpop.f32.mrf.mxu0
    %v4908 = vadd.f32 %v4867, %v4907
    %v4909 = vpop.f32.mrf.mxu0
    %v4910 = vpop.f32.mrf.mxu0
    %4911 = vdwg.mxu0
    %v4912 = vmax.f32 %v4824, 0.0
    %v4913 = vmax.f32 %v4826, 0.0
    %v4914 = vmax.f32 %v4906, 0.0
    %v4915 = vmax.f32 %v4908, 0.0
    %v4916 = vpack.c.bf16 %v4912, %v4912
    %v4917 = vpack.c.bf16 %v4913, %v4913
    %v4918 = vpack.c.bf16 %v4914, %v4914
    %v4919 = vpack.c.bf16 %v4915, %v4915
    %v4920 = vld [vmem:[#allocation13] sm:$0xf]
    %v4921 = vld [vmem:[#allocation13 + $0x4] sm:$0xf]
    %v4922 = vld [vmem:[#allocation13 + $0x8] sm:$0xf]
    %v4923 = vld [vmem:[#allocation13 + $0xc] sm:$0xf]
    %v4924 = vld [vmem:[#allocation13 + $0x10] sm:$0xf]
    %v4925 = vld [vmem:[#allocation13 + $0x14] sm:$0xf]
    %v4926 = vld [vmem:[#allocation13 + $0x18] sm:$0xf]
    %v4927 = vld [vmem:[#allocation13 + $0x1c] sm:$0xf]
    %v4928 = vld [vmem:[#allocation13 + $0x20] sm:$0xf]
    %v4929 = vld [vmem:[#allocation13 + $0x24] sm:$0xf]
    %v4930 = vld [vmem:[#allocation13 + $0x28] sm:$0xf]
    %v4931 = vld [vmem:[#allocation13 + $0x2c] sm:$0xf]
    %v4932 = vld [vmem:[#allocation13 + $0x30] sm:$0xf]
    %v4933 = vld [vmem:[#allocation13 + $0x34] sm:$0xf]
    %v4934 = vld [vmem:[#allocation13 + $0x38] sm:$0xf]
    %v4935 = vld [vmem:[#allocation13 + $0x3c] sm:$0xf]
    %v4936 = vld [vmem:[#allocation13 + $0x40] sm:$0xf]
    %v4937 = vld [vmem:[#allocation13 + $0x44] sm:$0xf]
    %v4938 = vld [vmem:[#allocation13 + $0x48] sm:$0xf]
    %v4939 = vld [vmem:[#allocation13 + $0x4c] sm:$0xf]
    %v4940 = vld [vmem:[#allocation13 + $0x50] sm:$0xf]
    %v4941 = vld [vmem:[#allocation13 + $0x54] sm:$0xf]
    %v4942 = vld [vmem:[#allocation13 + $0x58] sm:$0xf]
    %v4943 = vld [vmem:[#allocation13 + $0x5c] sm:$0xf]
    %v4944 = vld [vmem:[#allocation13 + $0x60] sm:$0xf]
    %v4945 = vld [vmem:[#allocation13 + $0x64] sm:$0xf]
    %v4946 = vld [vmem:[#allocation13 + $0x68] sm:$0xf]
    %v4947 = vld [vmem:[#allocation13 + $0x6c] sm:$0xf]
    %v4948 = vld [vmem:[#allocation13 + $0x70] sm:$0xf]
    %v4949 = vld [vmem:[#allocation13 + $0x74] sm:$0xf]
    %v4950 = vld [vmem:[#allocation13 + $0x78] sm:$0xf]
    %v4951 = vld [vmem:[#allocation13 + $0x7c] sm:$0xf]
    %v4952 = vld [vmem:[#allocation13 + $0x80] sm:$0xf]
    %v4953 = vld [vmem:[#allocation13 + $0x84] sm:$0xf]
    %v4954 = vld [vmem:[#allocation13 + $0x88] sm:$0xf]
    %v4955 = vld [vmem:[#allocation13 + $0x8c] sm:$0xf]
    %v4956 = vld [vmem:[#allocation13 + $0x90] sm:$0xf]
    %v4957 = vld [vmem:[#allocation13 + $0x94] sm:$0xf]
    %v4958 = vld [vmem:[#allocation13 + $0x98] sm:$0xf]
    %v4959 = vld [vmem:[#allocation13 + $0x9c] sm:$0xf]
    %v4960 = vld [vmem:[#allocation13 + $0xa0] sm:$0xf]
    %v4961 = vld [vmem:[#allocation13 + $0xa4] sm:$0xf]
    %v4962 = vld [vmem:[#allocation13 + $0xa8] sm:$0xf]
    %v4963 = vld [vmem:[#allocation13 + $0xac] sm:$0xf]
    %v4964 = vld [vmem:[#allocation13 + $0xb0] sm:$0xf]
    %v4965 = vld [vmem:[#allocation13 + $0xb4] sm:$0xf]
    %v4966 = vld [vmem:[#allocation13 + $0xb8] sm:$0xf]
    %v4967 = vld [vmem:[#allocation13 + $0xbc] sm:$0xf]
    %v4968 = vld [vmem:[#allocation13 + $0xc0] sm:$0xf]
    %v4969 = vld [vmem:[#allocation13 + $0xc4] sm:$0xf]
    %v4970 = vld [vmem:[#allocation13 + $0xc8] sm:$0xf]
    %v4971 = vld [vmem:[#allocation13 + $0xcc] sm:$0xf]
    %v4972 = vld [vmem:[#allocation13 + $0xd0] sm:$0xf]
    %v4973 = vld [vmem:[#allocation13 + $0xd4] sm:$0xf]
    %v4974 = vld [vmem:[#allocation13 + $0xd8] sm:$0xf]
    %v4975 = vld [vmem:[#allocation13 + $0xdc] sm:$0xf]
    %v4976 = vld [vmem:[#allocation13 + $0xe0] sm:$0xf]
    %v4977 = vld [vmem:[#allocation13 + $0xe4] sm:$0xf]
    %v4978 = vld [vmem:[#allocation13 + $0xe8] sm:$0xf]
    %v4979 = vld [vmem:[#allocation13 + $0xec] sm:$0xf]
    %v4980 = vld [vmem:[#allocation13 + $0xf0] sm:$0xf]
    %v4981 = vld [vmem:[#allocation13 + $0xf4] sm:$0xf]
    %v4982 = vld [vmem:[#allocation13 + $0xf8] sm:$0xf]
    %v4983 = vld [vmem:[#allocation13 + $0xfc] sm:$0xf]
    %v4984 = vld [vmem:[%s10] sm:$0x1]
    %v4986 = vlaneseq
    %v4987 = vshrl.u32 %v4986, 7
    %v4988 = vsub.s32 0, %v4987
    %v4989 = vrot.slane %v4984, %v4988
    %v5055 = vunpack.c.l.b16 %v4920
    %v5056 = vunpack.c.l.b16 %v4921
    %v5057 = vunpack.c.l.b16 %v4922
    %v5058 = vunpack.c.l.b16 %v4923
    %v5059 = vunpack.c.l.b16 %v4924
    %v5060 = vunpack.c.l.b16 %v4925
    %v5061 = vunpack.c.l.b16 %v4926
    %v5062 = vunpack.c.l.b16 %v4927
    %v5063 = vunpack.c.l.b16 %v4928
    %v5064 = vunpack.c.l.b16 %v4929
    %v5065 = vunpack.c.l.b16 %v4930
    %v5066 = vunpack.c.l.b16 %v4931
    %v5067 = vunpack.c.l.b16 %v4932
    %v5068 = vunpack.c.l.b16 %v4933
    %v5069 = vunpack.c.l.b16 %v4934
    %v5070 = vunpack.c.l.b16 %v4935
    %v5071 = vunpack.c.l.b16 %v4936
    %v5072 = vunpack.c.l.b16 %v4937
    %v5073 = vunpack.c.l.b16 %v4938
    %v5074 = vunpack.c.l.b16 %v4939
    %v5075 = vunpack.c.l.b16 %v4940
    %v5076 = vunpack.c.l.b16 %v4941
    %v5077 = vunpack.c.l.b16 %v4942
    %v5078 = vunpack.c.l.b16 %v4943
    %v5079 = vunpack.c.l.b16 %v4944
    %v5080 = vunpack.c.l.b16 %v4945
    %v5081 = vunpack.c.l.b16 %v4946
    %v5082 = vunpack.c.l.b16 %v4947
    %v5083 = vunpack.c.l.b16 %v4948
    %v5084 = vunpack.c.l.b16 %v4949
    %v5085 = vunpack.c.l.b16 %v4950
    %v5086 = vunpack.c.l.b16 %v4951
    %v5087 = vunpack.c.l.b16 %v4952
    %v5088 = vunpack.c.l.b16 %v4953
    %v5089 = vunpack.c.l.b16 %v4954
    %v5090 = vunpack.c.l.b16 %v4955
    %v5091 = vunpack.c.l.b16 %v4956
    %v5092 = vunpack.c.l.b16 %v4957
    %v5093 = vunpack.c.l.b16 %v4958
    %v5094 = vunpack.c.l.b16 %v4959
    %v5095 = vunpack.c.l.b16 %v4960
    %v5096 = vunpack.c.l.b16 %v4961
    %v5097 = vunpack.c.l.b16 %v4962
    %v5098 = vunpack.c.l.b16 %v4963
    %v5099 = vunpack.c.l.b16 %v4964
    %v5100 = vunpack.c.l.b16 %v4965
    %v5101 = vunpack.c.l.b16 %v4966
    %v5102 = vunpack.c.l.b16 %v4967
    %v5103 = vunpack.c.l.b16 %v4968
    %v5104 = vunpack.c.l.b16 %v4969
    %v5105 = vunpack.c.l.b16 %v4970
    %v5106 = vunpack.c.l.b16 %v4971
    %v5107 = vunpack.c.l.b16 %v4972
    %v5108 = vunpack.c.l.b16 %v4973
    %v5109 = vunpack.c.l.b16 %v4974
    %v5110 = vunpack.c.l.b16 %v4975
    %v5111 = vunpack.c.l.b16 %v4976
    %v5112 = vunpack.c.l.b16 %v4977
    %v5113 = vunpack.c.l.b16 %v4978
    %v5114 = vunpack.c.l.b16 %v4979
    %v5115 = vunpack.c.l.b16 %v4980
    %v5116 = vunpack.c.l.b16 %v4981
    %v5117 = vunpack.c.l.b16 %v4982
    %v5118 = vunpack.c.l.b16 %v4983
    %v5119 = vpack.c.b16 %v5056, %v5055
    %v5120 = vpack.c.b16 %v5058, %v5057
    %v5121 = vpack.c.b16 %v5060, %v5059
    %v5122 = vpack.c.b16 %v5062, %v5061
    %v5123 = vpack.c.b16 %v5064, %v5063
    %v5124 = vpack.c.b16 %v5066, %v5065
    %v5125 = vpack.c.b16 %v5068, %v5067
    %v5126 = vpack.c.b16 %v5070, %v5069
    %v5127 = vpack.c.b16 %v5072, %v5071
    %v5128 = vpack.c.b16 %v5074, %v5073
    %v5129 = vpack.c.b16 %v5076, %v5075
    %v5130 = vpack.c.b16 %v5078, %v5077
    %v5131 = vpack.c.b16 %v5080, %v5079
    %v5132 = vpack.c.b16 %v5082, %v5081
    %v5133 = vpack.c.b16 %v5084, %v5083
    %v5134 = vpack.c.b16 %v5086, %v5085
    %v5135 = vpack.c.b16 %v5088, %v5087
    %v5136 = vpack.c.b16 %v5090, %v5089
    %v5137 = vpack.c.b16 %v5092, %v5091
    %v5138 = vpack.c.b16 %v5094, %v5093
    %v5139 = vpack.c.b16 %v5096, %v5095
    %v5140 = vpack.c.b16 %v5098, %v5097
    %v5141 = vpack.c.b16 %v5100, %v5099
    %v5142 = vpack.c.b16 %v5102, %v5101
    %v5143 = vpack.c.b16 %v5104, %v5103
    %v5144 = vpack.c.b16 %v5106, %v5105
    %v5145 = vpack.c.b16 %v5108, %v5107
    %v5146 = vpack.c.b16 %v5110, %v5109
    %v5147 = vpack.c.b16 %v5112, %v5111
    %v5148 = vpack.c.b16 %v5114, %v5113
    %v5149 = vpack.c.b16 %v5116, %v5115
    %v5150 = vpack.c.b16 %v5118, %v5117
    %5183 = vmatprep.subr.bf16.mxu0 0
    %5184 = vmatpush1.bf16.msra.mxu0 %v5126
    %5185 = vmatprep.subr.bf16.mxu0 0
    %5186 = vmatpush1.bf16.msra.mxu0 %v5125
    %5187 = vmatprep.subr.bf16.mxu0 0
    %5188 = vmatpush1.bf16.msra.mxu0 %v5124
    %5189 = vmatprep.subr.bf16.mxu0 0
    %5190 = vmatpush1.bf16.msra.mxu0 %v5123
    %5191 = vmatprep.subr.bf16.mxu0 0
    %5192 = vmatpush1.bf16.msra.mxu0 %v5122
    %5193 = vmatprep.subr.bf16.mxu0 0
    %5194 = vmatpush1.bf16.msra.mxu0 %v5121
    %5195 = vmatprep.subr.bf16.mxu0 0
    %5196 = vmatpush1.bf16.msra.mxu0 %v5120
    %5197 = vmatprep.subr.bf16.mxu0 0
    %5198 = vmatpush1.bf16.msra.mxu0 %v5119
    %5199 = vmatprep.subr.bf16.mxu0 0
    %5200 = vmatpush2.bf16.msra.mxu0 %v5134
    %5201 = vmatprep.subr.bf16.mxu0 0
    %5202 = vmatpush2.bf16.msra.mxu0 %v5133
    %5203 = vmatprep.subr.bf16.mxu0 0
    %5204 = vmatpush2.bf16.msra.mxu0 %v5132
    %5205 = vmatprep.subr.bf16.mxu0 0
    %5206 = vmatpush2.bf16.msra.mxu0 %v5131
    %5207 = vmatprep.subr.bf16.mxu0 0
    %5208 = vmatpush2.bf16.msra.mxu0 %v5130
    %5209 = vmatprep.subr.bf16.mxu0 0
    %5210 = vmatpush2.bf16.msra.mxu0 %v5129
    %5211 = vmatprep.subr.bf16.mxu0 0
    %5212 = vmatpush2.bf16.msra.mxu0 %v5128
    %5213 = vmatprep.subr.bf16.mxu0 0
    %5214 = vmatpush2.bf16.msra.mxu0 %v5127
    %5215 = vmatprep.mubr.bf16.mxu0 %v4917
    %5216 = vmatmul.mubr.bf16.gmra.mxu0 %v4916
    %v5217 = vpop.f32.mrf.mxu0
    %v5218 = vadd.f32 %v4989, %v5217
    %v5219 = vpop.f32.mrf.mxu0
    %v5220 = vpop.f32.mrf.mxu0
    %v5221 = vpop.f32.mrf.mxu0
    %5222 = vdwg.mxu0
    %5223 = vmatprep.subr.bf16.mxu0 0
    %5224 = vmatpush1.bf16.msra.mxu0 %v5142
    %5225 = vmatprep.subr.bf16.mxu0 0
    %5226 = vmatpush1.bf16.msra.mxu0 %v5141
    %5227 = vmatprep.subr.bf16.mxu0 0
    %5228 = vmatpush1.bf16.msra.mxu0 %v5140
    %5229 = vmatprep.subr.bf16.mxu0 0
    %5230 = vmatpush1.bf16.msra.mxu0 %v5139
    %5231 = vmatprep.subr.bf16.mxu0 0
    %5232 = vmatpush1.bf16.msra.mxu0 %v5138
    %5233 = vmatprep.subr.bf16.mxu0 0
    %5234 = vmatpush1.bf16.msra.mxu0 %v5137
    %5235 = vmatprep.subr.bf16.mxu0 0
    %5236 = vmatpush1.bf16.msra.mxu0 %v5136
    %5237 = vmatprep.subr.bf16.mxu0 0
    %5238 = vmatpush1.bf16.msra.mxu0 %v5135
    %5239 = vmatprep.subr.bf16.mxu0 0
    %5240 = vmatpush2.bf16.msra.mxu0 %v5150
    %5241 = vmatprep.subr.bf16.mxu0 0
    %5242 = vmatpush2.bf16.msra.mxu0 %v5149
    %5243 = vmatprep.subr.bf16.mxu0 0
    %5244 = vmatpush2.bf16.msra.mxu0 %v5148
    %5245 = vmatprep.subr.bf16.mxu0 0
    %5246 = vmatpush2.bf16.msra.mxu0 %v5147
    %5247 = vmatprep.subr.bf16.mxu0 0
    %5248 = vmatpush2.bf16.msra.mxu0 %v5146
    %5249 = vmatprep.subr.bf16.mxu0 0
    %5250 = vmatpush2.bf16.msra.mxu0 %v5145
    %5251 = vmatprep.subr.bf16.mxu0 0
    %5252 = vmatpush2.bf16.msra.mxu0 %v5144
    %5253 = vmatprep.subr.bf16.mxu0 0
    %5254 = vmatpush2.bf16.msra.mxu0 %v5143
    %5255 = vmatprep.mubr.bf16.mxu0 %v4919
    %5256 = vmatmul.mubr.bf16.gmra.mxu0 %v4918
    %v5257 = vpop.f32.mrf.mxu0
    %v5258 = vadd.f32 %v5218, %v5257
    %v5259 = vpop.f32.mrf.mxu0
    %v5260 = vpop.f32.mrf.mxu0
    %v5261 = vpop.f32.mrf.mxu0
    %5262 = vdwg.mxu0
    %5263 = vst [vmem:[#allocation14] sm:$0xff] %v5258
    // Predicated region
    $region74: #{tpu_custom_call.1} parent=1 // pred_check
      _
    $region75: #{tpu_custom_call.1} parent=1 // pred_check_branch
      %5265 = sbr.rel (0) target = $region77
    $region76: #{tpu_custom_call.1} parent=1 // pred_region
      %s5267 = ssub.s32 128, 128
      %5268 = vsyncadd [#allocation4], %s5267
      %s5270 = sshll.u32 [#allocation14], 4
      %s5271 = int_to_ptr.vmem [resolvable:$true] %s5270
      %5273 = dma.vmem_to_hbm [thread:$0]  %s5271, 128, %s11, [#allocation4]
    $region77: #{tpu_custom_call.1} parent=1 // pred_fallthru
      _
    // Predicated region
    $region78: #{tpu_custom_call.1} parent=1 // pred_check
      _
    $region79: #{tpu_custom_call.1} parent=1 // pred_check_branch
      %5275 = sbr.rel (0) target = $region81
    $region80: #{tpu_custom_call.1} parent=1 // pred_region
      %5276 = dma.done [#allocation4], 128
    $region81: #{tpu_custom_call.1} parent=1 // pred_fallthru
      _
    %5277 = vsyncpa [#allocation3], 1
    %5278 = vsyncpa [#allocation6], 1
    %5279 = vsyncpa [#allocation9], 1
    %5280 = vsyncpa [#allocation12], 1
    %5281 = vsyncpa [#allocation4], 1

</llo_original>
